<compile_context>
chip_gen: v7x
topology: tpu7x:2x2x1
jax: 0.10.0
libtpu: 0.0.40
codegen_flags: <defaults>
</compile_context>

<pallas_src>
import functools
import math

import jax
import jax.numpy as jnp
from jax.experimental import pallas as pl
from jax.experimental.pallas import tpu as pltpu


def _dgcn_kernel(z0_ref, aqt_ref, aht_ref, theta_ref, bias_ref, out_ref, zs_ref,
                 *, batch_tile, num_steps, orders, activation):
    """One grid step = `batch_tile` batch elements (= batch_tile*num_steps Z-rows)."""
    G, T = batch_tile, num_steps
    f32 = jnp.float32

    a_q_t = aqt_ref[...]                       # (N, N), compute dtype (bf16 or f32)
    a_h_t = aht_ref[...]
    cdt = a_q_t.dtype
    # f32 path requests exact accumulation; bf16 path uses the native MXU mode.
    mm_prec = jax.lax.Precision.HIGHEST if cdt == jnp.float32 else None

    def put(m_idx, x_f32):
        # Scatter diffusion state m (rows ordered (g, t)) into the per-batch
        # stacked scratch so zs_ref[g] is a contiguous (M*T, N) block (m-major).
        # T is a multiple of 8 in practice, so these are aligned slice stores.
        for g in range(G):
            zs_ref[g, m_idx * T:(m_idx + 1) * T, :] = x_f32[g * T:(g + 1) * T, :]

    # ---- diffusion recursion (fused: states stored once & dropped; only the
    # ---- x0/x1 Chebyshev carries stay live, all in f32) ----------------------
    x0 = z0_ref[...].astype(f32)               # (G*T, N)
    put(0, x0)
    m_idx = 1
    for a_t in (a_q_t, a_h_t):
        # NOTE: x0/x1 intentionally carry over from the first support into the
        # second one when orders >= 2, exactly like the PyTorch loop.
        x1 = jnp.dot(x0.astype(cdt), a_t,
                     preferred_element_type=f32, precision=mm_prec)
        put(m_idx, x1)
        m_idx += 1
        for _ in range(2, orders + 1):
            x2 = 2.0 * jnp.dot(x1.astype(cdt), a_t,
                               preferred_element_type=f32, precision=mm_prec) - x0
            put(m_idx, x2)
            m_idx += 1
            x1, x0 = x2, x1

    # ---- projection: one (C, M*T) @ (M*T, N) matmul per batch element -------
    theta_t = theta_ref[...]                   # (C, M*T) f32, hoisted out of the loop
    bias_c = bias_ref[...]                     # (C, 1)   f32, hoisted out of the loop

    def project(g, carry):
        z_g = zs_ref[g]                        # (M*T, N), contiguous free view
        y = jnp.dot(theta_t, z_g, preferred_element_type=f32,
                    precision=jax.lax.Precision.HIGHEST)
        y = y + bias_c                         # broadcast over the node (lane) axis
        if activation == 'relu':
            y = jnp.maximum(y, 0.0)
        elif activation == 'selu':
            y = jax.nn.selu(y)
        out_ref[g] = y.astype(out_ref.dtype)   # (C, N): lane-dense store along nodes
        return carry

    jax.lax.fori_loop(0, G, project, 0, unroll=True)


def d_gcn_forward(X, A_q, A_h, Theta1, bias, *, orders, activation='relu',
                  matmul_dtype=jnp.bfloat16, batch_tile=None):
    """Pallas implementation of D_GCN.forward (dense 2-D A_q/A_h branch).

    X: (B, N, T), A_q/A_h: (N, N), Theta1: (T*(2*orders+1), C), bias: (C,)
    returns (B, N, C) float32.
    """
    B, N, T = X.shape
    M = 2 * orders + 1
    TM, C = Theta1.shape
    assert TM == T * M, "Theta1 first dim must be in_channels * num_matrices"

    # --- choose the batch tile (G batches -> G*T Z-rows per grid step) -------
    if batch_tile is None:
        batch_tile = max(1, min(B, 256 // max(T, 1)))       # ~256 rows per tile
    G = int(batch_tile)
    # Second-to-last dim of the Z block must be a multiple of 8 (sublane pack)
    # unless the block covers the whole (padded) array.
    while (G * T) % 8 != 0 and G < B:
        G += 1
    nb = pl.cdiv(B, G)
    B_pad = nb * G

    # --- glue: pure layout plumbing / casts, no compute -----------------------
    z0 = jnp.transpose(X, (0, 2, 1)).reshape(B * T, N)       # Z[b*T+t, n] = X[b,n,t]
    if B_pad != B:
        z0 = jnp.pad(z0, ((0, (B_pad - B) * T), (0, 0)))
    z0 = z0.astype(matmul_dtype)
    aq_t = A_q.T.astype(matmul_dtype)
    ah_t = A_h.T.astype(matmul_dtype)
    # theta_t[c, m*T + t] = Theta1[t*M + m, c]
    theta_t = (Theta1.astype(jnp.float32)
               .reshape(T, M, C).transpose(2, 1, 0).reshape(C, M * T))
    bias_c = bias.astype(jnp.float32).reshape(C, 1)

    kernel = functools.partial(
        _dgcn_kernel, batch_tile=G, num_steps=T, orders=orders,
        activation=activation)

    # --- VMEM budget / cost hints ---------------------------------------------
    c_bytes = jnp.dtype(matmul_dtype).itemsize

    def _pad_to(x, m):
        return ((x + m - 1) // m) * m

    n_lanes = _pad_to(N, 128)
    vmem_est = (
        2 * _pad_to(G * T, 8) * n_lanes * c_bytes        # Z block (double buffered)
        + 2 * 2 * _pad_to(N, 8) * n_lanes * c_bytes      # A_q^T, A_h^T (resident)
        + 2 * _pad_to(C, 8) * _pad_to(M * T, 128) * 4    # Theta^T
        + 2 * _pad_to(C, 8) * 128 * 4                    # bias
        + 2 * G * _pad_to(C, 8) * n_lanes * 4            # out block (double buffered)
        + G * _pad_to(M * T, 8) * n_lanes * 4            # zs scratch
        + 6 * _pad_to(G * T, 8) * n_lanes * 4            # live diffusion values
    )
    vmem_limit = int(min(max(int(vmem_est * 1.4), 16 << 20), 100 << 20))
    # TODO(synk): very large N (resident supports > VMEM, esp. v7x's 64 MiB) needs
    # a node-tiled + K-accumulated diffusion path; not implemented here.

    flops = 2 * (2 * orders) * B_pad * T * N * N + 2 * B_pad * C * (M * T) * N
    transc = B_pad * N * C if activation == 'selu' else 0
    bytes_accessed = (B_pad * T * N * c_bytes + 2 * N * N * c_bytes
                      + C * M * T * 4 + C * 4 + B_pad * C * N * 4)

    out_bcn = pl.pallas_call(
        kernel,
        out_shape=jax.ShapeDtypeStruct((B_pad, C, N), jnp.float32),
        grid_spec=pltpu.PrefetchScalarGridSpec(
            num_scalar_prefetch=0,
            grid=(nb,),
            in_specs=[
                pl.BlockSpec((G * T, N), lambda i: (i, 0)),   # Z rows (tiled, pipelined)
                pl.BlockSpec((N, N), lambda i: (0, 0)),       # A_q^T (VMEM resident)
                pl.BlockSpec((N, N), lambda i: (0, 0)),       # A_h^T (VMEM resident)
                pl.BlockSpec((C, M * T), lambda i: (0, 0)),   # Theta^T (resident)
                pl.BlockSpec((C, 1), lambda i: (0, 0)),       # bias (resident)
            ],
            out_specs=pl.BlockSpec((G, C, N), lambda i: (i, 0, 0)),
            scratch_shapes=[pltpu.VMEM((G, M * T, N), jnp.float32)],
        ),
        compiler_params=pltpu.CompilerParams(
            dimension_semantics=("parallel",),
            vmem_limit_bytes=vmem_limit),
        cost_estimate=pl.CostEstimate(
            flops=int(flops), transcendentals=int(transc),
            bytes_accessed=int(bytes_accessed)),
    )(z0, aq_t, ah_t, theta_t, bias_c)

    # (B, C, N) -> (B, N, C): wrapper-side layout plumbing only.
    return jnp.transpose(out_bcn[:B], (0, 2, 1))


def d_gcn_reference(X, A_q, A_h, Theta1, bias, *, orders, activation='relu'):
    """Pure-JAX transcription of the PyTorch forward (2-D branch), for checking."""
    B, N, T = X.shape
    M = 2 * orders + 1
    x0 = jnp.transpose(X, (1, 2, 0)).reshape(N, T * B)
    xs = [x0]
    for A in (A_q, A_h):
        x1 = A @ x0
        xs.append(x1)
        for _ in range(2, orders + 1):
            x2 = 2.0 * (A @ x1) - x0
            xs.append(x2)
            x1, x0 = x2, x1
    x = jnp.stack(xs, axis=0).reshape(M, N, T, B)
    x = jnp.transpose(x, (3, 1, 2, 0)).reshape(B, N, T * M)
    y = x @ Theta1 + bias
    if activation == 'relu':
        y = jnp.maximum(y, 0.0)
    elif activation == 'selu':
        y = jax.nn.selu(y)
    return y


if __name__ == "__main__":
    # Small shapes: batch=2, num_nodes=16, in_channels(=timesteps)=8,
    # out_channels=32, diffusion orders=2 -> num_matrices=5.
    B, N, T, C, orders = 2, 16, 8, 32, 2
    M = 2 * orders + 1

    key = jax.random.PRNGKey(0)
    kx, ka, kt, kbias = jax.random.split(key, 4)

    X = jax.random.normal(kx, (B, N, T), dtype=jnp.float32)

    # Deterministic forward / backward random-walk matrices (row-normalized).
    raw = jax.random.uniform(ka, (N, N), dtype=jnp.float32, minval=0.0, maxval=1.0)
    A_q = raw / jnp.sum(raw, axis=1, keepdims=True)
    A_h = raw.T / jnp.sum(raw.T, axis=1, keepdims=True)

    # Deterministic parameter init, matching reset_parameters().
    stdv = 1.0 / math.sqrt(C)
    Theta1 = jax.random.uniform(kt, (T * M, C), dtype=jnp.float32,
                                minval=-stdv, maxval=stdv)
    bias = jax.random.uniform(kbias, (C,), dtype=jnp.float32,
                              minval=-stdv, maxval=stdv)

    ref = jax.block_until_ready(
        d_gcn_reference(X, A_q, A_h, Theta1, bias, orders=orders, activation='relu'))

    # 1) f32 compute path: validates the kernel logic tightly.
    out_f32 = jax.block_until_ready(
        d_gcn_forward(X, A_q, A_h, Theta1, bias, orders=orders, activation='relu',
                      matmul_dtype=jnp.float32))
    assert out_f32.shape == (B, N, C)
    diff32 = float(jnp.max(jnp.abs(out_f32 - ref)))
    if not bool(jnp.allclose(out_f32, ref, atol=1e-2, rtol=1e-2)):
        raise AssertionError(f"f32 Pallas D_GCN mismatch vs reference, max|diff|={diff32}")

    # 2) Default bf16-operand path (perf config, f32 accumulation): looser tolerance.
    out_bf16 = jax.block_until_ready(
        d_gcn_forward(X, A_q, A_h, Theta1, bias, orders=orders, activation='relu'))
    assert out_bf16.shape == (B, N, C)
    diff16 = float(jnp.max(jnp.abs(out_bf16 - ref)))
    if not bool(jnp.allclose(out_bf16, ref, atol=5e-2, rtol=5e-2)):
        raise AssertionError(f"bf16 Pallas D_GCN mismatch vs reference, max|diff|={diff16}")

    print("KERNEL_OK")
</pallas_src>

<mosaic_0001>
module attributes {stable_mosaic.version = 11 : i64} {
  func.func @_dgcn_kernel(%arg0: i32, %arg1: memref<16x16xf32, #tpu.memory_space<vmem>>, %arg2: memref<16x16xf32, #tpu.memory_space<vmem>>, %arg3: memref<16x16xf32, #tpu.memory_space<vmem>>, %arg4: memref<32x40xf32, #tpu.memory_space<vmem>>, %arg5: memref<32x1xf32, #tpu.memory_space<vmem>>, %arg6: memref<2x32x16xf32, #tpu.memory_space<vmem>>, %arg7: memref<2x40x16xf32, #tpu.memory_space<vmem>>) attributes {dimension_semantics = [#tpu.dimension_semantics<parallel>], iteration_bounds = array<i64: 1>, scalar_prefetch = 0 : i64, scratch_operands = 1 : i64, tpu.core_type = #tpu.core_type<tc>, window_params = [{transform_indices = @transform_0, window_bounds = array<i64: 16, 16>}, {pipeline_mode = #tpu.pipeline_mode<synchronous>, transform_indices = @transform_1, window_bounds = array<i64: 16, 16>}, {pipeline_mode = #tpu.pipeline_mode<synchronous>, transform_indices = @transform_2, window_bounds = array<i64: 16, 16>}, {pipeline_mode = #tpu.pipeline_mode<synchronous>, transform_indices = @transform_3, window_bounds = array<i64: 32, 40>}, {pipeline_mode = #tpu.pipeline_mode<synchronous>, transform_indices = @transform_4, window_bounds = array<i64: 32, 1>}, {transform_indices = @transform_5, window_bounds = array<i64: 2, 32, 16>}]} {
    %c0 = arith.constant 0 : index
    %c0_0 = arith.constant 0 : index
    %0 = vector.load %arg2[%c0, %c0_0] : memref<16x16xf32, #tpu.memory_space<vmem>>, vector<16x16xf32>
    %c0_1 = arith.constant 0 : index
    %c0_2 = arith.constant 0 : index
    %1 = vector.load %arg3[%c0_1, %c0_2] : memref<16x16xf32, #tpu.memory_space<vmem>>, vector<16x16xf32>
    %c0_3 = arith.constant 0 : index
    %c0_4 = arith.constant 0 : index
    %2 = vector.load %arg1[%c0_3, %c0_4] : memref<16x16xf32, #tpu.memory_space<vmem>>, vector<16x16xf32>
    %3 = vector.extract_strided_slice %2 {offsets = [0, 0], sizes = [8, 16], strides = [1, 1]} : vector<16x16xf32> to vector<8x16xf32>
    %c0_5 = arith.constant 0 : index
    %c0_6 = arith.constant 0 : index
    %c0_7 = arith.constant 0 : index
    %4 = vector.load %arg7[%c0_5, %c0_6, %c0_7] : memref<2x40x16xf32, #tpu.memory_space<vmem>>, vector<1x8x16xf32>
    %5 = vector.shape_cast %4 : vector<1x8x16xf32> to vector<8x16xf32>
    %6 = vector.shape_cast %3 : vector<8x16xf32> to vector<1x8x16xf32>
    tpu.vector_store %arg7[%c0_5, %c0_6, %c0_7], %6 {strides = array<i32>} : memref<2x40x16xf32, #tpu.memory_space<vmem>>, vector<1x8x16xf32>,
    %7 = vector.extract_strided_slice %2 {offsets = [8, 0], sizes = [8, 16], strides = [1, 1]} : vector<16x16xf32> to vector<8x16xf32>
    %c1 = arith.constant 1 : index
    %c0_8 = arith.constant 0 : index
    %c0_9 = arith.constant 0 : index
    %8 = vector.load %arg7[%c1, %c0_8, %c0_9] : memref<2x40x16xf32, #tpu.memory_space<vmem>>, vector<1x8x16xf32>
    %9 = vector.shape_cast %8 : vector<1x8x16xf32> to vector<8x16xf32>
    %10 = vector.shape_cast %7 : vector<8x16xf32> to vector<1x8x16xf32>
    tpu.vector_store %arg7[%c1, %c0_8, %c0_9], %10 {strides = array<i32>} : memref<2x40x16xf32, #tpu.memory_space<vmem>>, vector<1x8x16xf32>,
    %cst = arith.constant dense<0.000000e+00> : vector<16x16xf32>
    %11 = tpu.matmul %2, %0, %cst {dimension_numbers = #tpu.dot_dimension_numbers<[1], [0], [0], [1], [0, 0, 1, 1], [], []>, precision = #tpu.contract_precision<fp32>} : vector<16x16xf32>, vector<16x16xf32>, vector<16x16xf32> -> vector<16x16xf32>
    %12 = vector.extract_strided_slice %11 {offsets = [0, 0], sizes = [8, 16], strides = [1, 1]} : vector<16x16xf32> to vector<8x16xf32>
    %c0_10 = arith.constant 0 : index
    %c8 = arith.constant 8 : index
    %c0_11 = arith.constant 0 : index
    %13 = vector.load %arg7[%c0_10, %c8, %c0_11] : memref<2x40x16xf32, #tpu.memory_space<vmem>>, vector<1x8x16xf32>
    %14 = vector.shape_cast %13 : vector<1x8x16xf32> to vector<8x16xf32>
    %15 = vector.shape_cast %12 : vector<8x16xf32> to vector<1x8x16xf32>
    tpu.vector_store %arg7[%c0_10, %c8, %c0_11], %15 {strides = array<i32>} : memref<2x40x16xf32, #tpu.memory_space<vmem>>, vector<1x8x16xf32>,
    %16 = vector.extract_strided_slice %11 {offsets = [8, 0], sizes = [8, 16], strides = [1, 1]} : vector<16x16xf32> to vector<8x16xf32>
    %c1_12 = arith.constant 1 : index
    %c8_13 = arith.constant 8 : index
    %c0_14 = arith.constant 0 : index
    %17 = vector.load %arg7[%c1_12, %c8_13, %c0_14] : memref<2x40x16xf32, #tpu.memory_space<vmem>>, vector<1x8x16xf32>
    %18 = vector.shape_cast %17 : vector<1x8x16xf32> to vector<8x16xf32>
    %19 = vector.shape_cast %16 : vector<8x16xf32> to vector<1x8x16xf32>
    tpu.vector_store %arg7[%c1_12, %c8_13, %c0_14], %19 {strides = array<i32>} : memref<2x40x16xf32, #tpu.memory_space<vmem>>, vector<1x8x16xf32>,
    %cst_15 = arith.constant dense<0.000000e+00> : vector<16x16xf32>
    %20 = tpu.matmul %11, %0, %cst_15 {dimension_numbers = #tpu.dot_dimension_numbers<[1], [0], [0], [1], [0, 0, 1, 1], [], []>, precision = #tpu.contract_precision<fp32>} : vector<16x16xf32>, vector<16x16xf32>, vector<16x16xf32> -> vector<16x16xf32>
    %cst_16 = arith.constant 2.000000e+00 : f32
    %21 = vector.broadcast %cst_16 : f32 to vector<16x16xf32>
    %22 = arith.mulf %21, %20 : vector<16x16xf32>
    %23 = arith.subf %22, %2 : vector<16x16xf32>
    %24 = vector.extract_strided_slice %23 {offsets = [0, 0], sizes = [8, 16], strides = [1, 1]} : vector<16x16xf32> to vector<8x16xf32>
    %c0_17 = arith.constant 0 : index
    %c16 = arith.constant 16 : index
    %c0_18 = arith.constant 0 : index
    %25 = vector.load %arg7[%c0_17, %c16, %c0_18] : memref<2x40x16xf32, #tpu.memory_space<vmem>>, vector<1x8x16xf32>
    %26 = vector.shape_cast %25 : vector<1x8x16xf32> to vector<8x16xf32>
    %27 = vector.shape_cast %24 : vector<8x16xf32> to vector<1x8x16xf32>
    tpu.vector_store %arg7[%c0_17, %c16, %c0_18], %27 {strides = array<i32>} : memref<2x40x16xf32, #tpu.memory_space<vmem>>, vector<1x8x16xf32>,
    %28 = vector.extract_strided_slice %23 {offsets = [8, 0], sizes = [8, 16], strides = [1, 1]} : vector<16x16xf32> to vector<8x16xf32>
    %c1_19 = arith.constant 1 : index
    %c16_20 = arith.constant 16 : index
    %c0_21 = arith.constant 0 : index
    %29 = vector.load %arg7[%c1_19, %c16_20, %c0_21] : memref<2x40x16xf32, #tpu.memory_space<vmem>>, vector<1x8x16xf32>
    %30 = vector.shape_cast %29 : vector<1x8x16xf32> to vector<8x16xf32>
    %31 = vector.shape_cast %28 : vector<8x16xf32> to vector<1x8x16xf32>
    tpu.vector_store %arg7[%c1_19, %c16_20, %c0_21], %31 {strides = array<i32>} : memref<2x40x16xf32, #tpu.memory_space<vmem>>, vector<1x8x16xf32>,
    %cst_22 = arith.constant dense<0.000000e+00> : vector<16x16xf32>
    %32 = tpu.matmul %11, %1, %cst_22 {dimension_numbers = #tpu.dot_dimension_numbers<[1], [0], [0], [1], [0, 0, 1, 1], [], []>, precision = #tpu.contract_precision<fp32>} : vector<16x16xf32>, vector<16x16xf32>, vector<16x16xf32> -> vector<16x16xf32>
    %33 = vector.extract_strided_slice %32 {offsets = [0, 0], sizes = [8, 16], strides = [1, 1]} : vector<16x16xf32> to vector<8x16xf32>
    %c0_23 = arith.constant 0 : index
    %c24 = arith.constant 24 : index
    %c0_24 = arith.constant 0 : index
    %34 = vector.load %arg7[%c0_23, %c24, %c0_24] : memref<2x40x16xf32, #tpu.memory_space<vmem>>, vector<1x8x16xf32>
    %35 = vector.shape_cast %34 : vector<1x8x16xf32> to vector<8x16xf32>
    %36 = vector.shape_cast %33 : vector<8x16xf32> to vector<1x8x16xf32>
    tpu.vector_store %arg7[%c0_23, %c24, %c0_24], %36 {strides = array<i32>} : memref<2x40x16xf32, #tpu.memory_space<vmem>>, vector<1x8x16xf32>,
    %37 = vector.extract_strided_slice %32 {offsets = [8, 0], sizes = [8, 16], strides = [1, 1]} : vector<16x16xf32> to vector<8x16xf32>
    %c1_25 = arith.constant 1 : index
    %c24_26 = arith.constant 24 : index
    %c0_27 = arith.constant 0 : index
    %38 = vector.load %arg7[%c1_25, %c24_26, %c0_27] : memref<2x40x16xf32, #tpu.memory_space<vmem>>, vector<1x8x16xf32>
    %39 = vector.shape_cast %38 : vector<1x8x16xf32> to vector<8x16xf32>
    %40 = vector.shape_cast %37 : vector<8x16xf32> to vector<1x8x16xf32>
    tpu.vector_store %arg7[%c1_25, %c24_26, %c0_27], %40 {strides = array<i32>} : memref<2x40x16xf32, #tpu.memory_space<vmem>>, vector<1x8x16xf32>,
    %cst_28 = arith.constant dense<0.000000e+00> : vector<16x16xf32>
    %41 = tpu.matmul %32, %1, %cst_28 {dimension_numbers = #tpu.dot_dimension_numbers<[1], [0], [0], [1], [0, 0, 1, 1], [], []>, precision = #tpu.contract_precision<fp32>} : vector<16x16xf32>, vector<16x16xf32>, vector<16x16xf32> -> vector<16x16xf32>
    %cst_29 = arith.constant 2.000000e+00 : f32
    %42 = vector.broadcast %cst_29 : f32 to vector<16x16xf32>
    %43 = arith.mulf %42, %41 : vector<16x16xf32>
    %44 = arith.subf %43, %11 : vector<16x16xf32>
    %45 = vector.extract_strided_slice %44 {offsets = [0, 0], sizes = [8, 16], strides = [1, 1]} : vector<16x16xf32> to vector<8x16xf32>
    %c0_30 = arith.constant 0 : index
    %c32 = arith.constant 32 : index
    %c0_31 = arith.constant 0 : index
    %46 = vector.load %arg7[%c0_30, %c32, %c0_31] : memref<2x40x16xf32, #tpu.memory_space<vmem>>, vector<1x8x16xf32>
    %47 = vector.shape_cast %46 : vector<1x8x16xf32> to vector<8x16xf32>
    %48 = vector.shape_cast %45 : vector<8x16xf32> to vector<1x8x16xf32>
    tpu.vector_store %arg7[%c0_30, %c32, %c0_31], %48 {strides = array<i32>} : memref<2x40x16xf32, #tpu.memory_space<vmem>>, vector<1x8x16xf32>,
    %49 = vector.extract_strided_slice %44 {offsets = [8, 0], sizes = [8, 16], strides = [1, 1]} : vector<16x16xf32> to vector<8x16xf32>
    %c1_32 = arith.constant 1 : index
    %c32_33 = arith.constant 32 : index
    %c0_34 = arith.constant 0 : index
    %50 = vector.load %arg7[%c1_32, %c32_33, %c0_34] : memref<2x40x16xf32, #tpu.memory_space<vmem>>, vector<1x8x16xf32>
    %51 = vector.shape_cast %50 : vector<1x8x16xf32> to vector<8x16xf32>
    %52 = vector.shape_cast %49 : vector<8x16xf32> to vector<1x8x16xf32>
    tpu.vector_store %arg7[%c1_32, %c32_33, %c0_34], %52 {strides = array<i32>} : memref<2x40x16xf32, #tpu.memory_space<vmem>>, vector<1x8x16xf32>,
    %c0_35 = arith.constant 0 : index
    %c0_36 = arith.constant 0 : index
    %53 = vector.load %arg4[%c0_35, %c0_36] : memref<32x40xf32, #tpu.memory_space<vmem>>, vector<32x40xf32>
    %c0_37 = arith.constant 0 : index
    %c0_38 = arith.constant 0 : index
    %54 = vector.load %arg5[%c0_37, %c0_38] : memref<32x1xf32, #tpu.memory_space<vmem>>, vector<32x1xf32>
    %c0_i32 = arith.constant 0 : i32
    %55 = arith.index_cast %c0_i32 : i32 to index
    %c0_39 = arith.constant 0 : index
    %c0_40 = arith.constant 0 : index
    %56 = vector.load %arg7[%55, %c0_39, %c0_40] : memref<2x40x16xf32, #tpu.memory_space<vmem>>, vector<1x40x16xf32>
    %57 = vector.shape_cast %56 : vector<1x40x16xf32> to vector<40x16xf32>
    %cst_41 = arith.constant dense<0.000000e+00> : vector<32x16xf32>
    %58 = tpu.matmul %53, %57, %cst_41 {dimension_numbers = #tpu.dot_dimension_numbers<[1], [0], [0], [1], [0, 0, 1, 1], [], []>, precision = #tpu.contract_precision<fp32>} : vector<32x40xf32>, vector<40x16xf32>, vector<32x16xf32> -> vector<32x16xf32>
    %59 = vector.broadcast %54 : vector<32x1xf32> to vector<32x16xf32>
    %60 = arith.addf %58, %59 : vector<32x16xf32>
    %cst_42 = arith.constant 0.000000e+00 : f32
    %61 = vector.broadcast %cst_42 : f32 to vector<32x16xf32>
    %62 = arith.maximumf %60, %61 : vector<32x16xf32>
    %63 = arith.index_cast %c0_i32 : i32 to index
    %c0_43 = arith.constant 0 : index
    %c0_44 = arith.constant 0 : index
    %64 = vector.load %arg6[%63, %c0_43, %c0_44] : memref<2x32x16xf32, #tpu.memory_space<vmem>>, vector<1x32x16xf32>
    %65 = vector.shape_cast %64 : vector<1x32x16xf32> to vector<32x16xf32>
    %66 = vector.shape_cast %62 : vector<32x16xf32> to vector<1x32x16xf32>
    tpu.vector_store %arg6[%63, %c0_43, %c0_44], %66 {strides = array<i32>} : memref<2x32x16xf32, #tpu.memory_space<vmem>>, vector<1x32x16xf32>,
    %c1_i32 = arith.constant 1 : i32
    %67 = arith.index_cast %c1_i32 : i32 to index
    %c0_45 = arith.constant 0 : index
    %c0_46 = arith.constant 0 : index
    %68 = vector.load %arg7[%67, %c0_45, %c0_46] : memref<2x40x16xf32, #tpu.memory_space<vmem>>, vector<1x40x16xf32>
    %69 = vector.shape_cast %68 : vector<1x40x16xf32> to vector<40x16xf32>
    %cst_47 = arith.constant dense<0.000000e+00> : vector<32x16xf32>
    %70 = tpu.matmul %53, %69, %cst_47 {dimension_numbers = #tpu.dot_dimension_numbers<[1], [0], [0], [1], [0, 0, 1, 1], [], []>, precision = #tpu.contract_precision<fp32>} : vector<32x40xf32>, vector<40x16xf32>, vector<32x16xf32> -> vector<32x16xf32>
    %71 = vector.broadcast %54 : vector<32x1xf32> to vector<32x16xf32>
    %72 = arith.addf %70, %71 : vector<32x16xf32>
    %cst_48 = arith.constant 0.000000e+00 : f32
    %73 = vector.broadcast %cst_48 : f32 to vector<32x16xf32>
    %74 = arith.maximumf %72, %73 : vector<32x16xf32>
    %75 = arith.index_cast %c1_i32 : i32 to index
    %c0_49 = arith.constant 0 : index
    %c0_50 = arith.constant 0 : index
    %76 = vector.load %arg6[%75, %c0_49, %c0_50] : memref<2x32x16xf32, #tpu.memory_space<vmem>>, vector<1x32x16xf32>
    %77 = vector.shape_cast %76 : vector<1x32x16xf32> to vector<32x16xf32>
    %78 = vector.shape_cast %74 : vector<32x16xf32> to vector<1x32x16xf32>
    tpu.vector_store %arg6[%75, %c0_49, %c0_50], %78 {strides = array<i32>} : memref<2x32x16xf32, #tpu.memory_space<vmem>>, vector<1x32x16xf32>,
    %c2_i32 = arith.constant 2 : i32
    return
  }
  func.func @transform_0(%arg0: i32) -> (i32, i32) {
    %c0_i32 = arith.constant 0 : i32
    %c0_i32_0 = arith.constant 0 : i32
    return %arg0, %c0_i32 : i32, i32
  }
  func.func @transform_1(%arg0: i32) -> (i32, i32) {
    %c0_i32 = arith.constant 0 : i32
    %c0_i32_0 = arith.constant 0 : i32
    %c0_i32_1 = arith.constant 0 : i32
    return %c0_i32, %c0_i32_0 : i32, i32
  }
  func.func @transform_2(%arg0: i32) -> (i32, i32) {
    %c0_i32 = arith.constant 0 : i32
    %c0_i32_0 = arith.constant 0 : i32
    %c0_i32_1 = arith.constant 0 : i32
    return %c0_i32, %c0_i32_0 : i32, i32
  }
  func.func @transform_3(%arg0: i32) -> (i32, i32) {
    %c0_i32 = arith.constant 0 : i32
    %c0_i32_0 = arith.constant 0 : i32
    %c0_i32_1 = arith.constant 0 : i32
    return %c0_i32, %c0_i32_0 : i32, i32
  }
  func.func @transform_4(%arg0: i32) -> (i32, i32) {
    %c0_i32 = arith.constant 0 : i32
    %c0_i32_0 = arith.constant 0 : i32
    %c0_i32_1 = arith.constant 0 : i32
    return %c0_i32, %c0_i32_0 : i32, i32
  }
  func.func @transform_5(%arg0: i32) -> (i32, i32, i32) {
    %c0_i32 = arith.constant 0 : i32
    %c0_i32_0 = arith.constant 0 : i32
    %c0_i32_1 = arith.constant 0 : i32
    return %arg0, %c0_i32, %c0_i32_0 : i32, i32, i32
  }
}

</mosaic_0001>

<llo_original>
// kernel: tpu_custom_call.1
$region0: #{tpu_custom_call.1}
  #allocation0 [shape = 'u32[]', space=smem, size = 0x4, offset = 0x4, fixed_abs, tag = 'smem constant byte address 0x4 - core index']
  #allocation1 [shape = 'u32[144,128]{1,0:T(1,128)}', space=vmem, size = 0x12000, scoped, tag = 'internal scratch']
  #allocation2 [shape = 'f32[2,40,16]{2,1,0:T(8,128)}', space=vmem, size = 0xa000, scoped, tag = 'scratch operand']
  %s0 = inlined_call_operand.hbm [shape: f32[16,16], index: 0, kind: input, shape index: {}]
  %s1 = inlined_call_operand.hbm [shape: f32[16,16], index: 1, kind: input, shape index: {}]
  %s2 = inlined_call_operand.hbm [shape: f32[16,16], index: 2, kind: input, shape index: {}]
  %s3 = inlined_call_operand.vmem [shape: f32[32,40], index: 3, kind: input, shape index: {}]
  %s4 = inlined_call_operand.vmem [shape: f32[32,1], index: 4, kind: input, shape index: {}]
  %s5 = inlined_call_operand.vmem [shape: f32[2,32,16], index: 5, kind: output, shape index: {}]
  %s6 = sld [smem:[#allocation0]]
  $region42: #{tpu_custom_call.1} parent=0
    _
  %s8 = ssub.s32 1, %s6
  %s9 = scalar_select 0, %s8, %s6
  $region1: #{tpu_custom_call.1} parent=0
    #allocation3 [shape = 'u8[8192]{0}', space=vmem, size = 0x2000, scoped, tag = 'input window, operand 0, single buffered']
    #allocation4 [shape = 's32[1]{0}', space=sflag, size = 0x4, scoped, tag = 'scoped memory for tpu_custom_call.1']
    #allocation5 [shape = 'u8[8192]{0}', space=vmem, size = 0x2000, scoped, tag = 'input window, operand 1, single buffered']
    #allocation6 [shape = 's32[1]{0}', space=sflag, size = 0x4, scoped, tag = 'scoped memory for tpu_custom_call.1']
    #allocation7 [shape = 'u8[8192]{0}', space=vmem, size = 0x2000, scoped, tag = 'input window, operand 2, single buffered']
    %10 = vsyncpa [#allocation4], 0
    %11 = vsyncpa [#allocation6], 0
    // Predicated region
    $region2: #{tpu_custom_call.1} parent=1 // pred_check
      _
    $region3: #{tpu_custom_call.1} parent=1 // pred_check_branch
      %13 = sbr.rel (0) target = $region5
    $region4: #{tpu_custom_call.1} parent=1 // pred_region
      %s15 = ssub.s32 256, 256
      %16 = vsyncadd [#allocation4], %s15
      %s17 = sshll.u32 [#allocation3], 4
      %s18 = int_to_ptr.vmem [resolvable:$true] %s17
      %23 = dma.hbm_to_vmem [thread:$0]  %s0, 256, %s18, [#allocation4], 128, 128, 8
    $region5: #{tpu_custom_call.1} parent=1 // pred_fallthru
      _
    // Predicated region
    $region6: #{tpu_custom_call.1} parent=1 // pred_check
      _
    $region7: #{tpu_custom_call.1} parent=1 // pred_check_branch
      %25 = sbr.rel (0) target = $region9
    $region8: #{tpu_custom_call.1} parent=1 // pred_region
      %s27 = ssub.s32 256, 256
      %28 = vsyncadd [#allocation6], %s27
      %s29 = sshll.u32 [#allocation5], 4
      %s30 = int_to_ptr.vmem [resolvable:$true] %s29
      %35 = dma.hbm_to_vmem [thread:$0]  %s1, 256, %s30, [#allocation6], 128, 128, 8
    $region9: #{tpu_custom_call.1} parent=1 // pred_fallthru
      _
    // Predicated region
    $region10: #{tpu_custom_call.1} parent=1 // pred_check
      _
    $region11: #{tpu_custom_call.1} parent=1 // pred_check_branch
      %37 = sbr.rel (0) target = $region13
    $region12: #{tpu_custom_call.1} parent=1 // pred_region
      %s39 = ssub.s32 256, 256
      %40 = vsyncadd [#allocation6], %s39
      %s41 = sshll.u32 [#allocation7], 4
      %s42 = int_to_ptr.vmem [resolvable:$true] %s41
      %47 = dma.hbm_to_vmem [thread:$0]  %s2, 256, %s42, [#allocation6], 128, 128, 8
    $region13: #{tpu_custom_call.1} parent=1 // pred_fallthru
      _
    // Predicated region
    $region14: #{tpu_custom_call.1} parent=1 // pred_check
      _
    $region15: #{tpu_custom_call.1} parent=1 // pred_check_branch
      %49 = sbr.rel (0) target = $region17
    $region16: #{tpu_custom_call.1} parent=1 // pred_region
      _
    $region17: #{tpu_custom_call.1} parent=1 // pred_fallthru
      _
    // Predicated region
    $region18: #{tpu_custom_call.1} parent=1 // pred_check
      _
    $region19: #{tpu_custom_call.1} parent=1 // pred_check_branch
      %51 = sbr.rel (0) target = $region21
    $region20: #{tpu_custom_call.1} parent=1 // pred_region
      _
    $region21: #{tpu_custom_call.1} parent=1 // pred_fallthru
      _
    // Predicated region
    $region22: #{tpu_custom_call.1} parent=1 // pred_check
      _
    $region23: #{tpu_custom_call.1} parent=1 // pred_check_branch
      %53 = sbr.rel (0) target = $region25
    $region24: #{tpu_custom_call.1} parent=1 // pred_region
      %54 = dma.done [#allocation4], 256
    $region25: #{tpu_custom_call.1} parent=1 // pred_fallthru
      _
    // Predicated region
    $region26: #{tpu_custom_call.1} parent=1 // pred_check
      _
    $region27: #{tpu_custom_call.1} parent=1 // pred_check_branch
      %56 = sbr.rel (0) target = $region29
    $region28: #{tpu_custom_call.1} parent=1 // pred_region
      %57 = dma.done [#allocation6], 256
    $region29: #{tpu_custom_call.1} parent=1 // pred_fallthru
      _
    // Predicated region
    $region30: #{tpu_custom_call.1} parent=1 // pred_check
      _
    $region31: #{tpu_custom_call.1} parent=1 // pred_check_branch
      %59 = sbr.rel (0) target = $region33
    $region32: #{tpu_custom_call.1} parent=1 // pred_region
      %60 = dma.done [#allocation6], 256
    $region33: #{tpu_custom_call.1} parent=1 // pred_fallthru
      _
    %v61 = vld [vmem:[#allocation5] sm:$0xff]
    %v62 = vld [vmem:[#allocation5 + $0x8] sm:$0xff]
    %v63 = vld [vmem:[#allocation7] sm:$0xff]
    %v64 = vld [vmem:[#allocation7 + $0x8] sm:$0xff]
    %v65 = vld [vmem:[#allocation3] sm:$0xff]
    %v66 = vld [vmem:[#allocation3 + $0x8] sm:$0xff]
    %vm67 = vcmask 130048
    %68 = vst.msk [vmem:[#allocation2] sm:$0xff] %vm67, %v65
    %s69 = scalar_lea.vmem [#allocation2], 40
    %70 = vst.msk [vmem:[%s69] sm:$0xff] %vm67, %v66
    %v72 = vsel %vm67, %v65, 0
    %v75 = vsel %vm67, %v66, 0
    %77 = vmatprep.subr.mxu0 0.0
    %v78 = vand.u32 %v61, 4294901760
    %79 = vmatpush1.msra.mxu0 %v78
    %80 = vmatprep.subr.mxu0 0.0
    %v81 = vand.u32 %v62, 4294901760
    %82 = vmatpush1.msra.mxu0 %v81
    %83 = vmatprep.subr.mxu0 0.0
    %84 = vmatpush1.msra.mxu0 0.0
    %85 = vmatprep.subr.mxu0 0.0
    %86 = vmatpush1.msra.mxu0 0.0
    %87 = vmatprep.subr.mxu0 0.0
    %88 = vmatpush1.msra.mxu0 0.0
    %89 = vmatprep.subr.mxu0 0.0
    %90 = vmatpush1.msra.mxu0 0.0
    %91 = vmatprep.subr.mxu0 0.0
    %92 = vmatpush1.msra.mxu0 0.0
    %93 = vmatprep.subr.mxu0 0.0
    %94 = vmatpush1.msra.mxu0 0.0
    %95 = vmatprep.subr.mxu0 0.0
    %96 = vmatpush1.msra.mxu0 0.0
    %97 = vmatprep.subr.mxu0 0.0
    %98 = vmatpush1.msra.mxu0 0.0
    %99 = vmatprep.subr.mxu0 0.0
    %100 = vmatpush1.msra.mxu0 0.0
    %101 = vmatprep.subr.mxu0 0.0
    %102 = vmatpush1.msra.mxu0 0.0
    %103 = vmatprep.subr.mxu0 0.0
    %104 = vmatpush1.msra.mxu0 0.0
    %105 = vmatprep.subr.mxu0 0.0
    %106 = vmatpush1.msra.mxu0 0.0
    %107 = vmatprep.subr.mxu0 0.0
    %108 = vmatpush1.msra.mxu0 0.0
    %109 = vmatprep.subr.mxu0 0.0
    %110 = vmatpush1.msra.mxu0 0.0
    %111 = vmatprep.subr.mxu0 0.0
    %112 = vmatpush1.msra.mxu0 0.0
    %113 = vmatprep.subr.mxu0 0.0
    %114 = vmatpush1.msra.mxu0 0.0
    %115 = vmatprep.subr.mxu0 0.0
    %116 = vmatpush1.msra.mxu0 0.0
    %117 = vmatprep.subr.mxu0 0.0
    %118 = vmatpush1.msra.mxu0 0.0
    %119 = vmatprep.subr.mxu0 0.0
    %120 = vmatpush1.msra.mxu0 0.0
    %121 = vmatprep.subr.mxu0 0.0
    %122 = vmatpush1.msra.mxu0 0.0
    %123 = vmatprep.subr.mxu0 0.0
    %124 = vmatpush1.msra.mxu0 0.0
    %125 = vmatprep.subr.mxu0 0.0
    %126 = vmatpush1.msra.mxu0 0.0
    %127 = vmatprep.subr.mxu0 0.0
    %128 = vmatpush1.msra.mxu0 0.0
    %129 = vmatprep.subr.mxu0 0.0
    %130 = vmatpush1.msra.mxu0 0.0
    %131 = vmatprep.subr.mxu0 0.0
    %132 = vmatpush1.msra.mxu0 0.0
    %133 = vmatprep.subr.mxu0 0.0
    %134 = vmatpush1.msra.mxu0 0.0
    %135 = vmatprep.subr.mxu0 0.0
    %136 = vmatpush1.msra.mxu0 0.0
    %137 = vmatprep.subr.mxu0 0.0
    %138 = vmatpush1.msra.mxu0 0.0
    %139 = vmatprep.subr.mxu0 0.0
    %140 = vmatpush1.msra.mxu0 0.0
    %141 = vmatprep.subr.mxu0 0.0
    %142 = vmatpush1.msra.mxu0 0.0
    %143 = vmatprep.mubr.f32.mxu0 0.0
    %v144 = vand.u32 %v72, 4294901760
    %v145 = vsub.f32 %v72, %v144
    %v146 = vand.u32 %v145, 4294901760
    %v147 = vsub.f32 %v145, %v146
    %v148 = vand.u32 %v147, 4294901760
    %149 = vmatmul.mubr.f32.gmra.mrb[0].mxu0 %v148
    %v150 = vpop.f32.mrb[0].mxu0
    %v151 = vadd.f32 0.0, %v150
    %v152 = vpop.f32.mrb[0].mxu0
    %153 = vmatprep.mubr.f32.mxu0 0.0
    %v154 = vand.u32 %v75, 4294901760
    %v155 = vsub.f32 %v75, %v154
    %v156 = vand.u32 %v155, 4294901760
    %v157 = vsub.f32 %v155, %v156
    %v158 = vand.u32 %v157, 4294901760
    %159 = vmatmul.mubr.f32.gmra.mrb[0].mxu0 %v158
    %v160 = vpop.f32.mrb[0].mxu0
    %v161 = vadd.f32 0.0, %v160
    %v162 = vpop.f32.mrb[0].mxu0
    %163 = vdwg.mxu0
    %164 = vmatprep.subr.mxu0 0.0
    %v165 = vand.u32 %v61, 4294901760
    %v166 = vsub.f32 %v61, %v165
    %v167 = vand.u32 %v166, 4294901760
    %v168 = vsub.f32 %v166, %v167
    %v169 = vand.u32 %v168, 4294901760
    %170 = vmatpush1.msra.mxu0 %v169
    %171 = vmatprep.subr.mxu0 0.0
    %v172 = vand.u32 %v62, 4294901760
    %v173 = vsub.f32 %v62, %v172
    %v174 = vand.u32 %v173, 4294901760
    %v175 = vsub.f32 %v173, %v174
    %v176 = vand.u32 %v175, 4294901760
    %177 = vmatpush1.msra.mxu0 %v176
    %178 = vmatprep.subr.mxu0 0.0
    %179 = vmatpush1.msra.mxu0 0.0
    %180 = vmatprep.subr.mxu0 0.0
    %181 = vmatpush1.msra.mxu0 0.0
    %182 = vmatprep.subr.mxu0 0.0
    %183 = vmatpush1.msra.mxu0 0.0
    %184 = vmatprep.subr.mxu0 0.0
    %185 = vmatpush1.msra.mxu0 0.0
    %186 = vmatprep.subr.mxu0 0.0
    %187 = vmatpush1.msra.mxu0 0.0
    %188 = vmatprep.subr.mxu0 0.0
    %189 = vmatpush1.msra.mxu0 0.0
    %190 = vmatprep.subr.mxu0 0.0
    %191 = vmatpush1.msra.mxu0 0.0
    %192 = vmatprep.subr.mxu0 0.0
    %193 = vmatpush1.msra.mxu0 0.0
    %194 = vmatprep.subr.mxu0 0.0
    %195 = vmatpush1.msra.mxu0 0.0
    %196 = vmatprep.subr.mxu0 0.0
    %197 = vmatpush1.msra.mxu0 0.0
    %198 = vmatprep.subr.mxu0 0.0
    %199 = vmatpush1.msra.mxu0 0.0
    %200 = vmatprep.subr.mxu0 0.0
    %201 = vmatpush1.msra.mxu0 0.0
    %202 = vmatprep.subr.mxu0 0.0
    %203 = vmatpush1.msra.mxu0 0.0
    %204 = vmatprep.subr.mxu0 0.0
    %205 = vmatpush1.msra.mxu0 0.0
    %206 = vmatprep.subr.mxu0 0.0
    %207 = vmatpush1.msra.mxu0 0.0
    %208 = vmatprep.subr.mxu0 0.0
    %209 = vmatpush1.msra.mxu0 0.0
    %210 = vmatprep.subr.mxu0 0.0
    %211 = vmatpush1.msra.mxu0 0.0
    %212 = vmatprep.subr.mxu0 0.0
    %213 = vmatpush1.msra.mxu0 0.0
    %214 = vmatprep.subr.mxu0 0.0
    %215 = vmatpush1.msra.mxu0 0.0
    %216 = vmatprep.subr.mxu0 0.0
    %217 = vmatpush1.msra.mxu0 0.0
    %218 = vmatprep.subr.mxu0 0.0
    %219 = vmatpush1.msra.mxu0 0.0
    %220 = vmatprep.subr.mxu0 0.0
    %221 = vmatpush1.msra.mxu0 0.0
    %222 = vmatprep.subr.mxu0 0.0
    %223 = vmatpush1.msra.mxu0 0.0
    %224 = vmatprep.subr.mxu0 0.0
    %225 = vmatpush1.msra.mxu0 0.0
    %226 = vmatprep.subr.mxu0 0.0
    %227 = vmatpush1.msra.mxu0 0.0
    %228 = vmatprep.subr.mxu0 0.0
    %229 = vmatpush1.msra.mxu0 0.0
    %230 = vmatprep.subr.mxu0 0.0
    %231 = vmatpush1.msra.mxu0 0.0
    %232 = vmatprep.subr.mxu0 0.0
    %233 = vmatpush1.msra.mxu0 0.0
    %234 = vmatprep.subr.mxu0 0.0
    %235 = vmatpush1.msra.mxu0 0.0
    %236 = vmatprep.subr.mxu0 0.0
    %237 = vmatpush1.msra.mxu0 0.0
    %238 = vmatprep.mubr.f32.mxu0 0.0
    %v239 = vand.u32 %v72, 4294901760
    %240 = vmatmul.mubr.f32.gmra.mrb[0].mxu0 %v239
    %v241 = vpop.f32.mrb[0].mxu0
    %v242 = vadd.f32 %v151, %v241
    %v243 = vpop.f32.mrb[0].mxu0
    %244 = vmatprep.mubr.f32.mxu0 0.0
    %v245 = vand.u32 %v75, 4294901760
    %246 = vmatmul.mubr.f32.gmra.mrb[0].mxu0 %v245
    %v247 = vpop.f32.mrb[0].mxu0
    %v248 = vadd.f32 %v161, %v247
    %v249 = vpop.f32.mrb[0].mxu0
    %250 = vdwg.mxu0
    %251 = vmatprep.subr.mxu0 0.0
    %v252 = vand.u32 %v61, 4294901760
    %v253 = vsub.f32 %v61, %v252
    %254 = vmatpush1.msra.mxu0 %v253
    %255 = vmatprep.subr.mxu0 0.0
    %v256 = vand.u32 %v62, 4294901760
    %v257 = vsub.f32 %v62, %v256
    %258 = vmatpush1.msra.mxu0 %v257
    %259 = vmatprep.subr.mxu0 0.0
    %260 = vmatpush1.msra.mxu0 0.0
    %261 = vmatprep.subr.mxu0 0.0
    %262 = vmatpush1.msra.mxu0 0.0
    %263 = vmatprep.subr.mxu0 0.0
    %264 = vmatpush1.msra.mxu0 0.0
    %265 = vmatprep.subr.mxu0 0.0
    %266 = vmatpush1.msra.mxu0 0.0
    %267 = vmatprep.subr.mxu0 0.0
    %268 = vmatpush1.msra.mxu0 0.0
    %269 = vmatprep.subr.mxu0 0.0
    %270 = vmatpush1.msra.mxu0 0.0
    %271 = vmatprep.subr.mxu0 0.0
    %272 = vmatpush1.msra.mxu0 0.0
    %273 = vmatprep.subr.mxu0 0.0
    %274 = vmatpush1.msra.mxu0 0.0
    %275 = vmatprep.subr.mxu0 0.0
    %276 = vmatpush1.msra.mxu0 0.0
    %277 = vmatprep.subr.mxu0 0.0
    %278 = vmatpush1.msra.mxu0 0.0
    %279 = vmatprep.subr.mxu0 0.0
    %280 = vmatpush1.msra.mxu0 0.0
    %281 = vmatprep.subr.mxu0 0.0
    %282 = vmatpush1.msra.mxu0 0.0
    %283 = vmatprep.subr.mxu0 0.0
    %284 = vmatpush1.msra.mxu0 0.0
    %285 = vmatprep.subr.mxu0 0.0
    %286 = vmatpush1.msra.mxu0 0.0
    %287 = vmatprep.subr.mxu0 0.0
    %288 = vmatpush1.msra.mxu0 0.0
    %289 = vmatprep.subr.mxu0 0.0
    %290 = vmatpush1.msra.mxu0 0.0
    %291 = vmatprep.subr.mxu0 0.0
    %292 = vmatpush1.msra.mxu0 0.0
    %293 = vmatprep.subr.mxu0 0.0
    %294 = vmatpush1.msra.mxu0 0.0
    %295 = vmatprep.subr.mxu0 0.0
    %296 = vmatpush1.msra.mxu0 0.0
    %297 = vmatprep.subr.mxu0 0.0
    %298 = vmatpush1.msra.mxu0 0.0
    %299 = vmatprep.subr.mxu0 0.0
    %300 = vmatpush1.msra.mxu0 0.0
    %301 = vmatprep.subr.mxu0 0.0
    %302 = vmatpush1.msra.mxu0 0.0
    %303 = vmatprep.subr.mxu0 0.0
    %304 = vmatpush1.msra.mxu0 0.0
    %305 = vmatprep.subr.mxu0 0.0
    %306 = vmatpush1.msra.mxu0 0.0
    %307 = vmatprep.subr.mxu0 0.0
    %308 = vmatpush1.msra.mxu0 0.0
    %309 = vmatprep.subr.mxu0 0.0
    %310 = vmatpush1.msra.mxu0 0.0
    %311 = vmatprep.subr.mxu0 0.0
    %312 = vmatpush1.msra.mxu0 0.0
    %313 = vmatprep.subr.mxu0 0.0
    %314 = vmatpush1.msra.mxu0 0.0
    %315 = vmatprep.subr.mxu0 0.0
    %316 = vmatpush1.msra.mxu0 0.0
    %317 = vmatprep.subr.mxu0 0.0
    %318 = vmatpush1.msra.mxu0 0.0
    %319 = vmatprep.mubr.f32.mxu0 0.0
    %v320 = vand.u32 %v72, 4294901760
    %v321 = vsub.f32 %v72, %v320
    %322 = vmatmul.mubr.f32.gmra.mrb[0].mxu0 %v321
    %v323 = vpop.f32.mrb[0].mxu0
    %v324 = vadd.f32 %v242, %v323
    %v325 = vpop.f32.mrb[0].mxu0
    %326 = vmatprep.mubr.f32.mxu0 0.0
    %v327 = vand.u32 %v75, 4294901760
    %v328 = vsub.f32 %v75, %v327
    %329 = vmatmul.mubr.f32.gmra.mrb[0].mxu0 %v328
    %v330 = vpop.f32.mrb[0].mxu0
    %v331 = vadd.f32 %v248, %v330
    %v332 = vpop.f32.mrb[0].mxu0
    %333 = vdwg.mxu0
    %334 = vmatprep.subr.mxu0 0.0
    %v335 = vand.u32 %v61, 4294901760
    %336 = vmatpush1.msra.mxu0 %v335
    %337 = vmatprep.subr.mxu0 0.0
    %v338 = vand.u32 %v62, 4294901760
    %339 = vmatpush1.msra.mxu0 %v338
    %340 = vmatprep.subr.mxu0 0.0
    %341 = vmatpush1.msra.mxu0 0.0
    %342 = vmatprep.subr.mxu0 0.0
    %343 = vmatpush1.msra.mxu0 0.0
    %344 = vmatprep.subr.mxu0 0.0
    %345 = vmatpush1.msra.mxu0 0.0
    %346 = vmatprep.subr.mxu0 0.0
    %347 = vmatpush1.msra.mxu0 0.0
    %348 = vmatprep.subr.mxu0 0.0
    %349 = vmatpush1.msra.mxu0 0.0
    %350 = vmatprep.subr.mxu0 0.0
    %351 = vmatpush1.msra.mxu0 0.0
    %352 = vmatprep.subr.mxu0 0.0
    %353 = vmatpush1.msra.mxu0 0.0
    %354 = vmatprep.subr.mxu0 0.0
    %355 = vmatpush1.msra.mxu0 0.0
    %356 = vmatprep.subr.mxu0 0.0
    %357 = vmatpush1.msra.mxu0 0.0
    %358 = vmatprep.subr.mxu0 0.0
    %359 = vmatpush1.msra.mxu0 0.0
    %360 = vmatprep.subr.mxu0 0.0
    %361 = vmatpush1.msra.mxu0 0.0
    %362 = vmatprep.subr.mxu0 0.0
    %363 = vmatpush1.msra.mxu0 0.0
    %364 = vmatprep.subr.mxu0 0.0
    %365 = vmatpush1.msra.mxu0 0.0
    %366 = vmatprep.subr.mxu0 0.0
    %367 = vmatpush1.msra.mxu0 0.0
    %368 = vmatprep.subr.mxu0 0.0
    %369 = vmatpush1.msra.mxu0 0.0
    %370 = vmatprep.subr.mxu0 0.0
    %371 = vmatpush1.msra.mxu0 0.0
    %372 = vmatprep.subr.mxu0 0.0
    %373 = vmatpush1.msra.mxu0 0.0
    %374 = vmatprep.subr.mxu0 0.0
    %375 = vmatpush1.msra.mxu0 0.0
    %376 = vmatprep.subr.mxu0 0.0
    %377 = vmatpush1.msra.mxu0 0.0
    %378 = vmatprep.subr.mxu0 0.0
    %379 = vmatpush1.msra.mxu0 0.0
    %380 = vmatprep.subr.mxu0 0.0
    %381 = vmatpush1.msra.mxu0 0.0
    %382 = vmatprep.subr.mxu0 0.0
    %383 = vmatpush1.msra.mxu0 0.0
    %384 = vmatprep.subr.mxu0 0.0
    %385 = vmatpush1.msra.mxu0 0.0
    %386 = vmatprep.subr.mxu0 0.0
    %387 = vmatpush1.msra.mxu0 0.0
    %388 = vmatprep.subr.mxu0 0.0
    %389 = vmatpush1.msra.mxu0 0.0
    %390 = vmatprep.subr.mxu0 0.0
    %391 = vmatpush1.msra.mxu0 0.0
    %392 = vmatprep.subr.mxu0 0.0
    %393 = vmatpush1.msra.mxu0 0.0
    %394 = vmatprep.subr.mxu0 0.0
    %395 = vmatpush1.msra.mxu0 0.0
    %396 = vmatprep.subr.mxu0 0.0
    %397 = vmatpush1.msra.mxu0 0.0
    %398 = vmatprep.subr.mxu0 0.0
    %399 = vmatpush1.msra.mxu0 0.0
    %400 = vmatprep.mubr.f32.mxu0 0.0
    %v401 = vand.u32 %v72, 4294901760
    %v402 = vsub.f32 %v72, %v401
    %v403 = vand.u32 %v402, 4294901760
    %404 = vmatmul.mubr.f32.gmra.mrb[0].mxu0 %v403
    %v405 = vpop.f32.mrb[0].mxu0
    %v406 = vadd.f32 %v324, %v405
    %v407 = vpop.f32.mrb[0].mxu0
    %408 = vmatprep.mubr.f32.mxu0 0.0
    %v409 = vand.u32 %v75, 4294901760
    %v410 = vsub.f32 %v75, %v409
    %v411 = vand.u32 %v410, 4294901760
    %412 = vmatmul.mubr.f32.gmra.mrb[0].mxu0 %v411
    %v413 = vpop.f32.mrb[0].mxu0
    %v414 = vadd.f32 %v331, %v413
    %v415 = vpop.f32.mrb[0].mxu0
    %416 = vdwg.mxu0
    %417 = vmatprep.subr.mxu0 0.0
    %v418 = vand.u32 %v61, 4294901760
    %v419 = vsub.f32 %v61, %v418
    %v420 = vand.u32 %v419, 4294901760
    %421 = vmatpush1.msra.mxu0 %v420
    %422 = vmatprep.subr.mxu0 0.0
    %v423 = vand.u32 %v62, 4294901760
    %v424 = vsub.f32 %v62, %v423
    %v425 = vand.u32 %v424, 4294901760
    %426 = vmatpush1.msra.mxu0 %v425
    %427 = vmatprep.subr.mxu0 0.0
    %428 = vmatpush1.msra.mxu0 0.0
    %429 = vmatprep.subr.mxu0 0.0
    %430 = vmatpush1.msra.mxu0 0.0
    %431 = vmatprep.subr.mxu0 0.0
    %432 = vmatpush1.msra.mxu0 0.0
    %433 = vmatprep.subr.mxu0 0.0
    %434 = vmatpush1.msra.mxu0 0.0
    %435 = vmatprep.subr.mxu0 0.0
    %436 = vmatpush1.msra.mxu0 0.0
    %437 = vmatprep.subr.mxu0 0.0
    %438 = vmatpush1.msra.mxu0 0.0
    %439 = vmatprep.subr.mxu0 0.0
    %440 = vmatpush1.msra.mxu0 0.0
    %441 = vmatprep.subr.mxu0 0.0
    %442 = vmatpush1.msra.mxu0 0.0
    %443 = vmatprep.subr.mxu0 0.0
    %444 = vmatpush1.msra.mxu0 0.0
    %445 = vmatprep.subr.mxu0 0.0
    %446 = vmatpush1.msra.mxu0 0.0
    %447 = vmatprep.subr.mxu0 0.0
    %448 = vmatpush1.msra.mxu0 0.0
    %449 = vmatprep.subr.mxu0 0.0
    %450 = vmatpush1.msra.mxu0 0.0
    %451 = vmatprep.subr.mxu0 0.0
    %452 = vmatpush1.msra.mxu0 0.0
    %453 = vmatprep.subr.mxu0 0.0
    %454 = vmatpush1.msra.mxu0 0.0
    %455 = vmatprep.subr.mxu0 0.0
    %456 = vmatpush1.msra.mxu0 0.0
    %457 = vmatprep.subr.mxu0 0.0
    %458 = vmatpush1.msra.mxu0 0.0
    %459 = vmatprep.subr.mxu0 0.0
    %460 = vmatpush1.msra.mxu0 0.0
    %461 = vmatprep.subr.mxu0 0.0
    %462 = vmatpush1.msra.mxu0 0.0
    %463 = vmatprep.subr.mxu0 0.0
    %464 = vmatpush1.msra.mxu0 0.0
    %465 = vmatprep.subr.mxu0 0.0
    %466 = vmatpush1.msra.mxu0 0.0
    %467 = vmatprep.subr.mxu0 0.0
    %468 = vmatpush1.msra.mxu0 0.0
    %469 = vmatprep.subr.mxu0 0.0
    %470 = vmatpush1.msra.mxu0 0.0
    %471 = vmatprep.subr.mxu0 0.0
    %472 = vmatpush1.msra.mxu0 0.0
    %473 = vmatprep.subr.mxu0 0.0
    %474 = vmatpush1.msra.mxu0 0.0
    %475 = vmatprep.subr.mxu0 0.0
    %476 = vmatpush1.msra.mxu0 0.0
    %477 = vmatprep.subr.mxu0 0.0
    %478 = vmatpush1.msra.mxu0 0.0
    %479 = vmatprep.subr.mxu0 0.0
    %480 = vmatpush1.msra.mxu0 0.0
    %481 = vmatprep.subr.mxu0 0.0
    %482 = vmatpush1.msra.mxu0 0.0
    %483 = vmatprep.subr.mxu0 0.0
    %484 = vmatpush1.msra.mxu0 0.0
    %485 = vmatprep.subr.mxu0 0.0
    %486 = vmatpush1.msra.mxu0 0.0
    %487 = vmatprep.mubr.f32.mxu0 0.0
    %v488 = vand.u32 %v72, 4294901760
    %489 = vmatmul.mubr.f32.gmra.mrb[0].mxu0 %v488
    %v490 = vpop.f32.mrb[0].mxu0
    %v491 = vadd.f32 %v406, %v490
    %v492 = vpop.f32.mrb[0].mxu0
    %493 = vmatprep.mubr.f32.mxu0 0.0
    %v494 = vand.u32 %v75, 4294901760
    %495 = vmatmul.mubr.f32.gmra.mrb[0].mxu0 %v494
    %v496 = vpop.f32.mrb[0].mxu0
    %v497 = vadd.f32 %v414, %v496
    %v498 = vpop.f32.mrb[0].mxu0
    %499 = vdwg.mxu0
    %500 = vmatprep.subr.mxu0 0.0
    %v501 = vand.u32 %v61, 4294901760
    %502 = vmatpush1.msra.mxu0 %v501
    %503 = vmatprep.subr.mxu0 0.0
    %v504 = vand.u32 %v62, 4294901760
    %505 = vmatpush1.msra.mxu0 %v504
    %506 = vmatprep.subr.mxu0 0.0
    %507 = vmatpush1.msra.mxu0 0.0
    %508 = vmatprep.subr.mxu0 0.0
    %509 = vmatpush1.msra.mxu0 0.0
    %510 = vmatprep.subr.mxu0 0.0
    %511 = vmatpush1.msra.mxu0 0.0
    %512 = vmatprep.subr.mxu0 0.0
    %513 = vmatpush1.msra.mxu0 0.0
    %514 = vmatprep.subr.mxu0 0.0
    %515 = vmatpush1.msra.mxu0 0.0
    %516 = vmatprep.subr.mxu0 0.0
    %517 = vmatpush1.msra.mxu0 0.0
    %518 = vmatprep.subr.mxu0 0.0
    %519 = vmatpush1.msra.mxu0 0.0
    %520 = vmatprep.subr.mxu0 0.0
    %521 = vmatpush1.msra.mxu0 0.0
    %522 = vmatprep.subr.mxu0 0.0
    %523 = vmatpush1.msra.mxu0 0.0
    %524 = vmatprep.subr.mxu0 0.0
    %525 = vmatpush1.msra.mxu0 0.0
    %526 = vmatprep.subr.mxu0 0.0
    %527 = vmatpush1.msra.mxu0 0.0
    %528 = vmatprep.subr.mxu0 0.0
    %529 = vmatpush1.msra.mxu0 0.0
    %530 = vmatprep.subr.mxu0 0.0
    %531 = vmatpush1.msra.mxu0 0.0
    %532 = vmatprep.subr.mxu0 0.0
    %533 = vmatpush1.msra.mxu0 0.0
    %534 = vmatprep.subr.mxu0 0.0
    %535 = vmatpush1.msra.mxu0 0.0
    %536 = vmatprep.subr.mxu0 0.0
    %537 = vmatpush1.msra.mxu0 0.0
    %538 = vmatprep.subr.mxu0 0.0
    %539 = vmatpush1.msra.mxu0 0.0
    %540 = vmatprep.subr.mxu0 0.0
    %541 = vmatpush1.msra.mxu0 0.0
    %542 = vmatprep.subr.mxu0 0.0
    %543 = vmatpush1.msra.mxu0 0.0
    %544 = vmatprep.subr.mxu0 0.0
    %545 = vmatpush1.msra.mxu0 0.0
    %546 = vmatprep.subr.mxu0 0.0
    %547 = vmatpush1.msra.mxu0 0.0
    %548 = vmatprep.subr.mxu0 0.0
    %549 = vmatpush1.msra.mxu0 0.0
    %550 = vmatprep.subr.mxu0 0.0
    %551 = vmatpush1.msra.mxu0 0.0
    %552 = vmatprep.subr.mxu0 0.0
    %553 = vmatpush1.msra.mxu0 0.0
    %554 = vmatprep.subr.mxu0 0.0
    %555 = vmatpush1.msra.mxu0 0.0
    %556 = vmatprep.subr.mxu0 0.0
    %557 = vmatpush1.msra.mxu0 0.0
    %558 = vmatprep.subr.mxu0 0.0
    %559 = vmatpush1.msra.mxu0 0.0
    %560 = vmatprep.subr.mxu0 0.0
    %561 = vmatpush1.msra.mxu0 0.0
    %562 = vmatprep.subr.mxu0 0.0
    %563 = vmatpush1.msra.mxu0 0.0
    %564 = vmatprep.subr.mxu0 0.0
    %565 = vmatpush1.msra.mxu0 0.0
    %566 = vmatprep.mubr.f32.mxu0 0.0
    %v567 = vand.u32 %v72, 4294901760
    %568 = vmatmul.mubr.f32.gmra.mrb[0].mxu0 %v567
    %v569 = vpop.f32.mrb[0].mxu0
    %v570 = vadd.f32 %v491, %v569
    %v571 = vpop.f32.mrb[0].mxu0
    %572 = vmatprep.mubr.f32.mxu0 0.0
    %v573 = vand.u32 %v75, 4294901760
    %574 = vmatmul.mubr.f32.gmra.mrb[0].mxu0 %v573
    %v575 = vpop.f32.mrb[0].mxu0
    %v576 = vadd.f32 %v497, %v575
    %v577 = vpop.f32.mrb[0].mxu0
    %578 = vdwg.mxu0
    %579 = vst.msk [vmem:[#allocation2 + $0x8] sm:$0xff] %vm67, %v570
    %580 = vst.msk [vmem:[%s69 + $0x8] sm:$0xff] %vm67, %v576
    %v582 = vsel %vm67, %v570, 0
    %v585 = vsel %vm67, %v576, 0
    %587 = vmatprep.subr.mxu0 0.0
    %v588 = vand.u32 %v61, 4294901760
    %589 = vmatpush1.msra.mxu0 %v588
    %590 = vmatprep.subr.mxu0 0.0
    %v591 = vand.u32 %v62, 4294901760
    %592 = vmatpush1.msra.mxu0 %v591
    %593 = vmatprep.subr.mxu0 0.0
    %594 = vmatpush1.msra.mxu0 0.0
    %595 = vmatprep.subr.mxu0 0.0
    %596 = vmatpush1.msra.mxu0 0.0
    %597 = vmatprep.subr.mxu0 0.0
    %598 = vmatpush1.msra.mxu0 0.0
    %599 = vmatprep.subr.mxu0 0.0
    %600 = vmatpush1.msra.mxu0 0.0
    %601 = vmatprep.subr.mxu0 0.0
    %602 = vmatpush1.msra.mxu0 0.0
    %603 = vmatprep.subr.mxu0 0.0
    %604 = vmatpush1.msra.mxu0 0.0
    %605 = vmatprep.subr.mxu0 0.0
    %606 = vmatpush1.msra.mxu0 0.0
    %607 = vmatprep.subr.mxu0 0.0
    %608 = vmatpush1.msra.mxu0 0.0
    %609 = vmatprep.subr.mxu0 0.0
    %610 = vmatpush1.msra.mxu0 0.0
    %611 = vmatprep.subr.mxu0 0.0
    %612 = vmatpush1.msra.mxu0 0.0
    %613 = vmatprep.subr.mxu0 0.0
    %614 = vmatpush1.msra.mxu0 0.0
    %615 = vmatprep.subr.mxu0 0.0
    %616 = vmatpush1.msra.mxu0 0.0
    %617 = vmatprep.subr.mxu0 0.0
    %618 = vmatpush1.msra.mxu0 0.0
    %619 = vmatprep.subr.mxu0 0.0
    %620 = vmatpush1.msra.mxu0 0.0
    %621 = vmatprep.subr.mxu0 0.0
    %622 = vmatpush1.msra.mxu0 0.0
    %623 = vmatprep.subr.mxu0 0.0
    %624 = vmatpush1.msra.mxu0 0.0
    %625 = vmatprep.subr.mxu0 0.0
    %626 = vmatpush1.msra.mxu0 0.0
    %627 = vmatprep.subr.mxu0 0.0
    %628 = vmatpush1.msra.mxu0 0.0
    %629 = vmatprep.subr.mxu0 0.0
    %630 = vmatpush1.msra.mxu0 0.0
    %631 = vmatprep.subr.mxu0 0.0
    %632 = vmatpush1.msra.mxu0 0.0
    %633 = vmatprep.subr.mxu0 0.0
    %634 = vmatpush1.msra.mxu0 0.0
    %635 = vmatprep.subr.mxu0 0.0
    %636 = vmatpush1.msra.mxu0 0.0
    %637 = vmatprep.subr.mxu0 0.0
    %638 = vmatpush1.msra.mxu0 0.0
    %639 = vmatprep.subr.mxu0 0.0
    %640 = vmatpush1.msra.mxu0 0.0
    %641 = vmatprep.subr.mxu0 0.0
    %642 = vmatpush1.msra.mxu0 0.0
    %643 = vmatprep.subr.mxu0 0.0
    %644 = vmatpush1.msra.mxu0 0.0
    %645 = vmatprep.subr.mxu0 0.0
    %646 = vmatpush1.msra.mxu0 0.0
    %647 = vmatprep.subr.mxu0 0.0
    %648 = vmatpush1.msra.mxu0 0.0
    %649 = vmatprep.subr.mxu0 0.0
    %650 = vmatpush1.msra.mxu0 0.0
    %651 = vmatprep.subr.mxu0 0.0
    %652 = vmatpush1.msra.mxu0 0.0
    %653 = vmatprep.mubr.f32.mxu0 0.0
    %v654 = vand.u32 %v582, 4294901760
    %v655 = vsub.f32 %v582, %v654
    %v656 = vand.u32 %v655, 4294901760
    %v657 = vsub.f32 %v655, %v656
    %v658 = vand.u32 %v657, 4294901760
    %659 = vmatmul.mubr.f32.gmra.mrb[0].mxu0 %v658
    %v660 = vpop.f32.mrb[0].mxu0
    %v661 = vadd.f32 0.0, %v660
    %v662 = vpop.f32.mrb[0].mxu0
    %663 = vmatprep.mubr.f32.mxu0 0.0
    %v664 = vand.u32 %v585, 4294901760
    %v665 = vsub.f32 %v585, %v664
    %v666 = vand.u32 %v665, 4294901760
    %v667 = vsub.f32 %v665, %v666
    %v668 = vand.u32 %v667, 4294901760
    %669 = vmatmul.mubr.f32.gmra.mrb[0].mxu0 %v668
    %v670 = vpop.f32.mrb[0].mxu0
    %v671 = vadd.f32 0.0, %v670
    %v672 = vpop.f32.mrb[0].mxu0
    %673 = vdwg.mxu0
    %674 = vmatprep.subr.mxu0 0.0
    %v675 = vand.u32 %v61, 4294901760
    %v676 = vsub.f32 %v61, %v675
    %v677 = vand.u32 %v676, 4294901760
    %v678 = vsub.f32 %v676, %v677
    %v679 = vand.u32 %v678, 4294901760
    %680 = vmatpush1.msra.mxu0 %v679
    %681 = vmatprep.subr.mxu0 0.0
    %v682 = vand.u32 %v62, 4294901760
    %v683 = vsub.f32 %v62, %v682
    %v684 = vand.u32 %v683, 4294901760
    %v685 = vsub.f32 %v683, %v684
    %v686 = vand.u32 %v685, 4294901760
    %687 = vmatpush1.msra.mxu0 %v686
    %688 = vmatprep.subr.mxu0 0.0
    %689 = vmatpush1.msra.mxu0 0.0
    %690 = vmatprep.subr.mxu0 0.0
    %691 = vmatpush1.msra.mxu0 0.0
    %692 = vmatprep.subr.mxu0 0.0
    %693 = vmatpush1.msra.mxu0 0.0
    %694 = vmatprep.subr.mxu0 0.0
    %695 = vmatpush1.msra.mxu0 0.0
    %696 = vmatprep.subr.mxu0 0.0
    %697 = vmatpush1.msra.mxu0 0.0
    %698 = vmatprep.subr.mxu0 0.0
    %699 = vmatpush1.msra.mxu0 0.0
    %700 = vmatprep.subr.mxu0 0.0
    %701 = vmatpush1.msra.mxu0 0.0
    %702 = vmatprep.subr.mxu0 0.0
    %703 = vmatpush1.msra.mxu0 0.0
    %704 = vmatprep.subr.mxu0 0.0
    %705 = vmatpush1.msra.mxu0 0.0
    %706 = vmatprep.subr.mxu0 0.0
    %707 = vmatpush1.msra.mxu0 0.0
    %708 = vmatprep.subr.mxu0 0.0
    %709 = vmatpush1.msra.mxu0 0.0
    %710 = vmatprep.subr.mxu0 0.0
    %711 = vmatpush1.msra.mxu0 0.0
    %712 = vmatprep.subr.mxu0 0.0
    %713 = vmatpush1.msra.mxu0 0.0
    %714 = vmatprep.subr.mxu0 0.0
    %715 = vmatpush1.msra.mxu0 0.0
    %716 = vmatprep.subr.mxu0 0.0
    %717 = vmatpush1.msra.mxu0 0.0
    %718 = vmatprep.subr.mxu0 0.0
    %719 = vmatpush1.msra.mxu0 0.0
    %720 = vmatprep.subr.mxu0 0.0
    %721 = vmatpush1.msra.mxu0 0.0
    %722 = vmatprep.subr.mxu0 0.0
    %723 = vmatpush1.msra.mxu0 0.0
    %724 = vmatprep.subr.mxu0 0.0
    %725 = vmatpush1.msra.mxu0 0.0
    %726 = vmatprep.subr.mxu0 0.0
    %727 = vmatpush1.msra.mxu0 0.0
    %728 = vmatprep.subr.mxu0 0.0
    %729 = vmatpush1.msra.mxu0 0.0
    %730 = vmatprep.subr.mxu0 0.0
    %731 = vmatpush1.msra.mxu0 0.0
    %732 = vmatprep.subr.mxu0 0.0
    %733 = vmatpush1.msra.mxu0 0.0
    %734 = vmatprep.subr.mxu0 0.0
    %735 = vmatpush1.msra.mxu0 0.0
    %736 = vmatprep.subr.mxu0 0.0
    %737 = vmatpush1.msra.mxu0 0.0
    %738 = vmatprep.subr.mxu0 0.0
    %739 = vmatpush1.msra.mxu0 0.0
    %740 = vmatprep.subr.mxu0 0.0
    %741 = vmatpush1.msra.mxu0 0.0
    %742 = vmatprep.subr.mxu0 0.0
    %743 = vmatpush1.msra.mxu0 0.0
    %744 = vmatprep.subr.mxu0 0.0
    %745 = vmatpush1.msra.mxu0 0.0
    %746 = vmatprep.subr.mxu0 0.0
    %747 = vmatpush1.msra.mxu0 0.0
    %748 = vmatprep.mubr.f32.mxu0 0.0
    %v749 = vand.u32 %v582, 4294901760
    %750 = vmatmul.mubr.f32.gmra.mrb[0].mxu0 %v749
    %v751 = vpop.f32.mrb[0].mxu0
    %v752 = vadd.f32 %v661, %v751
    %v753 = vpop.f32.mrb[0].mxu0
    %754 = vmatprep.mubr.f32.mxu0 0.0
    %v755 = vand.u32 %v585, 4294901760
    %756 = vmatmul.mubr.f32.gmra.mrb[0].mxu0 %v755
    %v757 = vpop.f32.mrb[0].mxu0
    %v758 = vadd.f32 %v671, %v757
    %v759 = vpop.f32.mrb[0].mxu0
    %760 = vdwg.mxu0
    %761 = vmatprep.subr.mxu0 0.0
    %v762 = vand.u32 %v61, 4294901760
    %v763 = vsub.f32 %v61, %v762
    %764 = vmatpush1.msra.mxu0 %v763
    %765 = vmatprep.subr.mxu0 0.0
    %v766 = vand.u32 %v62, 4294901760
    %v767 = vsub.f32 %v62, %v766
    %768 = vmatpush1.msra.mxu0 %v767
    %769 = vmatprep.subr.mxu0 0.0
    %770 = vmatpush1.msra.mxu0 0.0
    %771 = vmatprep.subr.mxu0 0.0
    %772 = vmatpush1.msra.mxu0 0.0
    %773 = vmatprep.subr.mxu0 0.0
    %774 = vmatpush1.msra.mxu0 0.0
    %775 = vmatprep.subr.mxu0 0.0
    %776 = vmatpush1.msra.mxu0 0.0
    %777 = vmatprep.subr.mxu0 0.0
    %778 = vmatpush1.msra.mxu0 0.0
    %779 = vmatprep.subr.mxu0 0.0
    %780 = vmatpush1.msra.mxu0 0.0
    %781 = vmatprep.subr.mxu0 0.0
    %782 = vmatpush1.msra.mxu0 0.0
    %783 = vmatprep.subr.mxu0 0.0
    %784 = vmatpush1.msra.mxu0 0.0
    %785 = vmatprep.subr.mxu0 0.0
    %786 = vmatpush1.msra.mxu0 0.0
    %787 = vmatprep.subr.mxu0 0.0
    %788 = vmatpush1.msra.mxu0 0.0
    %789 = vmatprep.subr.mxu0 0.0
    %790 = vmatpush1.msra.mxu0 0.0
    %791 = vmatprep.subr.mxu0 0.0
    %792 = vmatpush1.msra.mxu0 0.0
    %793 = vmatprep.subr.mxu0 0.0
    %794 = vmatpush1.msra.mxu0 0.0
    %795 = vmatprep.subr.mxu0 0.0
    %796 = vmatpush1.msra.mxu0 0.0
    %797 = vmatprep.subr.mxu0 0.0
    %798 = vmatpush1.msra.mxu0 0.0
    %799 = vmatprep.subr.mxu0 0.0
    %800 = vmatpush1.msra.mxu0 0.0
    %801 = vmatprep.subr.mxu0 0.0
    %802 = vmatpush1.msra.mxu0 0.0
    %803 = vmatprep.subr.mxu0 0.0
    %804 = vmatpush1.msra.mxu0 0.0
    %805 = vmatprep.subr.mxu0 0.0
    %806 = vmatpush1.msra.mxu0 0.0
    %807 = vmatprep.subr.mxu0 0.0
    %808 = vmatpush1.msra.mxu0 0.0
    %809 = vmatprep.subr.mxu0 0.0
    %810 = vmatpush1.msra.mxu0 0.0
    %811 = vmatprep.subr.mxu0 0.0
    %812 = vmatpush1.msra.mxu0 0.0
    %813 = vmatprep.subr.mxu0 0.0
    %814 = vmatpush1.msra.mxu0 0.0
    %815 = vmatprep.subr.mxu0 0.0
    %816 = vmatpush1.msra.mxu0 0.0
    %817 = vmatprep.subr.mxu0 0.0
    %818 = vmatpush1.msra.mxu0 0.0
    %819 = vmatprep.subr.mxu0 0.0
    %820 = vmatpush1.msra.mxu0 0.0
    %821 = vmatprep.subr.mxu0 0.0
    %822 = vmatpush1.msra.mxu0 0.0
    %823 = vmatprep.subr.mxu0 0.0
    %824 = vmatpush1.msra.mxu0 0.0
    %825 = vmatprep.subr.mxu0 0.0
    %826 = vmatpush1.msra.mxu0 0.0
    %827 = vmatprep.subr.mxu0 0.0
    %828 = vmatpush1.msra.mxu0 0.0
    %829 = vmatprep.mubr.f32.mxu0 0.0
    %v830 = vand.u32 %v582, 4294901760
    %v831 = vsub.f32 %v582, %v830
    %832 = vmatmul.mubr.f32.gmra.mrb[0].mxu0 %v831
    %v833 = vpop.f32.mrb[0].mxu0
    %v834 = vadd.f32 %v752, %v833
    %v835 = vpop.f32.mrb[0].mxu0
    %836 = vmatprep.mubr.f32.mxu0 0.0
    %v837 = vand.u32 %v585, 4294901760
    %v838 = vsub.f32 %v585, %v837
    %839 = vmatmul.mubr.f32.gmra.mrb[0].mxu0 %v838
    %v840 = vpop.f32.mrb[0].mxu0
    %v841 = vadd.f32 %v758, %v840
    %v842 = vpop.f32.mrb[0].mxu0
    %843 = vdwg.mxu0
    %844 = vmatprep.subr.mxu0 0.0
    %v845 = vand.u32 %v61, 4294901760
    %846 = vmatpush1.msra.mxu0 %v845
    %847 = vmatprep.subr.mxu0 0.0
    %v848 = vand.u32 %v62, 4294901760
    %849 = vmatpush1.msra.mxu0 %v848
    %850 = vmatprep.subr.mxu0 0.0
    %851 = vmatpush1.msra.mxu0 0.0
    %852 = vmatprep.subr.mxu0 0.0
    %853 = vmatpush1.msra.mxu0 0.0
    %854 = vmatprep.subr.mxu0 0.0
    %855 = vmatpush1.msra.mxu0 0.0
    %856 = vmatprep.subr.mxu0 0.0
    %857 = vmatpush1.msra.mxu0 0.0
    %858 = vmatprep.subr.mxu0 0.0
    %859 = vmatpush1.msra.mxu0 0.0
    %860 = vmatprep.subr.mxu0 0.0
    %861 = vmatpush1.msra.mxu0 0.0
    %862 = vmatprep.subr.mxu0 0.0
    %863 = vmatpush1.msra.mxu0 0.0
    %864 = vmatprep.subr.mxu0 0.0
    %865 = vmatpush1.msra.mxu0 0.0
    %866 = vmatprep.subr.mxu0 0.0
    %867 = vmatpush1.msra.mxu0 0.0
    %868 = vmatprep.subr.mxu0 0.0
    %869 = vmatpush1.msra.mxu0 0.0
    %870 = vmatprep.subr.mxu0 0.0
    %871 = vmatpush1.msra.mxu0 0.0
    %872 = vmatprep.subr.mxu0 0.0
    %873 = vmatpush1.msra.mxu0 0.0
    %874 = vmatprep.subr.mxu0 0.0
    %875 = vmatpush1.msra.mxu0 0.0
    %876 = vmatprep.subr.mxu0 0.0
    %877 = vmatpush1.msra.mxu0 0.0
    %878 = vmatprep.subr.mxu0 0.0
    %879 = vmatpush1.msra.mxu0 0.0
    %880 = vmatprep.subr.mxu0 0.0
    %881 = vmatpush1.msra.mxu0 0.0
    %882 = vmatprep.subr.mxu0 0.0
    %883 = vmatpush1.msra.mxu0 0.0
    %884 = vmatprep.subr.mxu0 0.0
    %885 = vmatpush1.msra.mxu0 0.0
    %886 = vmatprep.subr.mxu0 0.0
    %887 = vmatpush1.msra.mxu0 0.0
    %888 = vmatprep.subr.mxu0 0.0
    %889 = vmatpush1.msra.mxu0 0.0
    %890 = vmatprep.subr.mxu0 0.0
    %891 = vmatpush1.msra.mxu0 0.0
    %892 = vmatprep.subr.mxu0 0.0
    %893 = vmatpush1.msra.mxu0 0.0
    %894 = vmatprep.subr.mxu0 0.0
    %895 = vmatpush1.msra.mxu0 0.0
    %896 = vmatprep.subr.mxu0 0.0
    %897 = vmatpush1.msra.mxu0 0.0
    %898 = vmatprep.subr.mxu0 0.0
    %899 = vmatpush1.msra.mxu0 0.0
    %900 = vmatprep.subr.mxu0 0.0
    %901 = vmatpush1.msra.mxu0 0.0
    %902 = vmatprep.subr.mxu0 0.0
    %903 = vmatpush1.msra.mxu0 0.0
    %904 = vmatprep.subr.mxu0 0.0
    %905 = vmatpush1.msra.mxu0 0.0
    %906 = vmatprep.subr.mxu0 0.0
    %907 = vmatpush1.msra.mxu0 0.0
    %908 = vmatprep.subr.mxu0 0.0
    %909 = vmatpush1.msra.mxu0 0.0
    %910 = vmatprep.mubr.f32.mxu0 0.0
    %v911 = vand.u32 %v582, 4294901760
    %v912 = vsub.f32 %v582, %v911
    %v913 = vand.u32 %v912, 4294901760
    %914 = vmatmul.mubr.f32.gmra.mrb[0].mxu0 %v913
    %v915 = vpop.f32.mrb[0].mxu0
    %v916 = vadd.f32 %v834, %v915
    %v917 = vpop.f32.mrb[0].mxu0
    %918 = vmatprep.mubr.f32.mxu0 0.0
    %v919 = vand.u32 %v585, 4294901760
    %v920 = vsub.f32 %v585, %v919
    %v921 = vand.u32 %v920, 4294901760
    %922 = vmatmul.mubr.f32.gmra.mrb[0].mxu0 %v921
    %v923 = vpop.f32.mrb[0].mxu0
    %v924 = vadd.f32 %v841, %v923
    %v925 = vpop.f32.mrb[0].mxu0
    %926 = vdwg.mxu0
    %927 = vmatprep.subr.mxu0 0.0
    %v928 = vand.u32 %v61, 4294901760
    %v929 = vsub.f32 %v61, %v928
    %v930 = vand.u32 %v929, 4294901760
    %931 = vmatpush1.msra.mxu0 %v930
    %932 = vmatprep.subr.mxu0 0.0
    %v933 = vand.u32 %v62, 4294901760
    %v934 = vsub.f32 %v62, %v933
    %v935 = vand.u32 %v934, 4294901760
    %936 = vmatpush1.msra.mxu0 %v935
    %937 = vmatprep.subr.mxu0 0.0
    %938 = vmatpush1.msra.mxu0 0.0
    %939 = vmatprep.subr.mxu0 0.0
    %940 = vmatpush1.msra.mxu0 0.0
    %941 = vmatprep.subr.mxu0 0.0
    %942 = vmatpush1.msra.mxu0 0.0
    %943 = vmatprep.subr.mxu0 0.0
    %944 = vmatpush1.msra.mxu0 0.0
    %945 = vmatprep.subr.mxu0 0.0
    %946 = vmatpush1.msra.mxu0 0.0
    %947 = vmatprep.subr.mxu0 0.0
    %948 = vmatpush1.msra.mxu0 0.0
    %949 = vmatprep.subr.mxu0 0.0
    %950 = vmatpush1.msra.mxu0 0.0
    %951 = vmatprep.subr.mxu0 0.0
    %952 = vmatpush1.msra.mxu0 0.0
    %953 = vmatprep.subr.mxu0 0.0
    %954 = vmatpush1.msra.mxu0 0.0
    %955 = vmatprep.subr.mxu0 0.0
    %956 = vmatpush1.msra.mxu0 0.0
    %957 = vmatprep.subr.mxu0 0.0
    %958 = vmatpush1.msra.mxu0 0.0
    %959 = vmatprep.subr.mxu0 0.0
    %960 = vmatpush1.msra.mxu0 0.0
    %961 = vmatprep.subr.mxu0 0.0
    %962 = vmatpush1.msra.mxu0 0.0
    %963 = vmatprep.subr.mxu0 0.0
    %964 = vmatpush1.msra.mxu0 0.0
    %965 = vmatprep.subr.mxu0 0.0
    %966 = vmatpush1.msra.mxu0 0.0
    %967 = vmatprep.subr.mxu0 0.0
    %968 = vmatpush1.msra.mxu0 0.0
    %969 = vmatprep.subr.mxu0 0.0
    %970 = vmatpush1.msra.mxu0 0.0
    %971 = vmatprep.subr.mxu0 0.0
    %972 = vmatpush1.msra.mxu0 0.0
    %973 = vmatprep.subr.mxu0 0.0
    %974 = vmatpush1.msra.mxu0 0.0
    %975 = vmatprep.subr.mxu0 0.0
    %976 = vmatpush1.msra.mxu0 0.0
    %977 = vmatprep.subr.mxu0 0.0
    %978 = vmatpush1.msra.mxu0 0.0
    %979 = vmatprep.subr.mxu0 0.0
    %980 = vmatpush1.msra.mxu0 0.0
    %981 = vmatprep.subr.mxu0 0.0
    %982 = vmatpush1.msra.mxu0 0.0
    %983 = vmatprep.subr.mxu0 0.0
    %984 = vmatpush1.msra.mxu0 0.0
    %985 = vmatprep.subr.mxu0 0.0
    %986 = vmatpush1.msra.mxu0 0.0
    %987 = vmatprep.subr.mxu0 0.0
    %988 = vmatpush1.msra.mxu0 0.0
    %989 = vmatprep.subr.mxu0 0.0
    %990 = vmatpush1.msra.mxu0 0.0
    %991 = vmatprep.subr.mxu0 0.0
    %992 = vmatpush1.msra.mxu0 0.0
    %993 = vmatprep.subr.mxu0 0.0
    %994 = vmatpush1.msra.mxu0 0.0
    %995 = vmatprep.subr.mxu0 0.0
    %996 = vmatpush1.msra.mxu0 0.0
    %997 = vmatprep.mubr.f32.mxu0 0.0
    %v998 = vand.u32 %v582, 4294901760
    %999 = vmatmul.mubr.f32.gmra.mrb[0].mxu0 %v998
    %v1000 = vpop.f32.mrb[0].mxu0
    %v1001 = vadd.f32 %v916, %v1000
    %v1002 = vpop.f32.mrb[0].mxu0
    %1003 = vmatprep.mubr.f32.mxu0 0.0
    %v1004 = vand.u32 %v585, 4294901760
    %1005 = vmatmul.mubr.f32.gmra.mrb[0].mxu0 %v1004
    %v1006 = vpop.f32.mrb[0].mxu0
    %v1007 = vadd.f32 %v924, %v1006
    %v1008 = vpop.f32.mrb[0].mxu0
    %1009 = vdwg.mxu0
    %1010 = vmatprep.subr.mxu0 0.0
    %v1011 = vand.u32 %v61, 4294901760
    %1012 = vmatpush1.msra.mxu0 %v1011
    %1013 = vmatprep.subr.mxu0 0.0
    %v1014 = vand.u32 %v62, 4294901760
    %1015 = vmatpush1.msra.mxu0 %v1014
    %1016 = vmatprep.subr.mxu0 0.0
    %1017 = vmatpush1.msra.mxu0 0.0
    %1018 = vmatprep.subr.mxu0 0.0
    %1019 = vmatpush1.msra.mxu0 0.0
    %1020 = vmatprep.subr.mxu0 0.0
    %1021 = vmatpush1.msra.mxu0 0.0
    %1022 = vmatprep.subr.mxu0 0.0
    %1023 = vmatpush1.msra.mxu0 0.0
    %1024 = vmatprep.subr.mxu0 0.0
    %1025 = vmatpush1.msra.mxu0 0.0
    %1026 = vmatprep.subr.mxu0 0.0
    %1027 = vmatpush1.msra.mxu0 0.0
    %1028 = vmatprep.subr.mxu0 0.0
    %1029 = vmatpush1.msra.mxu0 0.0
    %1030 = vmatprep.subr.mxu0 0.0
    %1031 = vmatpush1.msra.mxu0 0.0
    %1032 = vmatprep.subr.mxu0 0.0
    %1033 = vmatpush1.msra.mxu0 0.0
    %1034 = vmatprep.subr.mxu0 0.0
    %1035 = vmatpush1.msra.mxu0 0.0
    %1036 = vmatprep.subr.mxu0 0.0
    %1037 = vmatpush1.msra.mxu0 0.0
    %1038 = vmatprep.subr.mxu0 0.0
    %1039 = vmatpush1.msra.mxu0 0.0
    %1040 = vmatprep.subr.mxu0 0.0
    %1041 = vmatpush1.msra.mxu0 0.0
    %1042 = vmatprep.subr.mxu0 0.0
    %1043 = vmatpush1.msra.mxu0 0.0
    %1044 = vmatprep.subr.mxu0 0.0
    %1045 = vmatpush1.msra.mxu0 0.0
    %1046 = vmatprep.subr.mxu0 0.0
    %1047 = vmatpush1.msra.mxu0 0.0
    %1048 = vmatprep.subr.mxu0 0.0
    %1049 = vmatpush1.msra.mxu0 0.0
    %1050 = vmatprep.subr.mxu0 0.0
    %1051 = vmatpush1.msra.mxu0 0.0
    %1052 = vmatprep.subr.mxu0 0.0
    %1053 = vmatpush1.msra.mxu0 0.0
    %1054 = vmatprep.subr.mxu0 0.0
    %1055 = vmatpush1.msra.mxu0 0.0
    %1056 = vmatprep.subr.mxu0 0.0
    %1057 = vmatpush1.msra.mxu0 0.0
    %1058 = vmatprep.subr.mxu0 0.0
    %1059 = vmatpush1.msra.mxu0 0.0
    %1060 = vmatprep.subr.mxu0 0.0
    %1061 = vmatpush1.msra.mxu0 0.0
    %1062 = vmatprep.subr.mxu0 0.0
    %1063 = vmatpush1.msra.mxu0 0.0
    %1064 = vmatprep.subr.mxu0 0.0
    %1065 = vmatpush1.msra.mxu0 0.0
    %1066 = vmatprep.subr.mxu0 0.0
    %1067 = vmatpush1.msra.mxu0 0.0
    %1068 = vmatprep.subr.mxu0 0.0
    %1069 = vmatpush1.msra.mxu0 0.0
    %1070 = vmatprep.subr.mxu0 0.0
    %1071 = vmatpush1.msra.mxu0 0.0
    %1072 = vmatprep.subr.mxu0 0.0
    %1073 = vmatpush1.msra.mxu0 0.0
    %1074 = vmatprep.subr.mxu0 0.0
    %1075 = vmatpush1.msra.mxu0 0.0
    %1076 = vmatprep.mubr.f32.mxu0 0.0
    %v1077 = vand.u32 %v582, 4294901760
    %1078 = vmatmul.mubr.f32.gmra.mrb[0].mxu0 %v1077
    %v1079 = vpop.f32.mrb[0].mxu0
    %v1080 = vadd.f32 %v1001, %v1079
    %v1081 = vpop.f32.mrb[0].mxu0
    %1082 = vmatprep.mubr.f32.mxu0 0.0
    %v1083 = vand.u32 %v585, 4294901760
    %1084 = vmatmul.mubr.f32.gmra.mrb[0].mxu0 %v1083
    %v1085 = vpop.f32.mrb[0].mxu0
    %v1086 = vadd.f32 %v1007, %v1085
    %v1087 = vpop.f32.mrb[0].mxu0
    %1088 = vdwg.mxu0
    %v1089 = vmul.f32 %v1080, 2.0
    %v1090 = vmul.f32 %v1086, 2.0
    %v1091 = vsub.f32 %v1089, %v65
    %v1092 = vsub.f32 %v1090, %v66
    %1093 = vst.msk [vmem:[#allocation2 + $0x10] sm:$0xff] %vm67, %v1091
    %1094 = vst.msk [vmem:[%s69 + $0x10] sm:$0xff] %vm67, %v1092
    %1095 = vmatprep.subr.mxu0 0.0
    %v1096 = vand.u32 %v63, 4294901760
    %1097 = vmatpush1.msra.mxu0 %v1096
    %1098 = vmatprep.subr.mxu0 0.0
    %v1099 = vand.u32 %v64, 4294901760
    %1100 = vmatpush1.msra.mxu0 %v1099
    %1101 = vmatprep.subr.mxu0 0.0
    %1102 = vmatpush1.msra.mxu0 0.0
    %1103 = vmatprep.subr.mxu0 0.0
    %1104 = vmatpush1.msra.mxu0 0.0
    %1105 = vmatprep.subr.mxu0 0.0
    %1106 = vmatpush1.msra.mxu0 0.0
    %1107 = vmatprep.subr.mxu0 0.0
    %1108 = vmatpush1.msra.mxu0 0.0
    %1109 = vmatprep.subr.mxu0 0.0
    %1110 = vmatpush1.msra.mxu0 0.0
    %1111 = vmatprep.subr.mxu0 0.0
    %1112 = vmatpush1.msra.mxu0 0.0
    %1113 = vmatprep.subr.mxu0 0.0
    %1114 = vmatpush1.msra.mxu0 0.0
    %1115 = vmatprep.subr.mxu0 0.0
    %1116 = vmatpush1.msra.mxu0 0.0
    %1117 = vmatprep.subr.mxu0 0.0
    %1118 = vmatpush1.msra.mxu0 0.0
    %1119 = vmatprep.subr.mxu0 0.0
    %1120 = vmatpush1.msra.mxu0 0.0
    %1121 = vmatprep.subr.mxu0 0.0
    %1122 = vmatpush1.msra.mxu0 0.0
    %1123 = vmatprep.subr.mxu0 0.0
    %1124 = vmatpush1.msra.mxu0 0.0
    %1125 = vmatprep.subr.mxu0 0.0
    %1126 = vmatpush1.msra.mxu0 0.0
    %1127 = vmatprep.subr.mxu0 0.0
    %1128 = vmatpush1.msra.mxu0 0.0
    %1129 = vmatprep.subr.mxu0 0.0
    %1130 = vmatpush1.msra.mxu0 0.0
    %1131 = vmatprep.subr.mxu0 0.0
    %1132 = vmatpush1.msra.mxu0 0.0
    %1133 = vmatprep.subr.mxu0 0.0
    %1134 = vmatpush1.msra.mxu0 0.0
    %1135 = vmatprep.subr.mxu0 0.0
    %1136 = vmatpush1.msra.mxu0 0.0
    %1137 = vmatprep.subr.mxu0 0.0
    %1138 = vmatpush1.msra.mxu0 0.0
    %1139 = vmatprep.subr.mxu0 0.0
    %1140 = vmatpush1.msra.mxu0 0.0
    %1141 = vmatprep.subr.mxu0 0.0
    %1142 = vmatpush1.msra.mxu0 0.0
    %1143 = vmatprep.subr.mxu0 0.0
    %1144 = vmatpush1.msra.mxu0 0.0
    %1145 = vmatprep.subr.mxu0 0.0
    %1146 = vmatpush1.msra.mxu0 0.0
    %1147 = vmatprep.subr.mxu0 0.0
    %1148 = vmatpush1.msra.mxu0 0.0
    %1149 = vmatprep.subr.mxu0 0.0
    %1150 = vmatpush1.msra.mxu0 0.0
    %1151 = vmatprep.subr.mxu0 0.0
    %1152 = vmatpush1.msra.mxu0 0.0
    %1153 = vmatprep.subr.mxu0 0.0
    %1154 = vmatpush1.msra.mxu0 0.0
    %1155 = vmatprep.subr.mxu0 0.0
    %1156 = vmatpush1.msra.mxu0 0.0
    %1157 = vmatprep.subr.mxu0 0.0
    %1158 = vmatpush1.msra.mxu0 0.0
    %1159 = vmatprep.subr.mxu0 0.0
    %1160 = vmatpush1.msra.mxu0 0.0
    %1161 = vmatprep.mubr.f32.mxu0 0.0
    %v1162 = vand.u32 %v582, 4294901760
    %v1163 = vsub.f32 %v582, %v1162
    %v1164 = vand.u32 %v1163, 4294901760
    %v1165 = vsub.f32 %v1163, %v1164
    %v1166 = vand.u32 %v1165, 4294901760
    %1167 = vmatmul.mubr.f32.gmra.mrb[0].mxu0 %v1166
    %v1168 = vpop.f32.mrb[0].mxu0
    %v1169 = vadd.f32 0.0, %v1168
    %v1170 = vpop.f32.mrb[0].mxu0
    %1171 = vmatprep.mubr.f32.mxu0 0.0
    %v1172 = vand.u32 %v585, 4294901760
    %v1173 = vsub.f32 %v585, %v1172
    %v1174 = vand.u32 %v1173, 4294901760
    %v1175 = vsub.f32 %v1173, %v1174
    %v1176 = vand.u32 %v1175, 4294901760
    %1177 = vmatmul.mubr.f32.gmra.mrb[0].mxu0 %v1176
    %v1178 = vpop.f32.mrb[0].mxu0
    %v1179 = vadd.f32 0.0, %v1178
    %v1180 = vpop.f32.mrb[0].mxu0
    %1181 = vdwg.mxu0
    %1182 = vmatprep.subr.mxu0 0.0
    %v1183 = vand.u32 %v63, 4294901760
    %v1184 = vsub.f32 %v63, %v1183
    %v1185 = vand.u32 %v1184, 4294901760
    %v1186 = vsub.f32 %v1184, %v1185
    %v1187 = vand.u32 %v1186, 4294901760
    %1188 = vmatpush1.msra.mxu0 %v1187
    %1189 = vmatprep.subr.mxu0 0.0
    %v1190 = vand.u32 %v64, 4294901760
    %v1191 = vsub.f32 %v64, %v1190
    %v1192 = vand.u32 %v1191, 4294901760
    %v1193 = vsub.f32 %v1191, %v1192
    %v1194 = vand.u32 %v1193, 4294901760
    %1195 = vmatpush1.msra.mxu0 %v1194
    %1196 = vmatprep.subr.mxu0 0.0
    %1197 = vmatpush1.msra.mxu0 0.0
    %1198 = vmatprep.subr.mxu0 0.0
    %1199 = vmatpush1.msra.mxu0 0.0
    %1200 = vmatprep.subr.mxu0 0.0
    %1201 = vmatpush1.msra.mxu0 0.0
    %1202 = vmatprep.subr.mxu0 0.0
    %1203 = vmatpush1.msra.mxu0 0.0
    %1204 = vmatprep.subr.mxu0 0.0
    %1205 = vmatpush1.msra.mxu0 0.0
    %1206 = vmatprep.subr.mxu0 0.0
    %1207 = vmatpush1.msra.mxu0 0.0
    %1208 = vmatprep.subr.mxu0 0.0
    %1209 = vmatpush1.msra.mxu0 0.0
    %1210 = vmatprep.subr.mxu0 0.0
    %1211 = vmatpush1.msra.mxu0 0.0
    %1212 = vmatprep.subr.mxu0 0.0
    %1213 = vmatpush1.msra.mxu0 0.0
    %1214 = vmatprep.subr.mxu0 0.0
    %1215 = vmatpush1.msra.mxu0 0.0
    %1216 = vmatprep.subr.mxu0 0.0
    %1217 = vmatpush1.msra.mxu0 0.0
    %1218 = vmatprep.subr.mxu0 0.0
    %1219 = vmatpush1.msra.mxu0 0.0
    %1220 = vmatprep.subr.mxu0 0.0
    %1221 = vmatpush1.msra.mxu0 0.0
    %1222 = vmatprep.subr.mxu0 0.0
    %1223 = vmatpush1.msra.mxu0 0.0
    %1224 = vmatprep.subr.mxu0 0.0
    %1225 = vmatpush1.msra.mxu0 0.0
    %1226 = vmatprep.subr.mxu0 0.0
    %1227 = vmatpush1.msra.mxu0 0.0
    %1228 = vmatprep.subr.mxu0 0.0
    %1229 = vmatpush1.msra.mxu0 0.0
    %1230 = vmatprep.subr.mxu0 0.0
    %1231 = vmatpush1.msra.mxu0 0.0
    %1232 = vmatprep.subr.mxu0 0.0
    %1233 = vmatpush1.msra.mxu0 0.0
    %1234 = vmatprep.subr.mxu0 0.0
    %1235 = vmatpush1.msra.mxu0 0.0
    %1236 = vmatprep.subr.mxu0 0.0
    %1237 = vmatpush1.msra.mxu0 0.0
    %1238 = vmatprep.subr.mxu0 0.0
    %1239 = vmatpush1.msra.mxu0 0.0
    %1240 = vmatprep.subr.mxu0 0.0
    %1241 = vmatpush1.msra.mxu0 0.0
    %1242 = vmatprep.subr.mxu0 0.0
    %1243 = vmatpush1.msra.mxu0 0.0
    %1244 = vmatprep.subr.mxu0 0.0
    %1245 = vmatpush1.msra.mxu0 0.0
    %1246 = vmatprep.subr.mxu0 0.0
    %1247 = vmatpush1.msra.mxu0 0.0
    %1248 = vmatprep.subr.mxu0 0.0
    %1249 = vmatpush1.msra.mxu0 0.0
    %1250 = vmatprep.subr.mxu0 0.0
    %1251 = vmatpush1.msra.mxu0 0.0
    %1252 = vmatprep.subr.mxu0 0.0
    %1253 = vmatpush1.msra.mxu0 0.0
    %1254 = vmatprep.subr.mxu0 0.0
    %1255 = vmatpush1.msra.mxu0 0.0
    %1256 = vmatprep.mubr.f32.mxu0 0.0
    %v1257 = vand.u32 %v582, 4294901760
    %1258 = vmatmul.mubr.f32.gmra.mrb[0].mxu0 %v1257
    %v1259 = vpop.f32.mrb[0].mxu0
    %v1260 = vadd.f32 %v1169, %v1259
    %v1261 = vpop.f32.mrb[0].mxu0
    %1262 = vmatprep.mubr.f32.mxu0 0.0
    %v1263 = vand.u32 %v585, 4294901760
    %1264 = vmatmul.mubr.f32.gmra.mrb[0].mxu0 %v1263
    %v1265 = vpop.f32.mrb[0].mxu0
    %v1266 = vadd.f32 %v1179, %v1265
    %v1267 = vpop.f32.mrb[0].mxu0
    %1268 = vdwg.mxu0
    %1269 = vmatprep.subr.mxu0 0.0
    %v1270 = vand.u32 %v63, 4294901760
    %v1271 = vsub.f32 %v63, %v1270
    %1272 = vmatpush1.msra.mxu0 %v1271
    %1273 = vmatprep.subr.mxu0 0.0
    %v1274 = vand.u32 %v64, 4294901760
    %v1275 = vsub.f32 %v64, %v1274
    %1276 = vmatpush1.msra.mxu0 %v1275
    %1277 = vmatprep.subr.mxu0 0.0
    %1278 = vmatpush1.msra.mxu0 0.0
    %1279 = vmatprep.subr.mxu0 0.0
    %1280 = vmatpush1.msra.mxu0 0.0
    %1281 = vmatprep.subr.mxu0 0.0
    %1282 = vmatpush1.msra.mxu0 0.0
    %1283 = vmatprep.subr.mxu0 0.0
    %1284 = vmatpush1.msra.mxu0 0.0
    %1285 = vmatprep.subr.mxu0 0.0
    %1286 = vmatpush1.msra.mxu0 0.0
    %1287 = vmatprep.subr.mxu0 0.0
    %1288 = vmatpush1.msra.mxu0 0.0
    %1289 = vmatprep.subr.mxu0 0.0
    %1290 = vmatpush1.msra.mxu0 0.0
    %1291 = vmatprep.subr.mxu0 0.0
    %1292 = vmatpush1.msra.mxu0 0.0
    %1293 = vmatprep.subr.mxu0 0.0
    %1294 = vmatpush1.msra.mxu0 0.0
    %1295 = vmatprep.subr.mxu0 0.0
    %1296 = vmatpush1.msra.mxu0 0.0
    %1297 = vmatprep.subr.mxu0 0.0
    %1298 = vmatpush1.msra.mxu0 0.0
    %1299 = vmatprep.subr.mxu0 0.0
    %1300 = vmatpush1.msra.mxu0 0.0
    %1301 = vmatprep.subr.mxu0 0.0
    %1302 = vmatpush1.msra.mxu0 0.0
    %1303 = vmatprep.subr.mxu0 0.0
    %1304 = vmatpush1.msra.mxu0 0.0
    %1305 = vmatprep.subr.mxu0 0.0
    %1306 = vmatpush1.msra.mxu0 0.0
    %1307 = vmatprep.subr.mxu0 0.0
    %1308 = vmatpush1.msra.mxu0 0.0
    %1309 = vmatprep.subr.mxu0 0.0
    %1310 = vmatpush1.msra.mxu0 0.0
    %1311 = vmatprep.subr.mxu0 0.0
    %1312 = vmatpush1.msra.mxu0 0.0
    %1313 = vmatprep.subr.mxu0 0.0
    %1314 = vmatpush1.msra.mxu0 0.0
    %1315 = vmatprep.subr.mxu0 0.0
    %1316 = vmatpush1.msra.mxu0 0.0
    %1317 = vmatprep.subr.mxu0 0.0
    %1318 = vmatpush1.msra.mxu0 0.0
    %1319 = vmatprep.subr.mxu0 0.0
    %1320 = vmatpush1.msra.mxu0 0.0
    %1321 = vmatprep.subr.mxu0 0.0
    %1322 = vmatpush1.msra.mxu0 0.0
    %1323 = vmatprep.subr.mxu0 0.0
    %1324 = vmatpush1.msra.mxu0 0.0
    %1325 = vmatprep.subr.mxu0 0.0
    %1326 = vmatpush1.msra.mxu0 0.0
    %1327 = vmatprep.subr.mxu0 0.0
    %1328 = vmatpush1.msra.mxu0 0.0
    %1329 = vmatprep.subr.mxu0 0.0
    %1330 = vmatpush1.msra.mxu0 0.0
    %1331 = vmatprep.subr.mxu0 0.0
    %1332 = vmatpush1.msra.mxu0 0.0
    %1333 = vmatprep.subr.mxu0 0.0
    %1334 = vmatpush1.msra.mxu0 0.0
    %1335 = vmatprep.subr.mxu0 0.0
    %1336 = vmatpush1.msra.mxu0 0.0
    %1337 = vmatprep.mubr.f32.mxu0 0.0
    %v1338 = vand.u32 %v582, 4294901760
    %v1339 = vsub.f32 %v582, %v1338
    %1340 = vmatmul.mubr.f32.gmra.mrb[0].mxu0 %v1339
    %v1341 = vpop.f32.mrb[0].mxu0
    %v1342 = vadd.f32 %v1260, %v1341
    %v1343 = vpop.f32.mrb[0].mxu0
    %1344 = vmatprep.mubr.f32.mxu0 0.0
    %v1345 = vand.u32 %v585, 4294901760
    %v1346 = vsub.f32 %v585, %v1345
    %1347 = vmatmul.mubr.f32.gmra.mrb[0].mxu0 %v1346
    %v1348 = vpop.f32.mrb[0].mxu0
    %v1349 = vadd.f32 %v1266, %v1348
    %v1350 = vpop.f32.mrb[0].mxu0
    %1351 = vdwg.mxu0
    %1352 = vmatprep.subr.mxu0 0.0
    %v1353 = vand.u32 %v63, 4294901760
    %1354 = vmatpush1.msra.mxu0 %v1353
    %1355 = vmatprep.subr.mxu0 0.0
    %v1356 = vand.u32 %v64, 4294901760
    %1357 = vmatpush1.msra.mxu0 %v1356
    %1358 = vmatprep.subr.mxu0 0.0
    %1359 = vmatpush1.msra.mxu0 0.0
    %1360 = vmatprep.subr.mxu0 0.0
    %1361 = vmatpush1.msra.mxu0 0.0
    %1362 = vmatprep.subr.mxu0 0.0
    %1363 = vmatpush1.msra.mxu0 0.0
    %1364 = vmatprep.subr.mxu0 0.0
    %1365 = vmatpush1.msra.mxu0 0.0
    %1366 = vmatprep.subr.mxu0 0.0
    %1367 = vmatpush1.msra.mxu0 0.0
    %1368 = vmatprep.subr.mxu0 0.0
    %1369 = vmatpush1.msra.mxu0 0.0
    %1370 = vmatprep.subr.mxu0 0.0
    %1371 = vmatpush1.msra.mxu0 0.0
    %1372 = vmatprep.subr.mxu0 0.0
    %1373 = vmatpush1.msra.mxu0 0.0
    %1374 = vmatprep.subr.mxu0 0.0
    %1375 = vmatpush1.msra.mxu0 0.0
    %1376 = vmatprep.subr.mxu0 0.0
    %1377 = vmatpush1.msra.mxu0 0.0
    %1378 = vmatprep.subr.mxu0 0.0
    %1379 = vmatpush1.msra.mxu0 0.0
    %1380 = vmatprep.subr.mxu0 0.0
    %1381 = vmatpush1.msra.mxu0 0.0
    %1382 = vmatprep.subr.mxu0 0.0
    %1383 = vmatpush1.msra.mxu0 0.0
    %1384 = vmatprep.subr.mxu0 0.0
    %1385 = vmatpush1.msra.mxu0 0.0
    %1386 = vmatprep.subr.mxu0 0.0
    %1387 = vmatpush1.msra.mxu0 0.0
    %1388 = vmatprep.subr.mxu0 0.0
    %1389 = vmatpush1.msra.mxu0 0.0
    %1390 = vmatprep.subr.mxu0 0.0
    %1391 = vmatpush1.msra.mxu0 0.0
    %1392 = vmatprep.subr.mxu0 0.0
    %1393 = vmatpush1.msra.mxu0 0.0
    %1394 = vmatprep.subr.mxu0 0.0
    %1395 = vmatpush1.msra.mxu0 0.0
    %1396 = vmatprep.subr.mxu0 0.0
    %1397 = vmatpush1.msra.mxu0 0.0
    %1398 = vmatprep.subr.mxu0 0.0
    %1399 = vmatpush1.msra.mxu0 0.0
    %1400 = vmatprep.subr.mxu0 0.0
    %1401 = vmatpush1.msra.mxu0 0.0
    %1402 = vmatprep.subr.mxu0 0.0
    %1403 = vmatpush1.msra.mxu0 0.0
    %1404 = vmatprep.subr.mxu0 0.0
    %1405 = vmatpush1.msra.mxu0 0.0
    %1406 = vmatprep.subr.mxu0 0.0
    %1407 = vmatpush1.msra.mxu0 0.0
    %1408 = vmatprep.subr.mxu0 0.0
    %1409 = vmatpush1.msra.mxu0 0.0
    %1410 = vmatprep.subr.mxu0 0.0
    %1411 = vmatpush1.msra.mxu0 0.0
    %1412 = vmatprep.subr.mxu0 0.0
    %1413 = vmatpush1.msra.mxu0 0.0
    %1414 = vmatprep.subr.mxu0 0.0
    %1415 = vmatpush1.msra.mxu0 0.0
    %1416 = vmatprep.subr.mxu0 0.0
    %1417 = vmatpush1.msra.mxu0 0.0
    %1418 = vmatprep.mubr.f32.mxu0 0.0
    %v1419 = vand.u32 %v582, 4294901760
    %v1420 = vsub.f32 %v582, %v1419
    %v1421 = vand.u32 %v1420, 4294901760
    %1422 = vmatmul.mubr.f32.gmra.mrb[0].mxu0 %v1421
    %v1423 = vpop.f32.mrb[0].mxu0
    %v1424 = vadd.f32 %v1342, %v1423
    %v1425 = vpop.f32.mrb[0].mxu0
    %1426 = vmatprep.mubr.f32.mxu0 0.0
    %v1427 = vand.u32 %v585, 4294901760
    %v1428 = vsub.f32 %v585, %v1427
    %v1429 = vand.u32 %v1428, 4294901760
    %1430 = vmatmul.mubr.f32.gmra.mrb[0].mxu0 %v1429
    %v1431 = vpop.f32.mrb[0].mxu0
    %v1432 = vadd.f32 %v1349, %v1431
    %v1433 = vpop.f32.mrb[0].mxu0
    %1434 = vdwg.mxu0
    %1435 = vmatprep.subr.mxu0 0.0
    %v1436 = vand.u32 %v63, 4294901760
    %v1437 = vsub.f32 %v63, %v1436
    %v1438 = vand.u32 %v1437, 4294901760
    %1439 = vmatpush1.msra.mxu0 %v1438
    %1440 = vmatprep.subr.mxu0 0.0
    %v1441 = vand.u32 %v64, 4294901760
    %v1442 = vsub.f32 %v64, %v1441
    %v1443 = vand.u32 %v1442, 4294901760
    %1444 = vmatpush1.msra.mxu0 %v1443
    %1445 = vmatprep.subr.mxu0 0.0
    %1446 = vmatpush1.msra.mxu0 0.0
    %1447 = vmatprep.subr.mxu0 0.0
    %1448 = vmatpush1.msra.mxu0 0.0
    %1449 = vmatprep.subr.mxu0 0.0
    %1450 = vmatpush1.msra.mxu0 0.0
    %1451 = vmatprep.subr.mxu0 0.0
    %1452 = vmatpush1.msra.mxu0 0.0
    %1453 = vmatprep.subr.mxu0 0.0
    %1454 = vmatpush1.msra.mxu0 0.0
    %1455 = vmatprep.subr.mxu0 0.0
    %1456 = vmatpush1.msra.mxu0 0.0
    %1457 = vmatprep.subr.mxu0 0.0
    %1458 = vmatpush1.msra.mxu0 0.0
    %1459 = vmatprep.subr.mxu0 0.0
    %1460 = vmatpush1.msra.mxu0 0.0
    %1461 = vmatprep.subr.mxu0 0.0
    %1462 = vmatpush1.msra.mxu0 0.0
    %1463 = vmatprep.subr.mxu0 0.0
    %1464 = vmatpush1.msra.mxu0 0.0
    %1465 = vmatprep.subr.mxu0 0.0
    %1466 = vmatpush1.msra.mxu0 0.0
    %1467 = vmatprep.subr.mxu0 0.0
    %1468 = vmatpush1.msra.mxu0 0.0
    %1469 = vmatprep.subr.mxu0 0.0
    %1470 = vmatpush1.msra.mxu0 0.0
    %1471 = vmatprep.subr.mxu0 0.0
    %1472 = vmatpush1.msra.mxu0 0.0
    %1473 = vmatprep.subr.mxu0 0.0
    %1474 = vmatpush1.msra.mxu0 0.0
    %1475 = vmatprep.subr.mxu0 0.0
    %1476 = vmatpush1.msra.mxu0 0.0
    %1477 = vmatprep.subr.mxu0 0.0
    %1478 = vmatpush1.msra.mxu0 0.0
    %1479 = vmatprep.subr.mxu0 0.0
    %1480 = vmatpush1.msra.mxu0 0.0
    %1481 = vmatprep.subr.mxu0 0.0
    %1482 = vmatpush1.msra.mxu0 0.0
    %1483 = vmatprep.subr.mxu0 0.0
    %1484 = vmatpush1.msra.mxu0 0.0
    %1485 = vmatprep.subr.mxu0 0.0
    %1486 = vmatpush1.msra.mxu0 0.0
    %1487 = vmatprep.subr.mxu0 0.0
    %1488 = vmatpush1.msra.mxu0 0.0
    %1489 = vmatprep.subr.mxu0 0.0
    %1490 = vmatpush1.msra.mxu0 0.0
    %1491 = vmatprep.subr.mxu0 0.0
    %1492 = vmatpush1.msra.mxu0 0.0
    %1493 = vmatprep.subr.mxu0 0.0
    %1494 = vmatpush1.msra.mxu0 0.0
    %1495 = vmatprep.subr.mxu0 0.0
    %1496 = vmatpush1.msra.mxu0 0.0
    %1497 = vmatprep.subr.mxu0 0.0
    %1498 = vmatpush1.msra.mxu0 0.0
    %1499 = vmatprep.subr.mxu0 0.0
    %1500 = vmatpush1.msra.mxu0 0.0
    %1501 = vmatprep.subr.mxu0 0.0
    %1502 = vmatpush1.msra.mxu0 0.0
    %1503 = vmatprep.subr.mxu0 0.0
    %1504 = vmatpush1.msra.mxu0 0.0
    %1505 = vmatprep.mubr.f32.mxu0 0.0
    %v1506 = vand.u32 %v582, 4294901760
    %1507 = vmatmul.mubr.f32.gmra.mrb[0].mxu0 %v1506
    %v1508 = vpop.f32.mrb[0].mxu0
    %v1509 = vadd.f32 %v1424, %v1508
    %v1510 = vpop.f32.mrb[0].mxu0
    %1511 = vmatprep.mubr.f32.mxu0 0.0
    %v1512 = vand.u32 %v585, 4294901760
    %1513 = vmatmul.mubr.f32.gmra.mrb[0].mxu0 %v1512
    %v1514 = vpop.f32.mrb[0].mxu0
    %v1515 = vadd.f32 %v1432, %v1514
    %v1516 = vpop.f32.mrb[0].mxu0
    %1517 = vdwg.mxu0
    %1518 = vmatprep.subr.mxu0 0.0
    %v1519 = vand.u32 %v63, 4294901760
    %1520 = vmatpush1.msra.mxu0 %v1519
    %1521 = vmatprep.subr.mxu0 0.0
    %v1522 = vand.u32 %v64, 4294901760
    %1523 = vmatpush1.msra.mxu0 %v1522
    %1524 = vmatprep.subr.mxu0 0.0
    %1525 = vmatpush1.msra.mxu0 0.0
    %1526 = vmatprep.subr.mxu0 0.0
    %1527 = vmatpush1.msra.mxu0 0.0
    %1528 = vmatprep.subr.mxu0 0.0
    %1529 = vmatpush1.msra.mxu0 0.0
    %1530 = vmatprep.subr.mxu0 0.0
    %1531 = vmatpush1.msra.mxu0 0.0
    %1532 = vmatprep.subr.mxu0 0.0
    %1533 = vmatpush1.msra.mxu0 0.0
    %1534 = vmatprep.subr.mxu0 0.0
    %1535 = vmatpush1.msra.mxu0 0.0
    %1536 = vmatprep.subr.mxu0 0.0
    %1537 = vmatpush1.msra.mxu0 0.0
    %1538 = vmatprep.subr.mxu0 0.0
    %1539 = vmatpush1.msra.mxu0 0.0
    %1540 = vmatprep.subr.mxu0 0.0
    %1541 = vmatpush1.msra.mxu0 0.0
    %1542 = vmatprep.subr.mxu0 0.0
    %1543 = vmatpush1.msra.mxu0 0.0
    %1544 = vmatprep.subr.mxu0 0.0
    %1545 = vmatpush1.msra.mxu0 0.0
    %1546 = vmatprep.subr.mxu0 0.0
    %1547 = vmatpush1.msra.mxu0 0.0
    %1548 = vmatprep.subr.mxu0 0.0
    %1549 = vmatpush1.msra.mxu0 0.0
    %1550 = vmatprep.subr.mxu0 0.0
    %1551 = vmatpush1.msra.mxu0 0.0
    %1552 = vmatprep.subr.mxu0 0.0
    %1553 = vmatpush1.msra.mxu0 0.0
    %1554 = vmatprep.subr.mxu0 0.0
    %1555 = vmatpush1.msra.mxu0 0.0
    %1556 = vmatprep.subr.mxu0 0.0
    %1557 = vmatpush1.msra.mxu0 0.0
    %1558 = vmatprep.subr.mxu0 0.0
    %1559 = vmatpush1.msra.mxu0 0.0
    %1560 = vmatprep.subr.mxu0 0.0
    %1561 = vmatpush1.msra.mxu0 0.0
    %1562 = vmatprep.subr.mxu0 0.0
    %1563 = vmatpush1.msra.mxu0 0.0
    %1564 = vmatprep.subr.mxu0 0.0
    %1565 = vmatpush1.msra.mxu0 0.0
    %1566 = vmatprep.subr.mxu0 0.0
    %1567 = vmatpush1.msra.mxu0 0.0
    %1568 = vmatprep.subr.mxu0 0.0
    %1569 = vmatpush1.msra.mxu0 0.0
    %1570 = vmatprep.subr.mxu0 0.0
    %1571 = vmatpush1.msra.mxu0 0.0
    %1572 = vmatprep.subr.mxu0 0.0
    %1573 = vmatpush1.msra.mxu0 0.0
    %1574 = vmatprep.subr.mxu0 0.0
    %1575 = vmatpush1.msra.mxu0 0.0
    %1576 = vmatprep.subr.mxu0 0.0
    %1577 = vmatpush1.msra.mxu0 0.0
    %1578 = vmatprep.subr.mxu0 0.0
    %1579 = vmatpush1.msra.mxu0 0.0
    %1580 = vmatprep.subr.mxu0 0.0
    %1581 = vmatpush1.msra.mxu0 0.0
    %1582 = vmatprep.subr.mxu0 0.0
    %1583 = vmatpush1.msra.mxu0 0.0
    %1584 = vmatprep.mubr.f32.mxu0 0.0
    %v1585 = vand.u32 %v582, 4294901760
    %1586 = vmatmul.mubr.f32.gmra.mrb[0].mxu0 %v1585
    %v1587 = vpop.f32.mrb[0].mxu0
    %v1588 = vadd.f32 %v1509, %v1587
    %v1589 = vpop.f32.mrb[0].mxu0
    %1590 = vmatprep.mubr.f32.mxu0 0.0
    %v1591 = vand.u32 %v585, 4294901760
    %1592 = vmatmul.mubr.f32.gmra.mrb[0].mxu0 %v1591
    %v1593 = vpop.f32.mrb[0].mxu0
    %v1594 = vadd.f32 %v1515, %v1593
    %v1595 = vpop.f32.mrb[0].mxu0
    %1596 = vdwg.mxu0
    %1597 = vst.msk [vmem:[#allocation2 + $0x18] sm:$0xff] %vm67, %v1588
    %1598 = vst.msk [vmem:[%s69 + $0x18] sm:$0xff] %vm67, %v1594
    %v1600 = vsel %vm67, %v1588, 0
    %v1603 = vsel %vm67, %v1594, 0
    %1605 = vmatprep.subr.mxu0 0.0
    %v1606 = vand.u32 %v63, 4294901760
    %1607 = vmatpush1.msra.mxu0 %v1606
    %1608 = vmatprep.subr.mxu0 0.0
    %v1609 = vand.u32 %v64, 4294901760
    %1610 = vmatpush1.msra.mxu0 %v1609
    %1611 = vmatprep.subr.mxu0 0.0
    %1612 = vmatpush1.msra.mxu0 0.0
    %1613 = vmatprep.subr.mxu0 0.0
    %1614 = vmatpush1.msra.mxu0 0.0
    %1615 = vmatprep.subr.mxu0 0.0
    %1616 = vmatpush1.msra.mxu0 0.0
    %1617 = vmatprep.subr.mxu0 0.0
    %1618 = vmatpush1.msra.mxu0 0.0
    %1619 = vmatprep.subr.mxu0 0.0
    %1620 = vmatpush1.msra.mxu0 0.0
    %1621 = vmatprep.subr.mxu0 0.0
    %1622 = vmatpush1.msra.mxu0 0.0
    %1623 = vmatprep.subr.mxu0 0.0
    %1624 = vmatpush1.msra.mxu0 0.0
    %1625 = vmatprep.subr.mxu0 0.0
    %1626 = vmatpush1.msra.mxu0 0.0
    %1627 = vmatprep.subr.mxu0 0.0
    %1628 = vmatpush1.msra.mxu0 0.0
    %1629 = vmatprep.subr.mxu0 0.0
    %1630 = vmatpush1.msra.mxu0 0.0
    %1631 = vmatprep.subr.mxu0 0.0
    %1632 = vmatpush1.msra.mxu0 0.0
    %1633 = vmatprep.subr.mxu0 0.0
    %1634 = vmatpush1.msra.mxu0 0.0
    %1635 = vmatprep.subr.mxu0 0.0
    %1636 = vmatpush1.msra.mxu0 0.0
    %1637 = vmatprep.subr.mxu0 0.0
    %1638 = vmatpush1.msra.mxu0 0.0
    %1639 = vmatprep.subr.mxu0 0.0
    %1640 = vmatpush1.msra.mxu0 0.0
    %1641 = vmatprep.subr.mxu0 0.0
    %1642 = vmatpush1.msra.mxu0 0.0
    %1643 = vmatprep.subr.mxu0 0.0
    %1644 = vmatpush1.msra.mxu0 0.0
    %1645 = vmatprep.subr.mxu0 0.0
    %1646 = vmatpush1.msra.mxu0 0.0
    %1647 = vmatprep.subr.mxu0 0.0
    %1648 = vmatpush1.msra.mxu0 0.0
    %1649 = vmatprep.subr.mxu0 0.0
    %1650 = vmatpush1.msra.mxu0 0.0
    %1651 = vmatprep.subr.mxu0 0.0
    %1652 = vmatpush1.msra.mxu0 0.0
    %1653 = vmatprep.subr.mxu0 0.0
    %1654 = vmatpush1.msra.mxu0 0.0
    %1655 = vmatprep.subr.mxu0 0.0
    %1656 = vmatpush1.msra.mxu0 0.0
    %1657 = vmatprep.subr.mxu0 0.0
    %1658 = vmatpush1.msra.mxu0 0.0
    %1659 = vmatprep.subr.mxu0 0.0
    %1660 = vmatpush1.msra.mxu0 0.0
    %1661 = vmatprep.subr.mxu0 0.0
    %1662 = vmatpush1.msra.mxu0 0.0
    %1663 = vmatprep.subr.mxu0 0.0
    %1664 = vmatpush1.msra.mxu0 0.0
    %1665 = vmatprep.subr.mxu0 0.0
    %1666 = vmatpush1.msra.mxu0 0.0
    %1667 = vmatprep.subr.mxu0 0.0
    %1668 = vmatpush1.msra.mxu0 0.0
    %1669 = vmatprep.subr.mxu0 0.0
    %1670 = vmatpush1.msra.mxu0 0.0
    %1671 = vmatprep.mubr.f32.mxu0 0.0
    %v1672 = vand.u32 %v1600, 4294901760
    %v1673 = vsub.f32 %v1600, %v1672
    %v1674 = vand.u32 %v1673, 4294901760
    %v1675 = vsub.f32 %v1673, %v1674
    %v1676 = vand.u32 %v1675, 4294901760
    %1677 = vmatmul.mubr.f32.gmra.mrb[0].mxu0 %v1676
    %v1678 = vpop.f32.mrb[0].mxu0
    %v1679 = vadd.f32 0.0, %v1678
    %v1680 = vpop.f32.mrb[0].mxu0
    %1681 = vmatprep.mubr.f32.mxu0 0.0
    %v1682 = vand.u32 %v1603, 4294901760
    %v1683 = vsub.f32 %v1603, %v1682
    %v1684 = vand.u32 %v1683, 4294901760
    %v1685 = vsub.f32 %v1683, %v1684
    %v1686 = vand.u32 %v1685, 4294901760
    %1687 = vmatmul.mubr.f32.gmra.mrb[0].mxu0 %v1686
    %v1688 = vpop.f32.mrb[0].mxu0
    %v1689 = vadd.f32 0.0, %v1688
    %v1690 = vpop.f32.mrb[0].mxu0
    %1691 = vdwg.mxu0
    %1692 = vmatprep.subr.mxu0 0.0
    %v1693 = vand.u32 %v63, 4294901760
    %v1694 = vsub.f32 %v63, %v1693
    %v1695 = vand.u32 %v1694, 4294901760
    %v1696 = vsub.f32 %v1694, %v1695
    %v1697 = vand.u32 %v1696, 4294901760
    %1698 = vmatpush1.msra.mxu0 %v1697
    %1699 = vmatprep.subr.mxu0 0.0
    %v1700 = vand.u32 %v64, 4294901760
    %v1701 = vsub.f32 %v64, %v1700
    %v1702 = vand.u32 %v1701, 4294901760
    %v1703 = vsub.f32 %v1701, %v1702
    %v1704 = vand.u32 %v1703, 4294901760
    %1705 = vmatpush1.msra.mxu0 %v1704
    %1706 = vmatprep.subr.mxu0 0.0
    %1707 = vmatpush1.msra.mxu0 0.0
    %1708 = vmatprep.subr.mxu0 0.0
    %1709 = vmatpush1.msra.mxu0 0.0
    %1710 = vmatprep.subr.mxu0 0.0
    %1711 = vmatpush1.msra.mxu0 0.0
    %1712 = vmatprep.subr.mxu0 0.0
    %1713 = vmatpush1.msra.mxu0 0.0
    %1714 = vmatprep.subr.mxu0 0.0
    %1715 = vmatpush1.msra.mxu0 0.0
    %1716 = vmatprep.subr.mxu0 0.0
    %1717 = vmatpush1.msra.mxu0 0.0
    %1718 = vmatprep.subr.mxu0 0.0
    %1719 = vmatpush1.msra.mxu0 0.0
    %1720 = vmatprep.subr.mxu0 0.0
    %1721 = vmatpush1.msra.mxu0 0.0
    %1722 = vmatprep.subr.mxu0 0.0
    %1723 = vmatpush1.msra.mxu0 0.0
    %1724 = vmatprep.subr.mxu0 0.0
    %1725 = vmatpush1.msra.mxu0 0.0
    %1726 = vmatprep.subr.mxu0 0.0
    %1727 = vmatpush1.msra.mxu0 0.0
    %1728 = vmatprep.subr.mxu0 0.0
    %1729 = vmatpush1.msra.mxu0 0.0
    %1730 = vmatprep.subr.mxu0 0.0
    %1731 = vmatpush1.msra.mxu0 0.0
    %1732 = vmatprep.subr.mxu0 0.0
    %1733 = vmatpush1.msra.mxu0 0.0
    %1734 = vmatprep.subr.mxu0 0.0
    %1735 = vmatpush1.msra.mxu0 0.0
    %1736 = vmatprep.subr.mxu0 0.0
    %1737 = vmatpush1.msra.mxu0 0.0
    %1738 = vmatprep.subr.mxu0 0.0
    %1739 = vmatpush1.msra.mxu0 0.0
    %1740 = vmatprep.subr.mxu0 0.0
    %1741 = vmatpush1.msra.mxu0 0.0
    %1742 = vmatprep.subr.mxu0 0.0
    %1743 = vmatpush1.msra.mxu0 0.0
    %1744 = vmatprep.subr.mxu0 0.0
    %1745 = vmatpush1.msra.mxu0 0.0
    %1746 = vmatprep.subr.mxu0 0.0
    %1747 = vmatpush1.msra.mxu0 0.0
    %1748 = vmatprep.subr.mxu0 0.0
    %1749 = vmatpush1.msra.mxu0 0.0
    %1750 = vmatprep.subr.mxu0 0.0
    %1751 = vmatpush1.msra.mxu0 0.0
    %1752 = vmatprep.subr.mxu0 0.0
    %1753 = vmatpush1.msra.mxu0 0.0
    %1754 = vmatprep.subr.mxu0 0.0
    %1755 = vmatpush1.msra.mxu0 0.0
    %1756 = vmatprep.subr.mxu0 0.0
    %1757 = vmatpush1.msra.mxu0 0.0
    %1758 = vmatprep.subr.mxu0 0.0
    %1759 = vmatpush1.msra.mxu0 0.0
    %1760 = vmatprep.subr.mxu0 0.0
    %1761 = vmatpush1.msra.mxu0 0.0
    %1762 = vmatprep.subr.mxu0 0.0
    %1763 = vmatpush1.msra.mxu0 0.0
    %1764 = vmatprep.subr.mxu0 0.0
    %1765 = vmatpush1.msra.mxu0 0.0
    %1766 = vmatprep.mubr.f32.mxu0 0.0
    %v1767 = vand.u32 %v1600, 4294901760
    %1768 = vmatmul.mubr.f32.gmra.mrb[0].mxu0 %v1767
    %v1769 = vpop.f32.mrb[0].mxu0
    %v1770 = vadd.f32 %v1679, %v1769
    %v1771 = vpop.f32.mrb[0].mxu0
    %1772 = vmatprep.mubr.f32.mxu0 0.0
    %v1773 = vand.u32 %v1603, 4294901760
    %1774 = vmatmul.mubr.f32.gmra.mrb[0].mxu0 %v1773
    %v1775 = vpop.f32.mrb[0].mxu0
    %v1776 = vadd.f32 %v1689, %v1775
    %v1777 = vpop.f32.mrb[0].mxu0
    %1778 = vdwg.mxu0
    %1779 = vmatprep.subr.mxu0 0.0
    %v1780 = vand.u32 %v63, 4294901760
    %v1781 = vsub.f32 %v63, %v1780
    %1782 = vmatpush1.msra.mxu0 %v1781
    %1783 = vmatprep.subr.mxu0 0.0
    %v1784 = vand.u32 %v64, 4294901760
    %v1785 = vsub.f32 %v64, %v1784
    %1786 = vmatpush1.msra.mxu0 %v1785
    %1787 = vmatprep.subr.mxu0 0.0
    %1788 = vmatpush1.msra.mxu0 0.0
    %1789 = vmatprep.subr.mxu0 0.0
    %1790 = vmatpush1.msra.mxu0 0.0
    %1791 = vmatprep.subr.mxu0 0.0
    %1792 = vmatpush1.msra.mxu0 0.0
    %1793 = vmatprep.subr.mxu0 0.0
    %1794 = vmatpush1.msra.mxu0 0.0
    %1795 = vmatprep.subr.mxu0 0.0
    %1796 = vmatpush1.msra.mxu0 0.0
    %1797 = vmatprep.subr.mxu0 0.0
    %1798 = vmatpush1.msra.mxu0 0.0
    %1799 = vmatprep.subr.mxu0 0.0
    %1800 = vmatpush1.msra.mxu0 0.0
    %1801 = vmatprep.subr.mxu0 0.0
    %1802 = vmatpush1.msra.mxu0 0.0
    %1803 = vmatprep.subr.mxu0 0.0
    %1804 = vmatpush1.msra.mxu0 0.0
    %1805 = vmatprep.subr.mxu0 0.0
    %1806 = vmatpush1.msra.mxu0 0.0
    %1807 = vmatprep.subr.mxu0 0.0
    %1808 = vmatpush1.msra.mxu0 0.0
    %1809 = vmatprep.subr.mxu0 0.0
    %1810 = vmatpush1.msra.mxu0 0.0
    %1811 = vmatprep.subr.mxu0 0.0
    %1812 = vmatpush1.msra.mxu0 0.0
    %1813 = vmatprep.subr.mxu0 0.0
    %1814 = vmatpush1.msra.mxu0 0.0
    %1815 = vmatprep.subr.mxu0 0.0
    %1816 = vmatpush1.msra.mxu0 0.0
    %1817 = vmatprep.subr.mxu0 0.0
    %1818 = vmatpush1.msra.mxu0 0.0
    %1819 = vmatprep.subr.mxu0 0.0
    %1820 = vmatpush1.msra.mxu0 0.0
    %1821 = vmatprep.subr.mxu0 0.0
    %1822 = vmatpush1.msra.mxu0 0.0
    %1823 = vmatprep.subr.mxu0 0.0
    %1824 = vmatpush1.msra.mxu0 0.0
    %1825 = vmatprep.subr.mxu0 0.0
    %1826 = vmatpush1.msra.mxu0 0.0
    %1827 = vmatprep.subr.mxu0 0.0
    %1828 = vmatpush1.msra.mxu0 0.0
    %1829 = vmatprep.subr.mxu0 0.0
    %1830 = vmatpush1.msra.mxu0 0.0
    %1831 = vmatprep.subr.mxu0 0.0
    %1832 = vmatpush1.msra.mxu0 0.0
    %1833 = vmatprep.subr.mxu0 0.0
    %1834 = vmatpush1.msra.mxu0 0.0
    %1835 = vmatprep.subr.mxu0 0.0
    %1836 = vmatpush1.msra.mxu0 0.0
    %1837 = vmatprep.subr.mxu0 0.0
    %1838 = vmatpush1.msra.mxu0 0.0
    %1839 = vmatprep.subr.mxu0 0.0
    %1840 = vmatpush1.msra.mxu0 0.0
    %1841 = vmatprep.subr.mxu0 0.0
    %1842 = vmatpush1.msra.mxu0 0.0
    %1843 = vmatprep.subr.mxu0 0.0
    %1844 = vmatpush1.msra.mxu0 0.0
    %1845 = vmatprep.subr.mxu0 0.0
    %1846 = vmatpush1.msra.mxu0 0.0
    %1847 = vmatprep.mubr.f32.mxu0 0.0
    %v1848 = vand.u32 %v1600, 4294901760
    %v1849 = vsub.f32 %v1600, %v1848
    %1850 = vmatmul.mubr.f32.gmra.mrb[0].mxu0 %v1849
    %v1851 = vpop.f32.mrb[0].mxu0
    %v1852 = vadd.f32 %v1770, %v1851
    %v1853 = vpop.f32.mrb[0].mxu0
    %1854 = vmatprep.mubr.f32.mxu0 0.0
    %v1855 = vand.u32 %v1603, 4294901760
    %v1856 = vsub.f32 %v1603, %v1855
    %1857 = vmatmul.mubr.f32.gmra.mrb[0].mxu0 %v1856
    %v1858 = vpop.f32.mrb[0].mxu0
    %v1859 = vadd.f32 %v1776, %v1858
    %v1860 = vpop.f32.mrb[0].mxu0
    %1861 = vdwg.mxu0
    %1862 = vmatprep.subr.mxu0 0.0
    %v1863 = vand.u32 %v63, 4294901760
    %1864 = vmatpush1.msra.mxu0 %v1863
    %1865 = vmatprep.subr.mxu0 0.0
    %v1866 = vand.u32 %v64, 4294901760
    %1867 = vmatpush1.msra.mxu0 %v1866
    %1868 = vmatprep.subr.mxu0 0.0
    %1869 = vmatpush1.msra.mxu0 0.0
    %1870 = vmatprep.subr.mxu0 0.0
    %1871 = vmatpush1.msra.mxu0 0.0
    %1872 = vmatprep.subr.mxu0 0.0
    %1873 = vmatpush1.msra.mxu0 0.0
    %1874 = vmatprep.subr.mxu0 0.0
    %1875 = vmatpush1.msra.mxu0 0.0
    %1876 = vmatprep.subr.mxu0 0.0
    %1877 = vmatpush1.msra.mxu0 0.0
    %1878 = vmatprep.subr.mxu0 0.0
    %1879 = vmatpush1.msra.mxu0 0.0
    %1880 = vmatprep.subr.mxu0 0.0
    %1881 = vmatpush1.msra.mxu0 0.0
    %1882 = vmatprep.subr.mxu0 0.0
    %1883 = vmatpush1.msra.mxu0 0.0
    %1884 = vmatprep.subr.mxu0 0.0
    %1885 = vmatpush1.msra.mxu0 0.0
    %1886 = vmatprep.subr.mxu0 0.0
    %1887 = vmatpush1.msra.mxu0 0.0
    %1888 = vmatprep.subr.mxu0 0.0
    %1889 = vmatpush1.msra.mxu0 0.0
    %1890 = vmatprep.subr.mxu0 0.0
    %1891 = vmatpush1.msra.mxu0 0.0
    %1892 = vmatprep.subr.mxu0 0.0
    %1893 = vmatpush1.msra.mxu0 0.0
    %1894 = vmatprep.subr.mxu0 0.0
    %1895 = vmatpush1.msra.mxu0 0.0
    %1896 = vmatprep.subr.mxu0 0.0
    %1897 = vmatpush1.msra.mxu0 0.0
    %1898 = vmatprep.subr.mxu0 0.0
    %1899 = vmatpush1.msra.mxu0 0.0
    %1900 = vmatprep.subr.mxu0 0.0
    %1901 = vmatpush1.msra.mxu0 0.0
    %1902 = vmatprep.subr.mxu0 0.0
    %1903 = vmatpush1.msra.mxu0 0.0
    %1904 = vmatprep.subr.mxu0 0.0
    %1905 = vmatpush1.msra.mxu0 0.0
    %1906 = vmatprep.subr.mxu0 0.0
    %1907 = vmatpush1.msra.mxu0 0.0
    %1908 = vmatprep.subr.mxu0 0.0
    %1909 = vmatpush1.msra.mxu0 0.0
    %1910 = vmatprep.subr.mxu0 0.0
    %1911 = vmatpush1.msra.mxu0 0.0
    %1912 = vmatprep.subr.mxu0 0.0
    %1913 = vmatpush1.msra.mxu0 0.0
    %1914 = vmatprep.subr.mxu0 0.0
    %1915 = vmatpush1.msra.mxu0 0.0
    %1916 = vmatprep.subr.mxu0 0.0
    %1917 = vmatpush1.msra.mxu0 0.0
    %1918 = vmatprep.subr.mxu0 0.0
    %1919 = vmatpush1.msra.mxu0 0.0
    %1920 = vmatprep.subr.mxu0 0.0
    %1921 = vmatpush1.msra.mxu0 0.0
    %1922 = vmatprep.subr.mxu0 0.0
    %1923 = vmatpush1.msra.mxu0 0.0
    %1924 = vmatprep.subr.mxu0 0.0
    %1925 = vmatpush1.msra.mxu0 0.0
    %1926 = vmatprep.subr.mxu0 0.0
    %1927 = vmatpush1.msra.mxu0 0.0
    %1928 = vmatprep.mubr.f32.mxu0 0.0
    %v1929 = vand.u32 %v1600, 4294901760
    %v1930 = vsub.f32 %v1600, %v1929
    %v1931 = vand.u32 %v1930, 4294901760
    %1932 = vmatmul.mubr.f32.gmra.mrb[0].mxu0 %v1931
    %v1933 = vpop.f32.mrb[0].mxu0
    %v1934 = vadd.f32 %v1852, %v1933
    %v1935 = vpop.f32.mrb[0].mxu0
    %1936 = vmatprep.mubr.f32.mxu0 0.0
    %v1937 = vand.u32 %v1603, 4294901760
    %v1938 = vsub.f32 %v1603, %v1937
    %v1939 = vand.u32 %v1938, 4294901760
    %1940 = vmatmul.mubr.f32.gmra.mrb[0].mxu0 %v1939
    %v1941 = vpop.f32.mrb[0].mxu0
    %v1942 = vadd.f32 %v1859, %v1941
    %v1943 = vpop.f32.mrb[0].mxu0
    %1944 = vdwg.mxu0
    %1945 = vmatprep.subr.mxu0 0.0
    %v1946 = vand.u32 %v63, 4294901760
    %v1947 = vsub.f32 %v63, %v1946
    %v1948 = vand.u32 %v1947, 4294901760
    %1949 = vmatpush1.msra.mxu0 %v1948
    %1950 = vmatprep.subr.mxu0 0.0
    %v1951 = vand.u32 %v64, 4294901760
    %v1952 = vsub.f32 %v64, %v1951
    %v1953 = vand.u32 %v1952, 4294901760
    %1954 = vmatpush1.msra.mxu0 %v1953
    %1955 = vmatprep.subr.mxu0 0.0
    %1956 = vmatpush1.msra.mxu0 0.0
    %1957 = vmatprep.subr.mxu0 0.0
    %1958 = vmatpush1.msra.mxu0 0.0
    %1959 = vmatprep.subr.mxu0 0.0
    %1960 = vmatpush1.msra.mxu0 0.0
    %1961 = vmatprep.subr.mxu0 0.0
    %1962 = vmatpush1.msra.mxu0 0.0
    %1963 = vmatprep.subr.mxu0 0.0
    %1964 = vmatpush1.msra.mxu0 0.0
    %1965 = vmatprep.subr.mxu0 0.0
    %1966 = vmatpush1.msra.mxu0 0.0
    %1967 = vmatprep.subr.mxu0 0.0
    %1968 = vmatpush1.msra.mxu0 0.0
    %1969 = vmatprep.subr.mxu0 0.0
    %1970 = vmatpush1.msra.mxu0 0.0
    %1971 = vmatprep.subr.mxu0 0.0
    %1972 = vmatpush1.msra.mxu0 0.0
    %1973 = vmatprep.subr.mxu0 0.0
    %1974 = vmatpush1.msra.mxu0 0.0
    %1975 = vmatprep.subr.mxu0 0.0
    %1976 = vmatpush1.msra.mxu0 0.0
    %1977 = vmatprep.subr.mxu0 0.0
    %1978 = vmatpush1.msra.mxu0 0.0
    %1979 = vmatprep.subr.mxu0 0.0
    %1980 = vmatpush1.msra.mxu0 0.0
    %1981 = vmatprep.subr.mxu0 0.0
    %1982 = vmatpush1.msra.mxu0 0.0
    %1983 = vmatprep.subr.mxu0 0.0
    %1984 = vmatpush1.msra.mxu0 0.0
    %1985 = vmatprep.subr.mxu0 0.0
    %1986 = vmatpush1.msra.mxu0 0.0
    %1987 = vmatprep.subr.mxu0 0.0
    %1988 = vmatpush1.msra.mxu0 0.0
    %1989 = vmatprep.subr.mxu0 0.0
    %1990 = vmatpush1.msra.mxu0 0.0
    %1991 = vmatprep.subr.mxu0 0.0
    %1992 = vmatpush1.msra.mxu0 0.0
    %1993 = vmatprep.subr.mxu0 0.0
    %1994 = vmatpush1.msra.mxu0 0.0
    %1995 = vmatprep.subr.mxu0 0.0
    %1996 = vmatpush1.msra.mxu0 0.0
    %1997 = vmatprep.subr.mxu0 0.0
    %1998 = vmatpush1.msra.mxu0 0.0
    %1999 = vmatprep.subr.mxu0 0.0
    %2000 = vmatpush1.msra.mxu0 0.0
    %2001 = vmatprep.subr.mxu0 0.0
    %2002 = vmatpush1.msra.mxu0 0.0
    %2003 = vmatprep.subr.mxu0 0.0
    %2004 = vmatpush1.msra.mxu0 0.0
    %2005 = vmatprep.subr.mxu0 0.0
    %2006 = vmatpush1.msra.mxu0 0.0
    %2007 = vmatprep.subr.mxu0 0.0
    %2008 = vmatpush1.msra.mxu0 0.0
    %2009 = vmatprep.subr.mxu0 0.0
    %2010 = vmatpush1.msra.mxu0 0.0
    %2011 = vmatprep.subr.mxu0 0.0
    %2012 = vmatpush1.msra.mxu0 0.0
    %2013 = vmatprep.subr.mxu0 0.0
    %2014 = vmatpush1.msra.mxu0 0.0
    %2015 = vmatprep.mubr.f32.mxu0 0.0
    %v2016 = vand.u32 %v1600, 4294901760
    %2017 = vmatmul.mubr.f32.gmra.mrb[0].mxu0 %v2016
    %v2018 = vpop.f32.mrb[0].mxu0
    %v2019 = vadd.f32 %v1934, %v2018
    %v2020 = vpop.f32.mrb[0].mxu0
    %2021 = vmatprep.mubr.f32.mxu0 0.0
    %v2022 = vand.u32 %v1603, 4294901760
    %2023 = vmatmul.mubr.f32.gmra.mrb[0].mxu0 %v2022
    %v2024 = vpop.f32.mrb[0].mxu0
    %v2025 = vadd.f32 %v1942, %v2024
    %v2026 = vpop.f32.mrb[0].mxu0
    %2027 = vdwg.mxu0
    %2028 = vmatprep.subr.mxu0 0.0
    %v2029 = vand.u32 %v63, 4294901760
    %2030 = vmatpush1.msra.mxu0 %v2029
    %2031 = vmatprep.subr.mxu0 0.0
    %v2032 = vand.u32 %v64, 4294901760
    %2033 = vmatpush1.msra.mxu0 %v2032
    %2034 = vmatprep.subr.mxu0 0.0
    %2035 = vmatpush1.msra.mxu0 0.0
    %2036 = vmatprep.subr.mxu0 0.0
    %2037 = vmatpush1.msra.mxu0 0.0
    %2038 = vmatprep.subr.mxu0 0.0
    %2039 = vmatpush1.msra.mxu0 0.0
    %2040 = vmatprep.subr.mxu0 0.0
    %2041 = vmatpush1.msra.mxu0 0.0
    %2042 = vmatprep.subr.mxu0 0.0
    %2043 = vmatpush1.msra.mxu0 0.0
    %2044 = vmatprep.subr.mxu0 0.0
    %2045 = vmatpush1.msra.mxu0 0.0
    %2046 = vmatprep.subr.mxu0 0.0
    %2047 = vmatpush1.msra.mxu0 0.0
    %2048 = vmatprep.subr.mxu0 0.0
    %2049 = vmatpush1.msra.mxu0 0.0
    %2050 = vmatprep.subr.mxu0 0.0
    %2051 = vmatpush1.msra.mxu0 0.0
    %2052 = vmatprep.subr.mxu0 0.0
    %2053 = vmatpush1.msra.mxu0 0.0
    %2054 = vmatprep.subr.mxu0 0.0
    %2055 = vmatpush1.msra.mxu0 0.0
    %2056 = vmatprep.subr.mxu0 0.0
    %2057 = vmatpush1.msra.mxu0 0.0
    %2058 = vmatprep.subr.mxu0 0.0
    %2059 = vmatpush1.msra.mxu0 0.0
    %2060 = vmatprep.subr.mxu0 0.0
    %2061 = vmatpush1.msra.mxu0 0.0
    %2062 = vmatprep.subr.mxu0 0.0
    %2063 = vmatpush1.msra.mxu0 0.0
    %2064 = vmatprep.subr.mxu0 0.0
    %2065 = vmatpush1.msra.mxu0 0.0
    %2066 = vmatprep.subr.mxu0 0.0
    %2067 = vmatpush1.msra.mxu0 0.0
    %2068 = vmatprep.subr.mxu0 0.0
    %2069 = vmatpush1.msra.mxu0 0.0
    %2070 = vmatprep.subr.mxu0 0.0
    %2071 = vmatpush1.msra.mxu0 0.0
    %2072 = vmatprep.subr.mxu0 0.0
    %2073 = vmatpush1.msra.mxu0 0.0
    %2074 = vmatprep.subr.mxu0 0.0
    %2075 = vmatpush1.msra.mxu0 0.0
    %2076 = vmatprep.subr.mxu0 0.0
    %2077 = vmatpush1.msra.mxu0 0.0
    %2078 = vmatprep.subr.mxu0 0.0
    %2079 = vmatpush1.msra.mxu0 0.0
    %2080 = vmatprep.subr.mxu0 0.0
    %2081 = vmatpush1.msra.mxu0 0.0
    %2082 = vmatprep.subr.mxu0 0.0
    %2083 = vmatpush1.msra.mxu0 0.0
    %2084 = vmatprep.subr.mxu0 0.0
    %2085 = vmatpush1.msra.mxu0 0.0
    %2086 = vmatprep.subr.mxu0 0.0
    %2087 = vmatpush1.msra.mxu0 0.0
    %2088 = vmatprep.subr.mxu0 0.0
    %2089 = vmatpush1.msra.mxu0 0.0
    %2090 = vmatprep.subr.mxu0 0.0
    %2091 = vmatpush1.msra.mxu0 0.0
    %2092 = vmatprep.subr.mxu0 0.0
    %2093 = vmatpush1.msra.mxu0 0.0
    %2094 = vmatprep.mubr.f32.mxu0 0.0
    %v2095 = vand.u32 %v1600, 4294901760
    %2096 = vmatmul.mubr.f32.gmra.mrb[0].mxu0 %v2095
    %v2097 = vpop.f32.mrb[0].mxu0
    %v2098 = vadd.f32 %v2019, %v2097
    %v2099 = vpop.f32.mrb[0].mxu0
    %2100 = vmatprep.mubr.f32.mxu0 0.0
    %v2101 = vand.u32 %v1603, 4294901760
    %2102 = vmatmul.mubr.f32.gmra.mrb[0].mxu0 %v2101
    %v2103 = vpop.f32.mrb[0].mxu0
    %v2104 = vadd.f32 %v2025, %v2103
    %v2105 = vpop.f32.mrb[0].mxu0
    %2106 = vdwg.mxu0
    %v2107 = vmul.f32 %v2098, 2.0
    %v2108 = vmul.f32 %v2104, 2.0
    %v2109 = vsub.f32 %v2107, %v570
    %v2110 = vsub.f32 %v2108, %v576
    %2111 = vst.msk [vmem:[#allocation2 + $0x20] sm:$0xff] %vm67, %v2109
    %2112 = vst.msk [vmem:[%s69 + $0x20] sm:$0xff] %vm67, %v2110
    %v2113 = vld [vmem:[%s3] sm:$0xff]
    %v2114 = vld [vmem:[%s3 + $0x8] sm:$0xff]
    %v2115 = vld [vmem:[%s3 + $0x10] sm:$0xff]
    %v2116 = vld [vmem:[%s3 + $0x18] sm:$0xff]
    %v2117 = vld [vmem:[%s4] sm:$0xff]
    %v2118 = vld [vmem:[%s4 + $0x8] sm:$0xff]
    %v2119 = vld [vmem:[%s4 + $0x10] sm:$0xff]
    %v2120 = vld [vmem:[%s4 + $0x18] sm:$0xff]
    %v2121 = vld [vmem:[#allocation2] sm:$0xff]
    %v2122 = vld [vmem:[#allocation2 + $0x8] sm:$0xff]
    %v2123 = vld [vmem:[#allocation2 + $0x10] sm:$0xff]
    %v2124 = vld [vmem:[#allocation2 + $0x18] sm:$0xff]
    %v2125 = vld [vmem:[#allocation2 + $0x20] sm:$0xff]
    %2127 = vset.pattern.permute.xlu0 0
    %2128 = vperm.xlu0 %2127, %v2117
    %v2129 = vpop.permute.xlu0 %2128
    %2132 = vset.pattern.permute.xlu0 0
    %2133 = vperm.xlu0 %2132, %v2118
    %v2134 = vpop.permute.xlu0 %2133
    %2137 = vset.pattern.permute.xlu0 0
    %2138 = vperm.xlu0 %2137, %v2119
    %v2139 = vpop.permute.xlu0 %2138
    %2142 = vset.pattern.permute.xlu0 0
    %2143 = vperm.xlu0 %2142, %v2120
    %v2144 = vpop.permute.xlu0 %2143
    %vm2146 = vcmask 326656
    %v2148 = vsel %vm2146, %v2113, 0
    %v2151 = vsel %vm2146, %v2114, 0
    %v2154 = vsel %vm2146, %v2115, 0
    %v2157 = vsel %vm2146, %v2116, 0
    %2159 = vmatprep.subr.mxu0 0.0
    %v2160 = vand.u32 %v2121, 4294901760
    %2161 = vmatpush1.msra.mxu0 %v2160
    %2162 = vmatprep.subr.mxu0 0.0
    %v2163 = vand.u32 %v2122, 4294901760
    %2164 = vmatpush1.msra.mxu0 %v2163
    %2165 = vmatprep.subr.mxu0 0.0
    %v2166 = vand.u32 %v2123, 4294901760
    %2167 = vmatpush1.msra.mxu0 %v2166
    %2168 = vmatprep.subr.mxu0 0.0
    %v2169 = vand.u32 %v2124, 4294901760
    %2170 = vmatpush1.msra.mxu0 %v2169
    %2171 = vmatprep.subr.mxu0 0.0
    %v2172 = vand.u32 %v2125, 4294901760
    %2173 = vmatpush1.msra.mxu0 %v2172
    %2174 = vmatprep.subr.mxu0 0.0
    %2175 = vmatpush1.msra.mxu0 0.0
    %2176 = vmatprep.subr.mxu0 0.0
    %2177 = vmatpush1.msra.mxu0 0.0
    %2178 = vmatprep.subr.mxu0 0.0
    %2179 = vmatpush1.msra.mxu0 0.0
    %2180 = vmatprep.subr.mxu0 0.0
    %2181 = vmatpush1.msra.mxu0 0.0
    %2182 = vmatprep.subr.mxu0 0.0
    %2183 = vmatpush1.msra.mxu0 0.0
    %2184 = vmatprep.subr.mxu0 0.0
    %2185 = vmatpush1.msra.mxu0 0.0
    %2186 = vmatprep.subr.mxu0 0.0
    %2187 = vmatpush1.msra.mxu0 0.0
    %2188 = vmatprep.subr.mxu0 0.0
    %2189 = vmatpush1.msra.mxu0 0.0
    %2190 = vmatprep.subr.mxu0 0.0
    %2191 = vmatpush1.msra.mxu0 0.0
    %2192 = vmatprep.subr.mxu0 0.0
    %2193 = vmatpush1.msra.mxu0 0.0
    %2194 = vmatprep.subr.mxu0 0.0
    %2195 = vmatpush1.msra.mxu0 0.0
    %2196 = vmatprep.subr.mxu0 0.0
    %2197 = vmatpush1.msra.mxu0 0.0
    %2198 = vmatprep.subr.mxu0 0.0
    %2199 = vmatpush1.msra.mxu0 0.0
    %2200 = vmatprep.subr.mxu0 0.0
    %2201 = vmatpush1.msra.mxu0 0.0
    %2202 = vmatprep.subr.mxu0 0.0
    %2203 = vmatpush1.msra.mxu0 0.0
    %2204 = vmatprep.subr.mxu0 0.0
    %2205 = vmatpush1.msra.mxu0 0.0
    %2206 = vmatprep.subr.mxu0 0.0
    %2207 = vmatpush1.msra.mxu0 0.0
    %2208 = vmatprep.subr.mxu0 0.0
    %2209 = vmatpush1.msra.mxu0 0.0
    %2210 = vmatprep.subr.mxu0 0.0
    %2211 = vmatpush1.msra.mxu0 0.0
    %2212 = vmatprep.subr.mxu0 0.0
    %2213 = vmatpush1.msra.mxu0 0.0
    %2214 = vmatprep.subr.mxu0 0.0
    %2215 = vmatpush1.msra.mxu0 0.0
    %2216 = vmatprep.subr.mxu0 0.0
    %2217 = vmatpush1.msra.mxu0 0.0
    %2218 = vmatprep.subr.mxu0 0.0
    %2219 = vmatpush1.msra.mxu0 0.0
    %2220 = vmatprep.subr.mxu0 0.0
    %2221 = vmatpush1.msra.mxu0 0.0
    %2222 = vmatprep.subr.mxu0 0.0
    %2223 = vmatpush1.msra.mxu0 0.0
    %2224 = vmatprep.subr.mxu0 0.0
    %2225 = vmatpush1.msra.mxu0 0.0
    %2226 = vmatprep.subr.mxu0 0.0
    %2227 = vmatpush1.msra.mxu0 0.0
    %2228 = vmatprep.mubr.f32.mxu0 0.0
    %v2229 = vand.u32 %v2148, 4294901760
    %v2230 = vsub.f32 %v2148, %v2229
    %v2231 = vand.u32 %v2230, 4294901760
    %v2232 = vsub.f32 %v2230, %v2231
    %v2233 = vand.u32 %v2232, 4294901760
    %2234 = vmatmul.mubr.f32.gmra.mrb[0].mxu0 %v2233
    %v2235 = vpop.f32.mrb[0].mxu0
    %v2236 = vadd.f32 %v2129, %v2235
    %v2237 = vpop.f32.mrb[0].mxu0
    %2238 = vmatprep.mubr.f32.mxu0 0.0
    %v2239 = vand.u32 %v2151, 4294901760
    %v2240 = vsub.f32 %v2151, %v2239
    %v2241 = vand.u32 %v2240, 4294901760
    %v2242 = vsub.f32 %v2240, %v2241
    %v2243 = vand.u32 %v2242, 4294901760
    %2244 = vmatmul.mubr.f32.gmra.mrb[0].mxu0 %v2243
    %v2245 = vpop.f32.mrb[0].mxu0
    %v2246 = vadd.f32 %v2134, %v2245
    %v2247 = vpop.f32.mrb[0].mxu0
    %2248 = vmatprep.mubr.f32.mxu0 0.0
    %v2249 = vand.u32 %v2154, 4294901760
    %v2250 = vsub.f32 %v2154, %v2249
    %v2251 = vand.u32 %v2250, 4294901760
    %v2252 = vsub.f32 %v2250, %v2251
    %v2253 = vand.u32 %v2252, 4294901760
    %2254 = vmatmul.mubr.f32.gmra.mrb[0].mxu0 %v2253
    %v2255 = vpop.f32.mrb[0].mxu0
    %v2256 = vadd.f32 %v2139, %v2255
    %v2257 = vpop.f32.mrb[0].mxu0
    %2258 = vmatprep.mubr.f32.mxu0 0.0
    %v2259 = vand.u32 %v2157, 4294901760
    %v2260 = vsub.f32 %v2157, %v2259
    %v2261 = vand.u32 %v2260, 4294901760
    %v2262 = vsub.f32 %v2260, %v2261
    %v2263 = vand.u32 %v2262, 4294901760
    %2264 = vmatmul.mubr.f32.gmra.mrb[0].mxu0 %v2263
    %v2265 = vpop.f32.mrb[0].mxu0
    %v2266 = vadd.f32 %v2144, %v2265
    %v2267 = vpop.f32.mrb[0].mxu0
    %2268 = vdwg.mxu0
    %2269 = vmatprep.subr.mxu0 0.0
    %v2270 = vand.u32 %v2121, 4294901760
    %v2271 = vsub.f32 %v2121, %v2270
    %v2272 = vand.u32 %v2271, 4294901760
    %v2273 = vsub.f32 %v2271, %v2272
    %v2274 = vand.u32 %v2273, 4294901760
    %2275 = vmatpush1.msra.mxu0 %v2274
    %2276 = vmatprep.subr.mxu0 0.0
    %v2277 = vand.u32 %v2122, 4294901760
    %v2278 = vsub.f32 %v2122, %v2277
    %v2279 = vand.u32 %v2278, 4294901760
    %v2280 = vsub.f32 %v2278, %v2279
    %v2281 = vand.u32 %v2280, 4294901760
    %2282 = vmatpush1.msra.mxu0 %v2281
    %2283 = vmatprep.subr.mxu0 0.0
    %v2284 = vand.u32 %v2123, 4294901760
    %v2285 = vsub.f32 %v2123, %v2284
    %v2286 = vand.u32 %v2285, 4294901760
    %v2287 = vsub.f32 %v2285, %v2286
    %v2288 = vand.u32 %v2287, 4294901760
    %2289 = vmatpush1.msra.mxu0 %v2288
    %2290 = vmatprep.subr.mxu0 0.0
    %v2291 = vand.u32 %v2124, 4294901760
    %v2292 = vsub.f32 %v2124, %v2291
    %v2293 = vand.u32 %v2292, 4294901760
    %v2294 = vsub.f32 %v2292, %v2293
    %v2295 = vand.u32 %v2294, 4294901760
    %2296 = vmatpush1.msra.mxu0 %v2295
    %2297 = vmatprep.subr.mxu0 0.0
    %v2298 = vand.u32 %v2125, 4294901760
    %v2299 = vsub.f32 %v2125, %v2298
    %v2300 = vand.u32 %v2299, 4294901760
    %v2301 = vsub.f32 %v2299, %v2300
    %v2302 = vand.u32 %v2301, 4294901760
    %2303 = vmatpush1.msra.mxu0 %v2302
    %2304 = vmatprep.subr.mxu0 0.0
    %2305 = vmatpush1.msra.mxu0 0.0
    %2306 = vmatprep.subr.mxu0 0.0
    %2307 = vmatpush1.msra.mxu0 0.0
    %2308 = vmatprep.subr.mxu0 0.0
    %2309 = vmatpush1.msra.mxu0 0.0
    %2310 = vmatprep.subr.mxu0 0.0
    %2311 = vmatpush1.msra.mxu0 0.0
    %2312 = vmatprep.subr.mxu0 0.0
    %2313 = vmatpush1.msra.mxu0 0.0
    %2314 = vmatprep.subr.mxu0 0.0
    %2315 = vmatpush1.msra.mxu0 0.0
    %2316 = vmatprep.subr.mxu0 0.0
    %2317 = vmatpush1.msra.mxu0 0.0
    %2318 = vmatprep.subr.mxu0 0.0
    %2319 = vmatpush1.msra.mxu0 0.0
    %2320 = vmatprep.subr.mxu0 0.0
    %2321 = vmatpush1.msra.mxu0 0.0
    %2322 = vmatprep.subr.mxu0 0.0
    %2323 = vmatpush1.msra.mxu0 0.0
    %2324 = vmatprep.subr.mxu0 0.0
    %2325 = vmatpush1.msra.mxu0 0.0
    %2326 = vmatprep.subr.mxu0 0.0
    %2327 = vmatpush1.msra.mxu0 0.0
    %2328 = vmatprep.subr.mxu0 0.0
    %2329 = vmatpush1.msra.mxu0 0.0
    %2330 = vmatprep.subr.mxu0 0.0
    %2331 = vmatpush1.msra.mxu0 0.0
    %2332 = vmatprep.subr.mxu0 0.0
    %2333 = vmatpush1.msra.mxu0 0.0
    %2334 = vmatprep.subr.mxu0 0.0
    %2335 = vmatpush1.msra.mxu0 0.0
    %2336 = vmatprep.subr.mxu0 0.0
    %2337 = vmatpush1.msra.mxu0 0.0
    %2338 = vmatprep.subr.mxu0 0.0
    %2339 = vmatpush1.msra.mxu0 0.0
    %2340 = vmatprep.subr.mxu0 0.0
    %2341 = vmatpush1.msra.mxu0 0.0
    %2342 = vmatprep.subr.mxu0 0.0
    %2343 = vmatpush1.msra.mxu0 0.0
    %2344 = vmatprep.subr.mxu0 0.0
    %2345 = vmatpush1.msra.mxu0 0.0
    %2346 = vmatprep.subr.mxu0 0.0
    %2347 = vmatpush1.msra.mxu0 0.0
    %2348 = vmatprep.subr.mxu0 0.0
    %2349 = vmatpush1.msra.mxu0 0.0
    %2350 = vmatprep.subr.mxu0 0.0
    %2351 = vmatpush1.msra.mxu0 0.0
    %2352 = vmatprep.subr.mxu0 0.0
    %2353 = vmatpush1.msra.mxu0 0.0
    %2354 = vmatprep.subr.mxu0 0.0
    %2355 = vmatpush1.msra.mxu0 0.0
    %2356 = vmatprep.subr.mxu0 0.0
    %2357 = vmatpush1.msra.mxu0 0.0
    %2358 = vmatprep.mubr.f32.mxu0 0.0
    %v2359 = vand.u32 %v2148, 4294901760
    %2360 = vmatmul.mubr.f32.gmra.mrb[0].mxu0 %v2359
    %v2361 = vpop.f32.mrb[0].mxu0
    %v2362 = vadd.f32 %v2236, %v2361
    %v2363 = vpop.f32.mrb[0].mxu0
    %2364 = vmatprep.mubr.f32.mxu0 0.0
    %v2365 = vand.u32 %v2151, 4294901760
    %2366 = vmatmul.mubr.f32.gmra.mrb[0].mxu0 %v2365
    %v2367 = vpop.f32.mrb[0].mxu0
    %v2368 = vadd.f32 %v2246, %v2367
    %v2369 = vpop.f32.mrb[0].mxu0
    %2370 = vmatprep.mubr.f32.mxu0 0.0
    %v2371 = vand.u32 %v2154, 4294901760
    %2372 = vmatmul.mubr.f32.gmra.mrb[0].mxu0 %v2371
    %v2373 = vpop.f32.mrb[0].mxu0
    %v2374 = vadd.f32 %v2256, %v2373
    %v2375 = vpop.f32.mrb[0].mxu0
    %2376 = vmatprep.mubr.f32.mxu0 0.0
    %v2377 = vand.u32 %v2157, 4294901760
    %2378 = vmatmul.mubr.f32.gmra.mrb[0].mxu0 %v2377
    %v2379 = vpop.f32.mrb[0].mxu0
    %v2380 = vadd.f32 %v2266, %v2379
    %v2381 = vpop.f32.mrb[0].mxu0
    %2382 = vdwg.mxu0
    %2383 = vmatprep.subr.mxu0 0.0
    %v2384 = vand.u32 %v2121, 4294901760
    %v2385 = vsub.f32 %v2121, %v2384
    %2386 = vmatpush1.msra.mxu0 %v2385
    %2387 = vmatprep.subr.mxu0 0.0
    %v2388 = vand.u32 %v2122, 4294901760
    %v2389 = vsub.f32 %v2122, %v2388
    %2390 = vmatpush1.msra.mxu0 %v2389
    %2391 = vmatprep.subr.mxu0 0.0
    %v2392 = vand.u32 %v2123, 4294901760
    %v2393 = vsub.f32 %v2123, %v2392
    %2394 = vmatpush1.msra.mxu0 %v2393
    %2395 = vmatprep.subr.mxu0 0.0
    %v2396 = vand.u32 %v2124, 4294901760
    %v2397 = vsub.f32 %v2124, %v2396
    %2398 = vmatpush1.msra.mxu0 %v2397
    %2399 = vmatprep.subr.mxu0 0.0
    %v2400 = vand.u32 %v2125, 4294901760
    %v2401 = vsub.f32 %v2125, %v2400
    %2402 = vmatpush1.msra.mxu0 %v2401
    %2403 = vmatprep.subr.mxu0 0.0
    %2404 = vmatpush1.msra.mxu0 0.0
    %2405 = vmatprep.subr.mxu0 0.0
    %2406 = vmatpush1.msra.mxu0 0.0
    %2407 = vmatprep.subr.mxu0 0.0
    %2408 = vmatpush1.msra.mxu0 0.0
    %2409 = vmatprep.subr.mxu0 0.0
    %2410 = vmatpush1.msra.mxu0 0.0
    %2411 = vmatprep.subr.mxu0 0.0
    %2412 = vmatpush1.msra.mxu0 0.0
    %2413 = vmatprep.subr.mxu0 0.0
    %2414 = vmatpush1.msra.mxu0 0.0
    %2415 = vmatprep.subr.mxu0 0.0
    %2416 = vmatpush1.msra.mxu0 0.0
    %2417 = vmatprep.subr.mxu0 0.0
    %2418 = vmatpush1.msra.mxu0 0.0
    %2419 = vmatprep.subr.mxu0 0.0
    %2420 = vmatpush1.msra.mxu0 0.0
    %2421 = vmatprep.subr.mxu0 0.0
    %2422 = vmatpush1.msra.mxu0 0.0
    %2423 = vmatprep.subr.mxu0 0.0
    %2424 = vmatpush1.msra.mxu0 0.0
    %2425 = vmatprep.subr.mxu0 0.0
    %2426 = vmatpush1.msra.mxu0 0.0
    %2427 = vmatprep.subr.mxu0 0.0
    %2428 = vmatpush1.msra.mxu0 0.0
    %2429 = vmatprep.subr.mxu0 0.0
    %2430 = vmatpush1.msra.mxu0 0.0
    %2431 = vmatprep.subr.mxu0 0.0
    %2432 = vmatpush1.msra.mxu0 0.0
    %2433 = vmatprep.subr.mxu0 0.0
    %2434 = vmatpush1.msra.mxu0 0.0
    %2435 = vmatprep.subr.mxu0 0.0
    %2436 = vmatpush1.msra.mxu0 0.0
    %2437 = vmatprep.subr.mxu0 0.0
    %2438 = vmatpush1.msra.mxu0 0.0
    %2439 = vmatprep.subr.mxu0 0.0
    %2440 = vmatpush1.msra.mxu0 0.0
    %2441 = vmatprep.subr.mxu0 0.0
    %2442 = vmatpush1.msra.mxu0 0.0
    %2443 = vmatprep.subr.mxu0 0.0
    %2444 = vmatpush1.msra.mxu0 0.0
    %2445 = vmatprep.subr.mxu0 0.0
    %2446 = vmatpush1.msra.mxu0 0.0
    %2447 = vmatprep.subr.mxu0 0.0
    %2448 = vmatpush1.msra.mxu0 0.0
    %2449 = vmatprep.subr.mxu0 0.0
    %2450 = vmatpush1.msra.mxu0 0.0
    %2451 = vmatprep.subr.mxu0 0.0
    %2452 = vmatpush1.msra.mxu0 0.0
    %2453 = vmatprep.subr.mxu0 0.0
    %2454 = vmatpush1.msra.mxu0 0.0
    %2455 = vmatprep.subr.mxu0 0.0
    %2456 = vmatpush1.msra.mxu0 0.0
    %2457 = vmatprep.mubr.f32.mxu0 0.0
    %v2458 = vand.u32 %v2148, 4294901760
    %v2459 = vsub.f32 %v2148, %v2458
    %2460 = vmatmul.mubr.f32.gmra.mrb[0].mxu0 %v2459
    %v2461 = vpop.f32.mrb[0].mxu0
    %v2462 = vadd.f32 %v2362, %v2461
    %v2463 = vpop.f32.mrb[0].mxu0
    %2464 = vmatprep.mubr.f32.mxu0 0.0
    %v2465 = vand.u32 %v2151, 4294901760
    %v2466 = vsub.f32 %v2151, %v2465
    %2467 = vmatmul.mubr.f32.gmra.mrb[0].mxu0 %v2466
    %v2468 = vpop.f32.mrb[0].mxu0
    %v2469 = vadd.f32 %v2368, %v2468
    %v2470 = vpop.f32.mrb[0].mxu0
    %2471 = vmatprep.mubr.f32.mxu0 0.0
    %v2472 = vand.u32 %v2154, 4294901760
    %v2473 = vsub.f32 %v2154, %v2472
    %2474 = vmatmul.mubr.f32.gmra.mrb[0].mxu0 %v2473
    %v2475 = vpop.f32.mrb[0].mxu0
    %v2476 = vadd.f32 %v2374, %v2475
    %v2477 = vpop.f32.mrb[0].mxu0
    %2478 = vmatprep.mubr.f32.mxu0 0.0
    %v2479 = vand.u32 %v2157, 4294901760
    %v2480 = vsub.f32 %v2157, %v2479
    %2481 = vmatmul.mubr.f32.gmra.mrb[0].mxu0 %v2480
    %v2482 = vpop.f32.mrb[0].mxu0
    %v2483 = vadd.f32 %v2380, %v2482
    %v2484 = vpop.f32.mrb[0].mxu0
    %2485 = vdwg.mxu0
    %2486 = vmatprep.subr.mxu0 0.0
    %v2487 = vand.u32 %v2121, 4294901760
    %2488 = vmatpush1.msra.mxu0 %v2487
    %2489 = vmatprep.subr.mxu0 0.0
    %v2490 = vand.u32 %v2122, 4294901760
    %2491 = vmatpush1.msra.mxu0 %v2490
    %2492 = vmatprep.subr.mxu0 0.0
    %v2493 = vand.u32 %v2123, 4294901760
    %2494 = vmatpush1.msra.mxu0 %v2493
    %2495 = vmatprep.subr.mxu0 0.0
    %v2496 = vand.u32 %v2124, 4294901760
    %2497 = vmatpush1.msra.mxu0 %v2496
    %2498 = vmatprep.subr.mxu0 0.0
    %v2499 = vand.u32 %v2125, 4294901760
    %2500 = vmatpush1.msra.mxu0 %v2499
    %2501 = vmatprep.subr.mxu0 0.0
    %2502 = vmatpush1.msra.mxu0 0.0
    %2503 = vmatprep.subr.mxu0 0.0
    %2504 = vmatpush1.msra.mxu0 0.0
    %2505 = vmatprep.subr.mxu0 0.0
    %2506 = vmatpush1.msra.mxu0 0.0
    %2507 = vmatprep.subr.mxu0 0.0
    %2508 = vmatpush1.msra.mxu0 0.0
    %2509 = vmatprep.subr.mxu0 0.0
    %2510 = vmatpush1.msra.mxu0 0.0
    %2511 = vmatprep.subr.mxu0 0.0
    %2512 = vmatpush1.msra.mxu0 0.0
    %2513 = vmatprep.subr.mxu0 0.0
    %2514 = vmatpush1.msra.mxu0 0.0
    %2515 = vmatprep.subr.mxu0 0.0
    %2516 = vmatpush1.msra.mxu0 0.0
    %2517 = vmatprep.subr.mxu0 0.0
    %2518 = vmatpush1.msra.mxu0 0.0
    %2519 = vmatprep.subr.mxu0 0.0
    %2520 = vmatpush1.msra.mxu0 0.0
    %2521 = vmatprep.subr.mxu0 0.0
    %2522 = vmatpush1.msra.mxu0 0.0
    %2523 = vmatprep.subr.mxu0 0.0
    %2524 = vmatpush1.msra.mxu0 0.0
    %2525 = vmatprep.subr.mxu0 0.0
    %2526 = vmatpush1.msra.mxu0 0.0
    %2527 = vmatprep.subr.mxu0 0.0
    %2528 = vmatpush1.msra.mxu0 0.0
    %2529 = vmatprep.subr.mxu0 0.0
    %2530 = vmatpush1.msra.mxu0 0.0
    %2531 = vmatprep.subr.mxu0 0.0
    %2532 = vmatpush1.msra.mxu0 0.0
    %2533 = vmatprep.subr.mxu0 0.0
    %2534 = vmatpush1.msra.mxu0 0.0
    %2535 = vmatprep.subr.mxu0 0.0
    %2536 = vmatpush1.msra.mxu0 0.0
    %2537 = vmatprep.subr.mxu0 0.0
    %2538 = vmatpush1.msra.mxu0 0.0
    %2539 = vmatprep.subr.mxu0 0.0
    %2540 = vmatpush1.msra.mxu0 0.0
    %2541 = vmatprep.subr.mxu0 0.0
    %2542 = vmatpush1.msra.mxu0 0.0
    %2543 = vmatprep.subr.mxu0 0.0
    %2544 = vmatpush1.msra.mxu0 0.0
    %2545 = vmatprep.subr.mxu0 0.0
    %2546 = vmatpush1.msra.mxu0 0.0
    %2547 = vmatprep.subr.mxu0 0.0
    %2548 = vmatpush1.msra.mxu0 0.0
    %2549 = vmatprep.subr.mxu0 0.0
    %2550 = vmatpush1.msra.mxu0 0.0
    %2551 = vmatprep.subr.mxu0 0.0
    %2552 = vmatpush1.msra.mxu0 0.0
    %2553 = vmatprep.subr.mxu0 0.0
    %2554 = vmatpush1.msra.mxu0 0.0
    %2555 = vmatprep.mubr.f32.mxu0 0.0
    %v2556 = vand.u32 %v2148, 4294901760
    %v2557 = vsub.f32 %v2148, %v2556
    %v2558 = vand.u32 %v2557, 4294901760
    %2559 = vmatmul.mubr.f32.gmra.mrb[0].mxu0 %v2558
    %v2560 = vpop.f32.mrb[0].mxu0
    %v2561 = vadd.f32 %v2462, %v2560
    %v2562 = vpop.f32.mrb[0].mxu0
    %2563 = vmatprep.mubr.f32.mxu0 0.0
    %v2564 = vand.u32 %v2151, 4294901760
    %v2565 = vsub.f32 %v2151, %v2564
    %v2566 = vand.u32 %v2565, 4294901760
    %2567 = vmatmul.mubr.f32.gmra.mrb[0].mxu0 %v2566
    %v2568 = vpop.f32.mrb[0].mxu0
    %v2569 = vadd.f32 %v2469, %v2568
    %v2570 = vpop.f32.mrb[0].mxu0
    %2571 = vmatprep.mubr.f32.mxu0 0.0
    %v2572 = vand.u32 %v2154, 4294901760
    %v2573 = vsub.f32 %v2154, %v2572
    %v2574 = vand.u32 %v2573, 4294901760
    %2575 = vmatmul.mubr.f32.gmra.mrb[0].mxu0 %v2574
    %v2576 = vpop.f32.mrb[0].mxu0
    %v2577 = vadd.f32 %v2476, %v2576
    %v2578 = vpop.f32.mrb[0].mxu0
    %2579 = vmatprep.mubr.f32.mxu0 0.0
    %v2580 = vand.u32 %v2157, 4294901760
    %v2581 = vsub.f32 %v2157, %v2580
    %v2582 = vand.u32 %v2581, 4294901760
    %2583 = vmatmul.mubr.f32.gmra.mrb[0].mxu0 %v2582
    %v2584 = vpop.f32.mrb[0].mxu0
    %v2585 = vadd.f32 %v2483, %v2584
    %v2586 = vpop.f32.mrb[0].mxu0
    %2587 = vdwg.mxu0
    %2588 = vmatprep.subr.mxu0 0.0
    %v2589 = vand.u32 %v2121, 4294901760
    %v2590 = vsub.f32 %v2121, %v2589
    %v2591 = vand.u32 %v2590, 4294901760
    %2592 = vmatpush1.msra.mxu0 %v2591
    %2593 = vmatprep.subr.mxu0 0.0
    %v2594 = vand.u32 %v2122, 4294901760
    %v2595 = vsub.f32 %v2122, %v2594
    %v2596 = vand.u32 %v2595, 4294901760
    %2597 = vmatpush1.msra.mxu0 %v2596
    %2598 = vmatprep.subr.mxu0 0.0
    %v2599 = vand.u32 %v2123, 4294901760
    %v2600 = vsub.f32 %v2123, %v2599
    %v2601 = vand.u32 %v2600, 4294901760
    %2602 = vmatpush1.msra.mxu0 %v2601
    %2603 = vmatprep.subr.mxu0 0.0
    %v2604 = vand.u32 %v2124, 4294901760
    %v2605 = vsub.f32 %v2124, %v2604
    %v2606 = vand.u32 %v2605, 4294901760
    %2607 = vmatpush1.msra.mxu0 %v2606
    %2608 = vmatprep.subr.mxu0 0.0
    %v2609 = vand.u32 %v2125, 4294901760
    %v2610 = vsub.f32 %v2125, %v2609
    %v2611 = vand.u32 %v2610, 4294901760
    %2612 = vmatpush1.msra.mxu0 %v2611
    %2613 = vmatprep.subr.mxu0 0.0
    %2614 = vmatpush1.msra.mxu0 0.0
    %2615 = vmatprep.subr.mxu0 0.0
    %2616 = vmatpush1.msra.mxu0 0.0
    %2617 = vmatprep.subr.mxu0 0.0
    %2618 = vmatpush1.msra.mxu0 0.0
    %2619 = vmatprep.subr.mxu0 0.0
    %2620 = vmatpush1.msra.mxu0 0.0
    %2621 = vmatprep.subr.mxu0 0.0
    %2622 = vmatpush1.msra.mxu0 0.0
    %2623 = vmatprep.subr.mxu0 0.0
    %2624 = vmatpush1.msra.mxu0 0.0
    %2625 = vmatprep.subr.mxu0 0.0
    %2626 = vmatpush1.msra.mxu0 0.0
    %2627 = vmatprep.subr.mxu0 0.0
    %2628 = vmatpush1.msra.mxu0 0.0
    %2629 = vmatprep.subr.mxu0 0.0
    %2630 = vmatpush1.msra.mxu0 0.0
    %2631 = vmatprep.subr.mxu0 0.0
    %2632 = vmatpush1.msra.mxu0 0.0
    %2633 = vmatprep.subr.mxu0 0.0
    %2634 = vmatpush1.msra.mxu0 0.0
    %2635 = vmatprep.subr.mxu0 0.0
    %2636 = vmatpush1.msra.mxu0 0.0
    %2637 = vmatprep.subr.mxu0 0.0
    %2638 = vmatpush1.msra.mxu0 0.0
    %2639 = vmatprep.subr.mxu0 0.0
    %2640 = vmatpush1.msra.mxu0 0.0
    %2641 = vmatprep.subr.mxu0 0.0
    %2642 = vmatpush1.msra.mxu0 0.0
    %2643 = vmatprep.subr.mxu0 0.0
    %2644 = vmatpush1.msra.mxu0 0.0
    %2645 = vmatprep.subr.mxu0 0.0
    %2646 = vmatpush1.msra.mxu0 0.0
    %2647 = vmatprep.subr.mxu0 0.0
    %2648 = vmatpush1.msra.mxu0 0.0
    %2649 = vmatprep.subr.mxu0 0.0
    %2650 = vmatpush1.msra.mxu0 0.0
    %2651 = vmatprep.subr.mxu0 0.0
    %2652 = vmatpush1.msra.mxu0 0.0
    %2653 = vmatprep.subr.mxu0 0.0
    %2654 = vmatpush1.msra.mxu0 0.0
    %2655 = vmatprep.subr.mxu0 0.0
    %2656 = vmatpush1.msra.mxu0 0.0
    %2657 = vmatprep.subr.mxu0 0.0
    %2658 = vmatpush1.msra.mxu0 0.0
    %2659 = vmatprep.subr.mxu0 0.0
    %2660 = vmatpush1.msra.mxu0 0.0
    %2661 = vmatprep.subr.mxu0 0.0
    %2662 = vmatpush1.msra.mxu0 0.0
    %2663 = vmatprep.subr.mxu0 0.0
    %2664 = vmatpush1.msra.mxu0 0.0
    %2665 = vmatprep.subr.mxu0 0.0
    %2666 = vmatpush1.msra.mxu0 0.0
    %2667 = vmatprep.mubr.f32.mxu0 0.0
    %v2668 = vand.u32 %v2148, 4294901760
    %2669 = vmatmul.mubr.f32.gmra.mrb[0].mxu0 %v2668
    %v2670 = vpop.f32.mrb[0].mxu0
    %v2671 = vadd.f32 %v2561, %v2670
    %v2672 = vpop.f32.mrb[0].mxu0
    %2673 = vmatprep.mubr.f32.mxu0 0.0
    %v2674 = vand.u32 %v2151, 4294901760
    %2675 = vmatmul.mubr.f32.gmra.mrb[0].mxu0 %v2674
    %v2676 = vpop.f32.mrb[0].mxu0
    %v2677 = vadd.f32 %v2569, %v2676
    %v2678 = vpop.f32.mrb[0].mxu0
    %2679 = vmatprep.mubr.f32.mxu0 0.0
    %v2680 = vand.u32 %v2154, 4294901760
    %2681 = vmatmul.mubr.f32.gmra.mrb[0].mxu0 %v2680
    %v2682 = vpop.f32.mrb[0].mxu0
    %v2683 = vadd.f32 %v2577, %v2682
    %v2684 = vpop.f32.mrb[0].mxu0
    %2685 = vmatprep.mubr.f32.mxu0 0.0
    %v2686 = vand.u32 %v2157, 4294901760
    %2687 = vmatmul.mubr.f32.gmra.mrb[0].mxu0 %v2686
    %v2688 = vpop.f32.mrb[0].mxu0
    %v2689 = vadd.f32 %v2585, %v2688
    %v2690 = vpop.f32.mrb[0].mxu0
    %2691 = vdwg.mxu0
    %2692 = vmatprep.subr.mxu0 0.0
    %v2693 = vand.u32 %v2121, 4294901760
    %2694 = vmatpush1.msra.mxu0 %v2693
    %2695 = vmatprep.subr.mxu0 0.0
    %v2696 = vand.u32 %v2122, 4294901760
    %2697 = vmatpush1.msra.mxu0 %v2696
    %2698 = vmatprep.subr.mxu0 0.0
    %v2699 = vand.u32 %v2123, 4294901760
    %2700 = vmatpush1.msra.mxu0 %v2699
    %2701 = vmatprep.subr.mxu0 0.0
    %v2702 = vand.u32 %v2124, 4294901760
    %2703 = vmatpush1.msra.mxu0 %v2702
    %2704 = vmatprep.subr.mxu0 0.0
    %v2705 = vand.u32 %v2125, 4294901760
    %2706 = vmatpush1.msra.mxu0 %v2705
    %2707 = vmatprep.subr.mxu0 0.0
    %2708 = vmatpush1.msra.mxu0 0.0
    %2709 = vmatprep.subr.mxu0 0.0
    %2710 = vmatpush1.msra.mxu0 0.0
    %2711 = vmatprep.subr.mxu0 0.0
    %2712 = vmatpush1.msra.mxu0 0.0
    %2713 = vmatprep.subr.mxu0 0.0
    %2714 = vmatpush1.msra.mxu0 0.0
    %2715 = vmatprep.subr.mxu0 0.0
    %2716 = vmatpush1.msra.mxu0 0.0
    %2717 = vmatprep.subr.mxu0 0.0
    %2718 = vmatpush1.msra.mxu0 0.0
    %2719 = vmatprep.subr.mxu0 0.0
    %2720 = vmatpush1.msra.mxu0 0.0
    %2721 = vmatprep.subr.mxu0 0.0
    %2722 = vmatpush1.msra.mxu0 0.0
    %2723 = vmatprep.subr.mxu0 0.0
    %2724 = vmatpush1.msra.mxu0 0.0
    %2725 = vmatprep.subr.mxu0 0.0
    %2726 = vmatpush1.msra.mxu0 0.0
    %2727 = vmatprep.subr.mxu0 0.0
    %2728 = vmatpush1.msra.mxu0 0.0
    %2729 = vmatprep.subr.mxu0 0.0
    %2730 = vmatpush1.msra.mxu0 0.0
    %2731 = vmatprep.subr.mxu0 0.0
    %2732 = vmatpush1.msra.mxu0 0.0
    %2733 = vmatprep.subr.mxu0 0.0
    %2734 = vmatpush1.msra.mxu0 0.0
    %2735 = vmatprep.subr.mxu0 0.0
    %2736 = vmatpush1.msra.mxu0 0.0
    %2737 = vmatprep.subr.mxu0 0.0
    %2738 = vmatpush1.msra.mxu0 0.0
    %2739 = vmatprep.subr.mxu0 0.0
    %2740 = vmatpush1.msra.mxu0 0.0
    %2741 = vmatprep.subr.mxu0 0.0
    %2742 = vmatpush1.msra.mxu0 0.0
    %2743 = vmatprep.subr.mxu0 0.0
    %2744 = vmatpush1.msra.mxu0 0.0
    %2745 = vmatprep.subr.mxu0 0.0
    %2746 = vmatpush1.msra.mxu0 0.0
    %2747 = vmatprep.subr.mxu0 0.0
    %2748 = vmatpush1.msra.mxu0 0.0
    %2749 = vmatprep.subr.mxu0 0.0
    %2750 = vmatpush1.msra.mxu0 0.0
    %2751 = vmatprep.subr.mxu0 0.0
    %2752 = vmatpush1.msra.mxu0 0.0
    %2753 = vmatprep.subr.mxu0 0.0
    %2754 = vmatpush1.msra.mxu0 0.0
    %2755 = vmatprep.subr.mxu0 0.0
    %2756 = vmatpush1.msra.mxu0 0.0
    %2757 = vmatprep.subr.mxu0 0.0
    %2758 = vmatpush1.msra.mxu0 0.0
    %2759 = vmatprep.subr.mxu0 0.0
    %2760 = vmatpush1.msra.mxu0 0.0
    %2761 = vmatprep.mubr.f32.mxu0 0.0
    %v2762 = vand.u32 %v2148, 4294901760
    %2763 = vmatmul.mubr.f32.gmra.mrb[0].mxu0 %v2762
    %v2764 = vpop.f32.mrb[0].mxu0
    %v2765 = vadd.f32 %v2671, %v2764
    %v2766 = vpop.f32.mrb[0].mxu0
    %2767 = vmatprep.mubr.f32.mxu0 0.0
    %v2768 = vand.u32 %v2151, 4294901760
    %2769 = vmatmul.mubr.f32.gmra.mrb[0].mxu0 %v2768
    %v2770 = vpop.f32.mrb[0].mxu0
    %v2771 = vadd.f32 %v2677, %v2770
    %v2772 = vpop.f32.mrb[0].mxu0
    %2773 = vmatprep.mubr.f32.mxu0 0.0
    %v2774 = vand.u32 %v2154, 4294901760
    %2775 = vmatmul.mubr.f32.gmra.mrb[0].mxu0 %v2774
    %v2776 = vpop.f32.mrb[0].mxu0
    %v2777 = vadd.f32 %v2683, %v2776
    %v2778 = vpop.f32.mrb[0].mxu0
    %2779 = vmatprep.mubr.f32.mxu0 0.0
    %v2780 = vand.u32 %v2157, 4294901760
    %2781 = vmatmul.mubr.f32.gmra.mrb[0].mxu0 %v2780
    %v2782 = vpop.f32.mrb[0].mxu0
    %v2783 = vadd.f32 %v2689, %v2782
    %v2784 = vpop.f32.mrb[0].mxu0
    %2785 = vdwg.mxu0
    %v2786 = vmax.f32 %v2765, 0.0
    %v2787 = vmax.f32 %v2771, 0.0
    %v2788 = vmax.f32 %v2777, 0.0
    %v2789 = vmax.f32 %v2783, 0.0
    %2790 = vst.msk [vmem:[%s5] sm:$0xff] %vm67, %v2786
    %2791 = vst.msk [vmem:[%s5 + $0x8] sm:$0xff] %vm67, %v2787
    %2792 = vst.msk [vmem:[%s5 + $0x10] sm:$0xff] %vm67, %v2788
    %2793 = vst.msk [vmem:[%s5 + $0x18] sm:$0xff] %vm67, %v2789
    %v2794 = vld [vmem:[%s69] sm:$0xff]
    %v2795 = vld [vmem:[%s69 + $0x8] sm:$0xff]
    %v2796 = vld [vmem:[%s69 + $0x10] sm:$0xff]
    %v2797 = vld [vmem:[%s69 + $0x18] sm:$0xff]
    %v2798 = vld [vmem:[%s69 + $0x20] sm:$0xff]
    %2799 = vmatprep.subr.mxu0 0.0
    %v2800 = vand.u32 %v2794, 4294901760
    %2801 = vmatpush1.msra.mxu0 %v2800
    %2802 = vmatprep.subr.mxu0 0.0
    %v2803 = vand.u32 %v2795, 4294901760
    %2804 = vmatpush1.msra.mxu0 %v2803
    %2805 = vmatprep.subr.mxu0 0.0
    %v2806 = vand.u32 %v2796, 4294901760
    %2807 = vmatpush1.msra.mxu0 %v2806
    %2808 = vmatprep.subr.mxu0 0.0
    %v2809 = vand.u32 %v2797, 4294901760
    %2810 = vmatpush1.msra.mxu0 %v2809
    %2811 = vmatprep.subr.mxu0 0.0
    %v2812 = vand.u32 %v2798, 4294901760
    %2813 = vmatpush1.msra.mxu0 %v2812
    %2814 = vmatprep.subr.mxu0 0.0
    %2815 = vmatpush1.msra.mxu0 0.0
    %2816 = vmatprep.subr.mxu0 0.0
    %2817 = vmatpush1.msra.mxu0 0.0
    %2818 = vmatprep.subr.mxu0 0.0
    %2819 = vmatpush1.msra.mxu0 0.0
    %2820 = vmatprep.subr.mxu0 0.0
    %2821 = vmatpush1.msra.mxu0 0.0
    %2822 = vmatprep.subr.mxu0 0.0
    %2823 = vmatpush1.msra.mxu0 0.0
    %2824 = vmatprep.subr.mxu0 0.0
    %2825 = vmatpush1.msra.mxu0 0.0
    %2826 = vmatprep.subr.mxu0 0.0
    %2827 = vmatpush1.msra.mxu0 0.0
    %2828 = vmatprep.subr.mxu0 0.0
    %2829 = vmatpush1.msra.mxu0 0.0
    %2830 = vmatprep.subr.mxu0 0.0
    %2831 = vmatpush1.msra.mxu0 0.0
    %2832 = vmatprep.subr.mxu0 0.0
    %2833 = vmatpush1.msra.mxu0 0.0
    %2834 = vmatprep.subr.mxu0 0.0
    %2835 = vmatpush1.msra.mxu0 0.0
    %2836 = vmatprep.subr.mxu0 0.0
    %2837 = vmatpush1.msra.mxu0 0.0
    %2838 = vmatprep.subr.mxu0 0.0
    %2839 = vmatpush1.msra.mxu0 0.0
    %2840 = vmatprep.subr.mxu0 0.0
    %2841 = vmatpush1.msra.mxu0 0.0
    %2842 = vmatprep.subr.mxu0 0.0
    %2843 = vmatpush1.msra.mxu0 0.0
    %2844 = vmatprep.subr.mxu0 0.0
    %2845 = vmatpush1.msra.mxu0 0.0
    %2846 = vmatprep.subr.mxu0 0.0
    %2847 = vmatpush1.msra.mxu0 0.0
    %2848 = vmatprep.subr.mxu0 0.0
    %2849 = vmatpush1.msra.mxu0 0.0
    %2850 = vmatprep.subr.mxu0 0.0
    %2851 = vmatpush1.msra.mxu0 0.0
    %2852 = vmatprep.subr.mxu0 0.0
    %2853 = vmatpush1.msra.mxu0 0.0
    %2854 = vmatprep.subr.mxu0 0.0
    %2855 = vmatpush1.msra.mxu0 0.0
    %2856 = vmatprep.subr.mxu0 0.0
    %2857 = vmatpush1.msra.mxu0 0.0
    %2858 = vmatprep.subr.mxu0 0.0
    %2859 = vmatpush1.msra.mxu0 0.0
    %2860 = vmatprep.subr.mxu0 0.0
    %2861 = vmatpush1.msra.mxu0 0.0
    %2862 = vmatprep.subr.mxu0 0.0
    %2863 = vmatpush1.msra.mxu0 0.0
    %2864 = vmatprep.subr.mxu0 0.0
    %2865 = vmatpush1.msra.mxu0 0.0
    %2866 = vmatprep.subr.mxu0 0.0
    %2867 = vmatpush1.msra.mxu0 0.0
    %2868 = vmatprep.mubr.f32.mxu0 0.0
    %v2869 = vand.u32 %v2148, 4294901760
    %v2870 = vsub.f32 %v2148, %v2869
    %v2871 = vand.u32 %v2870, 4294901760
    %v2872 = vsub.f32 %v2870, %v2871
    %v2873 = vand.u32 %v2872, 4294901760
    %2874 = vmatmul.mubr.f32.gmra.mrb[0].mxu0 %v2873
    %v2875 = vpop.f32.mrb[0].mxu0
    %v2876 = vadd.f32 %v2129, %v2875
    %v2877 = vpop.f32.mrb[0].mxu0
    %2878 = vmatprep.mubr.f32.mxu0 0.0
    %v2879 = vand.u32 %v2151, 4294901760
    %v2880 = vsub.f32 %v2151, %v2879
    %v2881 = vand.u32 %v2880, 4294901760
    %v2882 = vsub.f32 %v2880, %v2881
    %v2883 = vand.u32 %v2882, 4294901760
    %2884 = vmatmul.mubr.f32.gmra.mrb[0].mxu0 %v2883
    %v2885 = vpop.f32.mrb[0].mxu0
    %v2886 = vadd.f32 %v2134, %v2885
    %v2887 = vpop.f32.mrb[0].mxu0
    %2888 = vmatprep.mubr.f32.mxu0 0.0
    %v2889 = vand.u32 %v2154, 4294901760
    %v2890 = vsub.f32 %v2154, %v2889
    %v2891 = vand.u32 %v2890, 4294901760
    %v2892 = vsub.f32 %v2890, %v2891
    %v2893 = vand.u32 %v2892, 4294901760
    %2894 = vmatmul.mubr.f32.gmra.mrb[0].mxu0 %v2893
    %v2895 = vpop.f32.mrb[0].mxu0
    %v2896 = vadd.f32 %v2139, %v2895
    %v2897 = vpop.f32.mrb[0].mxu0
    %2898 = vmatprep.mubr.f32.mxu0 0.0
    %v2899 = vand.u32 %v2157, 4294901760
    %v2900 = vsub.f32 %v2157, %v2899
    %v2901 = vand.u32 %v2900, 4294901760
    %v2902 = vsub.f32 %v2900, %v2901
    %v2903 = vand.u32 %v2902, 4294901760
    %2904 = vmatmul.mubr.f32.gmra.mrb[0].mxu0 %v2903
    %v2905 = vpop.f32.mrb[0].mxu0
    %v2906 = vadd.f32 %v2144, %v2905
    %v2907 = vpop.f32.mrb[0].mxu0
    %2908 = vdwg.mxu0
    %2909 = vmatprep.subr.mxu0 0.0
    %v2910 = vand.u32 %v2794, 4294901760
    %v2911 = vsub.f32 %v2794, %v2910
    %v2912 = vand.u32 %v2911, 4294901760
    %v2913 = vsub.f32 %v2911, %v2912
    %v2914 = vand.u32 %v2913, 4294901760
    %2915 = vmatpush1.msra.mxu0 %v2914
    %2916 = vmatprep.subr.mxu0 0.0
    %v2917 = vand.u32 %v2795, 4294901760
    %v2918 = vsub.f32 %v2795, %v2917
    %v2919 = vand.u32 %v2918, 4294901760
    %v2920 = vsub.f32 %v2918, %v2919
    %v2921 = vand.u32 %v2920, 4294901760
    %2922 = vmatpush1.msra.mxu0 %v2921
    %2923 = vmatprep.subr.mxu0 0.0
    %v2924 = vand.u32 %v2796, 4294901760
    %v2925 = vsub.f32 %v2796, %v2924
    %v2926 = vand.u32 %v2925, 4294901760
    %v2927 = vsub.f32 %v2925, %v2926
    %v2928 = vand.u32 %v2927, 4294901760
    %2929 = vmatpush1.msra.mxu0 %v2928
    %2930 = vmatprep.subr.mxu0 0.0
    %v2931 = vand.u32 %v2797, 4294901760
    %v2932 = vsub.f32 %v2797, %v2931
    %v2933 = vand.u32 %v2932, 4294901760
    %v2934 = vsub.f32 %v2932, %v2933
    %v2935 = vand.u32 %v2934, 4294901760
    %2936 = vmatpush1.msra.mxu0 %v2935
    %2937 = vmatprep.subr.mxu0 0.0
    %v2938 = vand.u32 %v2798, 4294901760
    %v2939 = vsub.f32 %v2798, %v2938
    %v2940 = vand.u32 %v2939, 4294901760
    %v2941 = vsub.f32 %v2939, %v2940
    %v2942 = vand.u32 %v2941, 4294901760
    %2943 = vmatpush1.msra.mxu0 %v2942
    %2944 = vmatprep.subr.mxu0 0.0
    %2945 = vmatpush1.msra.mxu0 0.0
    %2946 = vmatprep.subr.mxu0 0.0
    %2947 = vmatpush1.msra.mxu0 0.0
    %2948 = vmatprep.subr.mxu0 0.0
    %2949 = vmatpush1.msra.mxu0 0.0
    %2950 = vmatprep.subr.mxu0 0.0
    %2951 = vmatpush1.msra.mxu0 0.0
    %2952 = vmatprep.subr.mxu0 0.0
    %2953 = vmatpush1.msra.mxu0 0.0
    %2954 = vmatprep.subr.mxu0 0.0
    %2955 = vmatpush1.msra.mxu0 0.0
    %2956 = vmatprep.subr.mxu0 0.0
    %2957 = vmatpush1.msra.mxu0 0.0
    %2958 = vmatprep.subr.mxu0 0.0
    %2959 = vmatpush1.msra.mxu0 0.0
    %2960 = vmatprep.subr.mxu0 0.0
    %2961 = vmatpush1.msra.mxu0 0.0
    %2962 = vmatprep.subr.mxu0 0.0
    %2963 = vmatpush1.msra.mxu0 0.0
    %2964 = vmatprep.subr.mxu0 0.0
    %2965 = vmatpush1.msra.mxu0 0.0
    %2966 = vmatprep.subr.mxu0 0.0
    %2967 = vmatpush1.msra.mxu0 0.0
    %2968 = vmatprep.subr.mxu0 0.0
    %2969 = vmatpush1.msra.mxu0 0.0
    %2970 = vmatprep.subr.mxu0 0.0
    %2971 = vmatpush1.msra.mxu0 0.0
    %2972 = vmatprep.subr.mxu0 0.0
    %2973 = vmatpush1.msra.mxu0 0.0
    %2974 = vmatprep.subr.mxu0 0.0
    %2975 = vmatpush1.msra.mxu0 0.0
    %2976 = vmatprep.subr.mxu0 0.0
    %2977 = vmatpush1.msra.mxu0 0.0
    %2978 = vmatprep.subr.mxu0 0.0
    %2979 = vmatpush1.msra.mxu0 0.0
    %2980 = vmatprep.subr.mxu0 0.0
    %2981 = vmatpush1.msra.mxu0 0.0
    %2982 = vmatprep.subr.mxu0 0.0
    %2983 = vmatpush1.msra.mxu0 0.0
    %2984 = vmatprep.subr.mxu0 0.0
    %2985 = vmatpush1.msra.mxu0 0.0
    %2986 = vmatprep.subr.mxu0 0.0
    %2987 = vmatpush1.msra.mxu0 0.0
    %2988 = vmatprep.subr.mxu0 0.0
    %2989 = vmatpush1.msra.mxu0 0.0
    %2990 = vmatprep.subr.mxu0 0.0
    %2991 = vmatpush1.msra.mxu0 0.0
    %2992 = vmatprep.subr.mxu0 0.0
    %2993 = vmatpush1.msra.mxu0 0.0
    %2994 = vmatprep.subr.mxu0 0.0
    %2995 = vmatpush1.msra.mxu0 0.0
    %2996 = vmatprep.subr.mxu0 0.0
    %2997 = vmatpush1.msra.mxu0 0.0
    %2998 = vmatprep.mubr.f32.mxu0 0.0
    %v2999 = vand.u32 %v2148, 4294901760
    %3000 = vmatmul.mubr.f32.gmra.mrb[0].mxu0 %v2999
    %v3001 = vpop.f32.mrb[0].mxu0
    %v3002 = vadd.f32 %v2876, %v3001
    %v3003 = vpop.f32.mrb[0].mxu0
    %3004 = vmatprep.mubr.f32.mxu0 0.0
    %v3005 = vand.u32 %v2151, 4294901760
    %3006 = vmatmul.mubr.f32.gmra.mrb[0].mxu0 %v3005
    %v3007 = vpop.f32.mrb[0].mxu0
    %v3008 = vadd.f32 %v2886, %v3007
    %v3009 = vpop.f32.mrb[0].mxu0
    %3010 = vmatprep.mubr.f32.mxu0 0.0
    %v3011 = vand.u32 %v2154, 4294901760
    %3012 = vmatmul.mubr.f32.gmra.mrb[0].mxu0 %v3011
    %v3013 = vpop.f32.mrb[0].mxu0
    %v3014 = vadd.f32 %v2896, %v3013
    %v3015 = vpop.f32.mrb[0].mxu0
    %3016 = vmatprep.mubr.f32.mxu0 0.0
    %v3017 = vand.u32 %v2157, 4294901760
    %3018 = vmatmul.mubr.f32.gmra.mrb[0].mxu0 %v3017
    %v3019 = vpop.f32.mrb[0].mxu0
    %v3020 = vadd.f32 %v2906, %v3019
    %v3021 = vpop.f32.mrb[0].mxu0
    %3022 = vdwg.mxu0
    %3023 = vmatprep.subr.mxu0 0.0
    %v3024 = vand.u32 %v2794, 4294901760
    %v3025 = vsub.f32 %v2794, %v3024
    %3026 = vmatpush1.msra.mxu0 %v3025
    %3027 = vmatprep.subr.mxu0 0.0
    %v3028 = vand.u32 %v2795, 4294901760
    %v3029 = vsub.f32 %v2795, %v3028
    %3030 = vmatpush1.msra.mxu0 %v3029
    %3031 = vmatprep.subr.mxu0 0.0
    %v3032 = vand.u32 %v2796, 4294901760
    %v3033 = vsub.f32 %v2796, %v3032
    %3034 = vmatpush1.msra.mxu0 %v3033
    %3035 = vmatprep.subr.mxu0 0.0
    %v3036 = vand.u32 %v2797, 4294901760
    %v3037 = vsub.f32 %v2797, %v3036
    %3038 = vmatpush1.msra.mxu0 %v3037
    %3039 = vmatprep.subr.mxu0 0.0
    %v3040 = vand.u32 %v2798, 4294901760
    %v3041 = vsub.f32 %v2798, %v3040
    %3042 = vmatpush1.msra.mxu0 %v3041
    %3043 = vmatprep.subr.mxu0 0.0
    %3044 = vmatpush1.msra.mxu0 0.0
    %3045 = vmatprep.subr.mxu0 0.0
    %3046 = vmatpush1.msra.mxu0 0.0
    %3047 = vmatprep.subr.mxu0 0.0
    %3048 = vmatpush1.msra.mxu0 0.0
    %3049 = vmatprep.subr.mxu0 0.0
    %3050 = vmatpush1.msra.mxu0 0.0
    %3051 = vmatprep.subr.mxu0 0.0
    %3052 = vmatpush1.msra.mxu0 0.0
    %3053 = vmatprep.subr.mxu0 0.0
    %3054 = vmatpush1.msra.mxu0 0.0
    %3055 = vmatprep.subr.mxu0 0.0
    %3056 = vmatpush1.msra.mxu0 0.0
    %3057 = vmatprep.subr.mxu0 0.0
    %3058 = vmatpush1.msra.mxu0 0.0
    %3059 = vmatprep.subr.mxu0 0.0
    %3060 = vmatpush1.msra.mxu0 0.0
    %3061 = vmatprep.subr.mxu0 0.0
    %3062 = vmatpush1.msra.mxu0 0.0
    %3063 = vmatprep.subr.mxu0 0.0
    %3064 = vmatpush1.msra.mxu0 0.0
    %3065 = vmatprep.subr.mxu0 0.0
    %3066 = vmatpush1.msra.mxu0 0.0
    %3067 = vmatprep.subr.mxu0 0.0
    %3068 = vmatpush1.msra.mxu0 0.0
    %3069 = vmatprep.subr.mxu0 0.0
    %3070 = vmatpush1.msra.mxu0 0.0
    %3071 = vmatprep.subr.mxu0 0.0
    %3072 = vmatpush1.msra.mxu0 0.0
    %3073 = vmatprep.subr.mxu0 0.0
    %3074 = vmatpush1.msra.mxu0 0.0
    %3075 = vmatprep.subr.mxu0 0.0
    %3076 = vmatpush1.msra.mxu0 0.0
    %3077 = vmatprep.subr.mxu0 0.0
    %3078 = vmatpush1.msra.mxu0 0.0
    %3079 = vmatprep.subr.mxu0 0.0
    %3080 = vmatpush1.msra.mxu0 0.0
    %3081 = vmatprep.subr.mxu0 0.0
    %3082 = vmatpush1.msra.mxu0 0.0
    %3083 = vmatprep.subr.mxu0 0.0
    %3084 = vmatpush1.msra.mxu0 0.0
    %3085 = vmatprep.subr.mxu0 0.0
    %3086 = vmatpush1.msra.mxu0 0.0
    %3087 = vmatprep.subr.mxu0 0.0
    %3088 = vmatpush1.msra.mxu0 0.0
    %3089 = vmatprep.subr.mxu0 0.0
    %3090 = vmatpush1.msra.mxu0 0.0
    %3091 = vmatprep.subr.mxu0 0.0
    %3092 = vmatpush1.msra.mxu0 0.0
    %3093 = vmatprep.subr.mxu0 0.0
    %3094 = vmatpush1.msra.mxu0 0.0
    %3095 = vmatprep.subr.mxu0 0.0
    %3096 = vmatpush1.msra.mxu0 0.0
    %3097 = vmatprep.mubr.f32.mxu0 0.0
    %v3098 = vand.u32 %v2148, 4294901760
    %v3099 = vsub.f32 %v2148, %v3098
    %3100 = vmatmul.mubr.f32.gmra.mrb[0].mxu0 %v3099
    %v3101 = vpop.f32.mrb[0].mxu0
    %v3102 = vadd.f32 %v3002, %v3101
    %v3103 = vpop.f32.mrb[0].mxu0
    %3104 = vmatprep.mubr.f32.mxu0 0.0
    %v3105 = vand.u32 %v2151, 4294901760
    %v3106 = vsub.f32 %v2151, %v3105
    %3107 = vmatmul.mubr.f32.gmra.mrb[0].mxu0 %v3106
    %v3108 = vpop.f32.mrb[0].mxu0
    %v3109 = vadd.f32 %v3008, %v3108
    %v3110 = vpop.f32.mrb[0].mxu0
    %3111 = vmatprep.mubr.f32.mxu0 0.0
    %v3112 = vand.u32 %v2154, 4294901760
    %v3113 = vsub.f32 %v2154, %v3112
    %3114 = vmatmul.mubr.f32.gmra.mrb[0].mxu0 %v3113
    %v3115 = vpop.f32.mrb[0].mxu0
    %v3116 = vadd.f32 %v3014, %v3115
    %v3117 = vpop.f32.mrb[0].mxu0
    %3118 = vmatprep.mubr.f32.mxu0 0.0
    %v3119 = vand.u32 %v2157, 4294901760
    %v3120 = vsub.f32 %v2157, %v3119
    %3121 = vmatmul.mubr.f32.gmra.mrb[0].mxu0 %v3120
    %v3122 = vpop.f32.mrb[0].mxu0
    %v3123 = vadd.f32 %v3020, %v3122
    %v3124 = vpop.f32.mrb[0].mxu0
    %3125 = vdwg.mxu0
    %3126 = vmatprep.subr.mxu0 0.0
    %v3127 = vand.u32 %v2794, 4294901760
    %3128 = vmatpush1.msra.mxu0 %v3127
    %3129 = vmatprep.subr.mxu0 0.0
    %v3130 = vand.u32 %v2795, 4294901760
    %3131 = vmatpush1.msra.mxu0 %v3130
    %3132 = vmatprep.subr.mxu0 0.0
    %v3133 = vand.u32 %v2796, 4294901760
    %3134 = vmatpush1.msra.mxu0 %v3133
    %3135 = vmatprep.subr.mxu0 0.0
    %v3136 = vand.u32 %v2797, 4294901760
    %3137 = vmatpush1.msra.mxu0 %v3136
    %3138 = vmatprep.subr.mxu0 0.0
    %v3139 = vand.u32 %v2798, 4294901760
    %3140 = vmatpush1.msra.mxu0 %v3139
    %3141 = vmatprep.subr.mxu0 0.0
    %3142 = vmatpush1.msra.mxu0 0.0
    %3143 = vmatprep.subr.mxu0 0.0
    %3144 = vmatpush1.msra.mxu0 0.0
    %3145 = vmatprep.subr.mxu0 0.0
    %3146 = vmatpush1.msra.mxu0 0.0
    %3147 = vmatprep.subr.mxu0 0.0
    %3148 = vmatpush1.msra.mxu0 0.0
    %3149 = vmatprep.subr.mxu0 0.0
    %3150 = vmatpush1.msra.mxu0 0.0
    %3151 = vmatprep.subr.mxu0 0.0
    %3152 = vmatpush1.msra.mxu0 0.0
    %3153 = vmatprep.subr.mxu0 0.0
    %3154 = vmatpush1.msra.mxu0 0.0
    %3155 = vmatprep.subr.mxu0 0.0
    %3156 = vmatpush1.msra.mxu0 0.0
    %3157 = vmatprep.subr.mxu0 0.0
    %3158 = vmatpush1.msra.mxu0 0.0
    %3159 = vmatprep.subr.mxu0 0.0
    %3160 = vmatpush1.msra.mxu0 0.0
    %3161 = vmatprep.subr.mxu0 0.0
    %3162 = vmatpush1.msra.mxu0 0.0
    %3163 = vmatprep.subr.mxu0 0.0
    %3164 = vmatpush1.msra.mxu0 0.0
    %3165 = vmatprep.subr.mxu0 0.0
    %3166 = vmatpush1.msra.mxu0 0.0
    %3167 = vmatprep.subr.mxu0 0.0
    %3168 = vmatpush1.msra.mxu0 0.0
    %3169 = vmatprep.subr.mxu0 0.0
    %3170 = vmatpush1.msra.mxu0 0.0
    %3171 = vmatprep.subr.mxu0 0.0
    %3172 = vmatpush1.msra.mxu0 0.0
    %3173 = vmatprep.subr.mxu0 0.0
    %3174 = vmatpush1.msra.mxu0 0.0
    %3175 = vmatprep.subr.mxu0 0.0
    %3176 = vmatpush1.msra.mxu0 0.0
    %3177 = vmatprep.subr.mxu0 0.0
    %3178 = vmatpush1.msra.mxu0 0.0
    %3179 = vmatprep.subr.mxu0 0.0
    %3180 = vmatpush1.msra.mxu0 0.0
    %3181 = vmatprep.subr.mxu0 0.0
    %3182 = vmatpush1.msra.mxu0 0.0
    %3183 = vmatprep.subr.mxu0 0.0
    %3184 = vmatpush1.msra.mxu0 0.0
    %3185 = vmatprep.subr.mxu0 0.0
    %3186 = vmatpush1.msra.mxu0 0.0
    %3187 = vmatprep.subr.mxu0 0.0
    %3188 = vmatpush1.msra.mxu0 0.0
    %3189 = vmatprep.subr.mxu0 0.0
    %3190 = vmatpush1.msra.mxu0 0.0
    %3191 = vmatprep.subr.mxu0 0.0
    %3192 = vmatpush1.msra.mxu0 0.0
    %3193 = vmatprep.subr.mxu0 0.0
    %3194 = vmatpush1.msra.mxu0 0.0
    %3195 = vmatprep.mubr.f32.mxu0 0.0
    %v3196 = vand.u32 %v2148, 4294901760
    %v3197 = vsub.f32 %v2148, %v3196
    %v3198 = vand.u32 %v3197, 4294901760
    %3199 = vmatmul.mubr.f32.gmra.mrb[0].mxu0 %v3198
    %v3200 = vpop.f32.mrb[0].mxu0
    %v3201 = vadd.f32 %v3102, %v3200
    %v3202 = vpop.f32.mrb[0].mxu0
    %3203 = vmatprep.mubr.f32.mxu0 0.0
    %v3204 = vand.u32 %v2151, 4294901760
    %v3205 = vsub.f32 %v2151, %v3204
    %v3206 = vand.u32 %v3205, 4294901760
    %3207 = vmatmul.mubr.f32.gmra.mrb[0].mxu0 %v3206
    %v3208 = vpop.f32.mrb[0].mxu0
    %v3209 = vadd.f32 %v3109, %v3208
    %v3210 = vpop.f32.mrb[0].mxu0
    %3211 = vmatprep.mubr.f32.mxu0 0.0
    %v3212 = vand.u32 %v2154, 4294901760
    %v3213 = vsub.f32 %v2154, %v3212
    %v3214 = vand.u32 %v3213, 4294901760
    %3215 = vmatmul.mubr.f32.gmra.mrb[0].mxu0 %v3214
    %v3216 = vpop.f32.mrb[0].mxu0
    %v3217 = vadd.f32 %v3116, %v3216
    %v3218 = vpop.f32.mrb[0].mxu0
    %3219 = vmatprep.mubr.f32.mxu0 0.0
    %v3220 = vand.u32 %v2157, 4294901760
    %v3221 = vsub.f32 %v2157, %v3220
    %v3222 = vand.u32 %v3221, 4294901760
    %3223 = vmatmul.mubr.f32.gmra.mrb[0].mxu0 %v3222
    %v3224 = vpop.f32.mrb[0].mxu0
    %v3225 = vadd.f32 %v3123, %v3224
    %v3226 = vpop.f32.mrb[0].mxu0
    %3227 = vdwg.mxu0
    %3228 = vmatprep.subr.mxu0 0.0
    %v3229 = vand.u32 %v2794, 4294901760
    %v3230 = vsub.f32 %v2794, %v3229
    %v3231 = vand.u32 %v3230, 4294901760
    %3232 = vmatpush1.msra.mxu0 %v3231
    %3233 = vmatprep.subr.mxu0 0.0
    %v3234 = vand.u32 %v2795, 4294901760
    %v3235 = vsub.f32 %v2795, %v3234
    %v3236 = vand.u32 %v3235, 4294901760
    %3237 = vmatpush1.msra.mxu0 %v3236
    %3238 = vmatprep.subr.mxu0 0.0
    %v3239 = vand.u32 %v2796, 4294901760
    %v3240 = vsub.f32 %v2796, %v3239
    %v3241 = vand.u32 %v3240, 4294901760
    %3242 = vmatpush1.msra.mxu0 %v3241
    %3243 = vmatprep.subr.mxu0 0.0
    %v3244 = vand.u32 %v2797, 4294901760
    %v3245 = vsub.f32 %v2797, %v3244
    %v3246 = vand.u32 %v3245, 4294901760
    %3247 = vmatpush1.msra.mxu0 %v3246
    %3248 = vmatprep.subr.mxu0 0.0
    %v3249 = vand.u32 %v2798, 4294901760
    %v3250 = vsub.f32 %v2798, %v3249
    %v3251 = vand.u32 %v3250, 4294901760
    %3252 = vmatpush1.msra.mxu0 %v3251
    %3253 = vmatprep.subr.mxu0 0.0
    %3254 = vmatpush1.msra.mxu0 0.0
    %3255 = vmatprep.subr.mxu0 0.0
    %3256 = vmatpush1.msra.mxu0 0.0
    %3257 = vmatprep.subr.mxu0 0.0
    %3258 = vmatpush1.msra.mxu0 0.0
    %3259 = vmatprep.subr.mxu0 0.0
    %3260 = vmatpush1.msra.mxu0 0.0
    %3261 = vmatprep.subr.mxu0 0.0
    %3262 = vmatpush1.msra.mxu0 0.0
    %3263 = vmatprep.subr.mxu0 0.0
    %3264 = vmatpush1.msra.mxu0 0.0
    %3265 = vmatprep.subr.mxu0 0.0
    %3266 = vmatpush1.msra.mxu0 0.0
    %3267 = vmatprep.subr.mxu0 0.0
    %3268 = vmatpush1.msra.mxu0 0.0
    %3269 = vmatprep.subr.mxu0 0.0
    %3270 = vmatpush1.msra.mxu0 0.0
    %3271 = vmatprep.subr.mxu0 0.0
    %3272 = vmatpush1.msra.mxu0 0.0
    %3273 = vmatprep.subr.mxu0 0.0
    %3274 = vmatpush1.msra.mxu0 0.0
    %3275 = vmatprep.subr.mxu0 0.0
    %3276 = vmatpush1.msra.mxu0 0.0
    %3277 = vmatprep.subr.mxu0 0.0
    %3278 = vmatpush1.msra.mxu0 0.0
    %3279 = vmatprep.subr.mxu0 0.0
    %3280 = vmatpush1.msra.mxu0 0.0
    %3281 = vmatprep.subr.mxu0 0.0
    %3282 = vmatpush1.msra.mxu0 0.0
    %3283 = vmatprep.subr.mxu0 0.0
    %3284 = vmatpush1.msra.mxu0 0.0
    %3285 = vmatprep.subr.mxu0 0.0
    %3286 = vmatpush1.msra.mxu0 0.0
    %3287 = vmatprep.subr.mxu0 0.0
    %3288 = vmatpush1.msra.mxu0 0.0
    %3289 = vmatprep.subr.mxu0 0.0
    %3290 = vmatpush1.msra.mxu0 0.0
    %3291 = vmatprep.subr.mxu0 0.0
    %3292 = vmatpush1.msra.mxu0 0.0
    %3293 = vmatprep.subr.mxu0 0.0
    %3294 = vmatpush1.msra.mxu0 0.0
    %3295 = vmatprep.subr.mxu0 0.0
    %3296 = vmatpush1.msra.mxu0 0.0
    %3297 = vmatprep.subr.mxu0 0.0
    %3298 = vmatpush1.msra.mxu0 0.0
    %3299 = vmatprep.subr.mxu0 0.0
    %3300 = vmatpush1.msra.mxu0 0.0
    %3301 = vmatprep.subr.mxu0 0.0
    %3302 = vmatpush1.msra.mxu0 0.0
    %3303 = vmatprep.subr.mxu0 0.0
    %3304 = vmatpush1.msra.mxu0 0.0
    %3305 = vmatprep.subr.mxu0 0.0
    %3306 = vmatpush1.msra.mxu0 0.0
    %3307 = vmatprep.mubr.f32.mxu0 0.0
    %v3308 = vand.u32 %v2148, 4294901760
    %3309 = vmatmul.mubr.f32.gmra.mrb[0].mxu0 %v3308
    %v3310 = vpop.f32.mrb[0].mxu0
    %v3311 = vadd.f32 %v3201, %v3310
    %v3312 = vpop.f32.mrb[0].mxu0
    %3313 = vmatprep.mubr.f32.mxu0 0.0
    %v3314 = vand.u32 %v2151, 4294901760
    %3315 = vmatmul.mubr.f32.gmra.mrb[0].mxu0 %v3314
    %v3316 = vpop.f32.mrb[0].mxu0
    %v3317 = vadd.f32 %v3209, %v3316
    %v3318 = vpop.f32.mrb[0].mxu0
    %3319 = vmatprep.mubr.f32.mxu0 0.0
    %v3320 = vand.u32 %v2154, 4294901760
    %3321 = vmatmul.mubr.f32.gmra.mrb[0].mxu0 %v3320
    %v3322 = vpop.f32.mrb[0].mxu0
    %v3323 = vadd.f32 %v3217, %v3322
    %v3324 = vpop.f32.mrb[0].mxu0
    %3325 = vmatprep.mubr.f32.mxu0 0.0
    %v3326 = vand.u32 %v2157, 4294901760
    %3327 = vmatmul.mubr.f32.gmra.mrb[0].mxu0 %v3326
    %v3328 = vpop.f32.mrb[0].mxu0
    %v3329 = vadd.f32 %v3225, %v3328
    %v3330 = vpop.f32.mrb[0].mxu0
    %3331 = vdwg.mxu0
    %3332 = vmatprep.subr.mxu0 0.0
    %v3333 = vand.u32 %v2794, 4294901760
    %3334 = vmatpush1.msra.mxu0 %v3333
    %3335 = vmatprep.subr.mxu0 0.0
    %v3336 = vand.u32 %v2795, 4294901760
    %3337 = vmatpush1.msra.mxu0 %v3336
    %3338 = vmatprep.subr.mxu0 0.0
    %v3339 = vand.u32 %v2796, 4294901760
    %3340 = vmatpush1.msra.mxu0 %v3339
    %3341 = vmatprep.subr.mxu0 0.0
    %v3342 = vand.u32 %v2797, 4294901760
    %3343 = vmatpush1.msra.mxu0 %v3342
    %3344 = vmatprep.subr.mxu0 0.0
    %v3345 = vand.u32 %v2798, 4294901760
    %3346 = vmatpush1.msra.mxu0 %v3345
    %3347 = vmatprep.subr.mxu0 0.0
    %3348 = vmatpush1.msra.mxu0 0.0
    %3349 = vmatprep.subr.mxu0 0.0
    %3350 = vmatpush1.msra.mxu0 0.0
    %3351 = vmatprep.subr.mxu0 0.0
    %3352 = vmatpush1.msra.mxu0 0.0
    %3353 = vmatprep.subr.mxu0 0.0
    %3354 = vmatpush1.msra.mxu0 0.0
    %3355 = vmatprep.subr.mxu0 0.0
    %3356 = vmatpush1.msra.mxu0 0.0
    %3357 = vmatprep.subr.mxu0 0.0
    %3358 = vmatpush1.msra.mxu0 0.0
    %3359 = vmatprep.subr.mxu0 0.0
    %3360 = vmatpush1.msra.mxu0 0.0
    %3361 = vmatprep.subr.mxu0 0.0
    %3362 = vmatpush1.msra.mxu0 0.0
    %3363 = vmatprep.subr.mxu0 0.0
    %3364 = vmatpush1.msra.mxu0 0.0
    %3365 = vmatprep.subr.mxu0 0.0
    %3366 = vmatpush1.msra.mxu0 0.0
    %3367 = vmatprep.subr.mxu0 0.0
    %3368 = vmatpush1.msra.mxu0 0.0
    %3369 = vmatprep.subr.mxu0 0.0
    %3370 = vmatpush1.msra.mxu0 0.0
    %3371 = vmatprep.subr.mxu0 0.0
    %3372 = vmatpush1.msra.mxu0 0.0
    %3373 = vmatprep.subr.mxu0 0.0
    %3374 = vmatpush1.msra.mxu0 0.0
    %3375 = vmatprep.subr.mxu0 0.0
    %3376 = vmatpush1.msra.mxu0 0.0
    %3377 = vmatprep.subr.mxu0 0.0
    %3378 = vmatpush1.msra.mxu0 0.0
    %3379 = vmatprep.subr.mxu0 0.0
    %3380 = vmatpush1.msra.mxu0 0.0
    %3381 = vmatprep.subr.mxu0 0.0
    %3382 = vmatpush1.msra.mxu0 0.0
    %3383 = vmatprep.subr.mxu0 0.0
    %3384 = vmatpush1.msra.mxu0 0.0
    %3385 = vmatprep.subr.mxu0 0.0
    %3386 = vmatpush1.msra.mxu0 0.0
    %3387 = vmatprep.subr.mxu0 0.0
    %3388 = vmatpush1.msra.mxu0 0.0
    %3389 = vmatprep.subr.mxu0 0.0
    %3390 = vmatpush1.msra.mxu0 0.0
    %3391 = vmatprep.subr.mxu0 0.0
    %3392 = vmatpush1.msra.mxu0 0.0
    %3393 = vmatprep.subr.mxu0 0.0
    %3394 = vmatpush1.msra.mxu0 0.0
    %3395 = vmatprep.subr.mxu0 0.0
    %3396 = vmatpush1.msra.mxu0 0.0
    %3397 = vmatprep.subr.mxu0 0.0
    %3398 = vmatpush1.msra.mxu0 0.0
    %3399 = vmatprep.subr.mxu0 0.0
    %3400 = vmatpush1.msra.mxu0 0.0
    %3401 = vmatprep.mubr.f32.mxu0 0.0
    %v3402 = vand.u32 %v2148, 4294901760
    %3403 = vmatmul.mubr.f32.gmra.mrb[0].mxu0 %v3402
    %v3404 = vpop.f32.mrb[0].mxu0
    %v3405 = vadd.f32 %v3311, %v3404
    %v3406 = vpop.f32.mrb[0].mxu0
    %3407 = vmatprep.mubr.f32.mxu0 0.0
    %v3408 = vand.u32 %v2151, 4294901760
    %3409 = vmatmul.mubr.f32.gmra.mrb[0].mxu0 %v3408
    %v3410 = vpop.f32.mrb[0].mxu0
    %v3411 = vadd.f32 %v3317, %v3410
    %v3412 = vpop.f32.mrb[0].mxu0
    %3413 = vmatprep.mubr.f32.mxu0 0.0
    %v3414 = vand.u32 %v2154, 4294901760
    %3415 = vmatmul.mubr.f32.gmra.mrb[0].mxu0 %v3414
    %v3416 = vpop.f32.mrb[0].mxu0
    %v3417 = vadd.f32 %v3323, %v3416
    %v3418 = vpop.f32.mrb[0].mxu0
    %3419 = vmatprep.mubr.f32.mxu0 0.0
    %v3420 = vand.u32 %v2157, 4294901760
    %3421 = vmatmul.mubr.f32.gmra.mrb[0].mxu0 %v3420
    %v3422 = vpop.f32.mrb[0].mxu0
    %v3423 = vadd.f32 %v3329, %v3422
    %v3424 = vpop.f32.mrb[0].mxu0
    %3425 = vdwg.mxu0
    %v3426 = vmax.f32 %v3405, 0.0
    %v3427 = vmax.f32 %v3411, 0.0
    %v3428 = vmax.f32 %v3417, 0.0
    %v3429 = vmax.f32 %v3423, 0.0
    %s3430 = scalar_lea.vmem %s5, 32
    %3431 = vst.msk [vmem:[%s3430] sm:$0xff] %vm67, %v3426
    %3432 = vst.msk [vmem:[%s3430 + $0x8] sm:$0xff] %vm67, %v3427
    %3433 = vst.msk [vmem:[%s3430 + $0x10] sm:$0xff] %vm67, %v3428
    %3434 = vst.msk [vmem:[%s3430 + $0x18] sm:$0xff] %vm67, %v3429
    // Predicated region
    $region34: #{tpu_custom_call.1} parent=1 // pred_check
      _
    $region35: #{tpu_custom_call.1} parent=1 // pred_check_branch
      %3436 = sbr.rel (0) target = $region37
    $region36: #{tpu_custom_call.1} parent=1 // pred_region
      _
    $region37: #{tpu_custom_call.1} parent=1 // pred_fallthru
      _
    // Predicated region
    $region38: #{tpu_custom_call.1} parent=1 // pred_check
      _
    $region39: #{tpu_custom_call.1} parent=1 // pred_check_branch
      %3438 = sbr.rel (0) target = $region41
    $region40: #{tpu_custom_call.1} parent=1 // pred_region
      _
    $region41: #{tpu_custom_call.1} parent=1 // pred_fallthru
      _
    %3439 = vsyncpa [#allocation4], 1
    %3440 = vsyncpa [#allocation6], 1

</llo_original>
